<compile_context>
chip_gen: v6e
topology: v6e:2x2x1
jax: 0.10.0
libtpu: 0.0.40
codegen_flags: <defaults>
</compile_context>

<pallas_src>
import jax
import jax.numpy as jnp
from jax.experimental import pallas as pl
from jax.experimental.pallas import tpu as pltpu

BN_EPS = 1e-5
HALO = 8       # sublane-aligned row offset of l == 0 inside the halo scratch
MAX_C = 64     # widest channel count in the network (layer3)


# --------------------------------------------------------------------------
# Fused whole-network kernel
# --------------------------------------------------------------------------
def _build_resnet_kernel(plan, B, L, n_out):
    """plan: static tuple of ('block', cin, cout, has_downsample) entries."""
    last_c = plan[-1][2] if plan else 16

    def kernel(*refs):
        it = iter(refs)
        x_ref = next(it)                       # (B, L, 1) f32
        wstem_ref = next(it)                   # (3, 16) f32   (BN folded)
        bstem_ref = next(it)                   # (1, 16) f32
        blk_refs = []
        for (_, _, _, has_ds) in plan:
            blk_refs.append([next(it) for _ in range(6 if has_ds else 4)])
        fcw_ref = next(it)                     # (1, 64) or (64, n_out) f32
        fcb_ref = next(it)                     # (1, n_out) f32
        o_ref = next(it)                       # (B, n_out) f32
        h_ref = next(it)                       # (B, L+2*HALO, MAX_C) bf16 halo scratch

        # Zero the halo scratch exactly once.  All later stores only touch rows
        # [HALO, HALO+L) and lanes [0, cout_of_that_layer).  Channel counts are
        # non-decreasing along the plan, so the halo rows (HALO-1 and HALO+L)
        # and any not-yet-written lanes stay zero -> exact 'same'-padding
        # semantics for every conv, with no per-conv re-zeroing.
        h_ref[...] = jnp.zeros_like(h_ref)

        def taps(cin):
            """Three L-shifted bf16 views of the current layer input."""
            a_m1 = h_ref[:, HALO - 1:HALO - 1 + L, 0:cin]   # x[l-1] (zero halo @ l=0)
            a_0 = h_ref[:, HALO:HALO + L, 0:cin]            # x[l]
            a_p1 = h_ref[:, HALO + 1:HALO + 1 + L, 0:cin]   # x[l+1] (zero halo @ l=L-1)
            return a_m1, a_0, a_p1

        def conv3(cin, cout, w_ref, b_ref):
            """'same' 3-tap conv + folded-BN bias as 3 accumulating K=cin
            bf16 MXU matmuls with f32 accumulation.  Returns f32 (B*L, cout)."""
            a_m1, a_0, a_p1 = taps(cin)
            y = jnp.dot(a_m1.reshape(B * L, cin), w_ref[0],
                        preferred_element_type=jnp.float32)
            y += jnp.dot(a_0.reshape(B * L, cin), w_ref[1],
                         preferred_element_type=jnp.float32)
            y += jnp.dot(a_p1.reshape(B * L, cin), w_ref[2],
                         preferred_element_type=jnp.float32)
            return y + b_ref[...]

        def store_act(val_f32, cout):
            # Single sublane-ALIGNED (row offset HALO==8) store per layer.
            h_ref[:, HALO:HALO + L, 0:cout] = (
                val_f32.reshape(B, L, cout).astype(jnp.bfloat16))

        # ---- stem: Conv1d(1,16,3) + BN + ReLU on the VPU (Cin=1, no MXU) ----
        h_ref[:, HALO:HALO + L, 0:1] = x_ref[...].astype(jnp.bfloat16)
        xm1, x0, xp1 = taps(1)
        w = wstem_ref[...]                                   # (3, 16) f32
        y = (xm1.astype(jnp.float32) * w[0].reshape(1, 1, 16)
             + x0.astype(jnp.float32) * w[1].reshape(1, 1, 16)
             + xp1.astype(jnp.float32) * w[2].reshape(1, 1, 16))
        y = y + bstem_ref[...].reshape(1, 1, 16)
        act = jnp.maximum(y, 0.0).reshape(B * L, 16)         # (B*L, 16) f32
        store_act(act, 16)

        # ---- residual blocks ----
        for (entry, r) in zip(plan, blk_refs):
            _, cin, cout, has_ds = entry
            w1, b1, w2, b2 = r[:4]
            # conv1 + bn1 + relu
            y1 = jnp.maximum(conv3(cin, cout, w1, b1), 0.0)  # f32 (B*L, cout)
            # residual path: read the block INPUT before overwriting the scratch
            x_in = h_ref[:, HALO:HALO + L, 0:cin].reshape(B * L, cin)
            if has_ds:
                wd, bd = r[4], r[5]
                res = jnp.dot(x_in, wd[...],
                              preferred_element_type=jnp.float32) + bd[...]
            else:
                res = x_in.astype(jnp.float32)
            store_act(y1, cout)                              # conv2 input
            y2 = conv3(cout, cout, w2, b2)                   # conv2 + bn2 (no relu)
            act = jnp.maximum(y2 + res, 0.0)                 # f32 (B*L, cout)
            store_act(act, cout)                             # next block's input

        # ---- AdaptiveAvgPool1d(1) + Linear (fc weight pre-scaled by 1/L) ----
        pooled = jnp.sum(act.reshape(B, L, last_c), axis=1)  # (B, 64) f32
        if n_out == 1:
            # VPU multiply + lane reduction instead of an MXU pass.
            out = jnp.sum(pooled * fcw_ref[...], axis=1, keepdims=True)
        else:
            out = jnp.dot(pooled, fcw_ref[...], preferred_element_type=jnp.float32)
        o_ref[...] = (out + fcb_ref[...]).astype(o_ref.dtype)

    return kernel


# --------------------------------------------------------------------------
# Parameter folding (BN scale into conv weights, kernel layout, bf16 cast)
# --------------------------------------------------------------------------
def _fold_conv3(w_pt, scale):
    """PyTorch (Cout, Cin, 3) conv weight * BN scale -> (3, Cin, Cout) bf16."""
    w = w_pt * scale[:, None, None]
    return jnp.transpose(w, (2, 1, 0)).astype(jnp.bfloat16)


def _fold_conv1(w_pt, scale):
    """PyTorch (Cout, Cin, 1) downsample weight * BN scale -> (Cin, Cout) bf16."""
    return (w_pt[:, :, 0] * scale[:, None]).T.astype(jnp.bfloat16)


def _fold_stem(w_pt, scale):
    """PyTorch (16, 1, 3) stem weight * BN scale -> (3, 16) f32 (VPU path)."""
    return (w_pt[:, 0, :] * scale[:, None]).T.astype(jnp.float32)


def _prepare(params, L, n_out):
    """Flatten params into the kernel argument list + static plan."""
    s, b = params["bn1"]
    args = [_fold_stem(params["w1"], s), b.reshape(1, -1)]
    plan = []
    in_c = 16
    for p in params["blocks"]:
        out_c = p["w1"].shape[0]
        has_ds = "wd" in p
        s1, b1 = p["bn1"]
        s2, b2 = p["bn2"]
        args += [_fold_conv3(p["w1"], s1), b1.reshape(1, -1),
                 _fold_conv3(p["w2"], s2), b2.reshape(1, -1)]
        if has_ds:
            sd, bd = p["bnd"]
            args += [_fold_conv1(p["wd"], sd), bd.reshape(1, -1)]
        plan.append(("block", in_c, out_c, has_ds))
        in_c = out_c
    fcw = params["fc_w"] * (1.0 / L)          # fold the avg-pool 1/L into fc
    if n_out == 1:
        fcw = fcw.reshape(1, -1)              # (1, 64) row for the VPU reduce
    args += [fcw, params["fc_b"].reshape(1, -1)]
    return args, tuple(plan)


def _vmem_limit_bytes():
    # Size the scoped-VMEM limit from the device (v7x: 64 MiB vs 128 MiB on
    # v5e/v6e) instead of hardcoding, leaving headroom for compiler scratch.
    try:
        cap = int(pltpu.get_tpu_info().vmem_capacity_bytes)
    except Exception:
        cap = 64 * 1024 * 1024
    return max(16 * 1024 * 1024, min(cap // 2, 48 * 1024 * 1024))


# --------------------------------------------------------------------------
# Forward pass wrapper (single fused pallas_call)
# --------------------------------------------------------------------------
def resnet_forward(x_ncw, params):
    B, _, L = x_ncw.shape
    n_out = params["fc_w"].shape[1]
    assert L % 8 == 0, "L must be a multiple of 8 (sublane tile) for this kernel"
    # Channel counts must be non-decreasing along the plan (16 -> 32 -> 64) for
    # the zero-halo / stale-lane scheme in the kernel to be valid.
    cs = [16] + [p["w1"].shape[0] for p in params["blocks"]]
    assert all(a <= b for a, b in zip(cs, cs[1:])), "channel plan must be non-decreasing"
    assert cs[-1] <= MAX_C

    x = jnp.transpose(x_ncw, (0, 2, 1)).astype(jnp.float32)   # (B, L, 1) NWC
    args, plan = _prepare(params, L, n_out)
    kernel = _build_resnet_kernel(plan, B, L, n_out)
    vmem = pl.BlockSpec(memory_space=pltpu.MemorySpace.VMEM)
    n_in = 1 + len(args)
    return pl.pallas_call(
        kernel,
        out_shape=jax.ShapeDtypeStruct((B, n_out), jnp.float32),
        in_specs=[vmem] * n_in,
        out_specs=vmem,
        scratch_shapes=[pltpu.VMEM((B, L + 2 * HALO, MAX_C), jnp.bfloat16)],
        compiler_params=pltpu.CompilerParams(vmem_limit_bytes=_vmem_limit_bytes()),
    )(x, *args)


# --------------------------------------------------------------------------
# Deterministic parameter construction (shapes from the PyTorch __init__;
# conv weights kept in PyTorch (Cout, Cin, K) layout, BN in folded eval form)
# --------------------------------------------------------------------------
def init_bn(key, c):
    k1, k2, k3, k4 = jax.random.split(key, 4)
    gamma = 1.0 + 0.1 * jax.random.normal(k1, (c,), jnp.float32)
    beta = 0.1 * jax.random.normal(k2, (c,), jnp.float32)
    mean = 0.1 * jax.random.normal(k3, (c,), jnp.float32)
    var = 1.0 + 0.1 * jnp.abs(jax.random.normal(k4, (c,), jnp.float32))
    scale = gamma / jnp.sqrt(var + BN_EPS)
    bias = beta - mean * scale
    return scale, bias


def init_conv_pt(key, cout, cin, k):
    return 0.1 * jax.random.normal(key, (cout, cin, k), jnp.float32)


def init_residual_block(key, cin, cout):
    keys = jax.random.split(key, 6)
    p = {
        "w1": init_conv_pt(keys[0], cout, cin, 3),
        "bn1": init_bn(keys[1], cout),
        "w2": init_conv_pt(keys[2], cout, cout, 3),
        "bn2": init_bn(keys[3], cout),
    }
    if cin != cout:                       # downsample: 1x1 conv + BN
        p["wd"] = init_conv_pt(keys[4], cout, cin, 1)
        p["bnd"] = init_bn(keys[5], cout)
    return p


def init_resnet(key, c_num, num_classes=1):
    keys = jax.random.split(key, 4 + 3 * c_num)
    params = {
        "w1": init_conv_pt(keys[0], 16, 1, 3),
        "bn1": init_bn(keys[1], 16),
        "fc_w": 0.1 * jax.random.normal(keys[2], (64, num_classes), jnp.float32),
        "fc_b": 0.1 * jax.random.normal(keys[3], (num_classes,), jnp.float32),
    }
    in_c, ki = 16, 4
    blocks = []
    for out_c in (16, 32, 64):            # layer1 / layer2 / layer3
        for _ in range(c_num):
            blocks.append(init_residual_block(keys[ki], in_c, out_c))
            in_c = out_c
            ki += 1
    params["blocks"] = blocks
    return params


if __name__ == "__main__":
    key = jax.random.PRNGKey(0)
    kx, kp = jax.random.split(key)

    B, L, c_num = 2, 16, 2
    x = jax.random.normal(kx, (B, 1, L), jnp.float32)      # PyTorch NCW input
    params = init_resnet(kp, c_num=c_num, num_classes=1)

    fwd = jax.jit(resnet_forward)
    y = fwd(x, params)
    jax.block_until_ready(y)
    assert y.shape == (B, 1), y.shape
    assert bool(jnp.all(jnp.isfinite(y)))
    print("KERNEL_OK")
</pallas_src>

<mosaic_0001>
module attributes {stable_mosaic.version = 11 : i64} {
  func.func @kernel(%arg0: memref<2x16x1xf32, #tpu.memory_space<vmem>>, %arg1: memref<3x16xf32, #tpu.memory_space<vmem>>, %arg2: memref<1x16xf32, #tpu.memory_space<vmem>>, %arg3: memref<3x16x16xbf16, #tpu.memory_space<vmem>>, %arg4: memref<1x16xf32, #tpu.memory_space<vmem>>, %arg5: memref<3x16x16xbf16, #tpu.memory_space<vmem>>, %arg6: memref<1x16xf32, #tpu.memory_space<vmem>>, %arg7: memref<3x16x16xbf16, #tpu.memory_space<vmem>>, %arg8: memref<1x16xf32, #tpu.memory_space<vmem>>, %arg9: memref<3x16x16xbf16, #tpu.memory_space<vmem>>, %arg10: memref<1x16xf32, #tpu.memory_space<vmem>>, %arg11: memref<3x16x32xbf16, #tpu.memory_space<vmem>>, %arg12: memref<1x32xf32, #tpu.memory_space<vmem>>, %arg13: memref<3x32x32xbf16, #tpu.memory_space<vmem>>, %arg14: memref<1x32xf32, #tpu.memory_space<vmem>>, %arg15: memref<16x32xbf16, #tpu.memory_space<vmem>>, %arg16: memref<1x32xf32, #tpu.memory_space<vmem>>, %arg17: memref<3x32x32xbf16, #tpu.memory_space<vmem>>, %arg18: memref<1x32xf32, #tpu.memory_space<vmem>>, %arg19: memref<3x32x32xbf16, #tpu.memory_space<vmem>>, %arg20: memref<1x32xf32, #tpu.memory_space<vmem>>, %arg21: memref<3x32x64xbf16, #tpu.memory_space<vmem>>, %arg22: memref<1x64xf32, #tpu.memory_space<vmem>>, %arg23: memref<3x64x64xbf16, #tpu.memory_space<vmem>>, %arg24: memref<1x64xf32, #tpu.memory_space<vmem>>, %arg25: memref<32x64xbf16, #tpu.memory_space<vmem>>, %arg26: memref<1x64xf32, #tpu.memory_space<vmem>>, %arg27: memref<3x64x64xbf16, #tpu.memory_space<vmem>>, %arg28: memref<1x64xf32, #tpu.memory_space<vmem>>, %arg29: memref<3x64x64xbf16, #tpu.memory_space<vmem>>, %arg30: memref<1x64xf32, #tpu.memory_space<vmem>>, %arg31: memref<1x64xf32, #tpu.memory_space<vmem>>, %arg32: memref<1x1xf32, #tpu.memory_space<vmem>>, %arg33: memref<2x1xf32, #tpu.memory_space<vmem>>, %arg34: memref<2x32x64xbf16, #tpu.memory_space<vmem>>) attributes {dimension_semantics = [], scalar_prefetch = 0 : i64, scratch_operands = 1 : i64, tpu.core_type = #tpu.core_type<tc>} {
    %cst = arith.constant 0.000000e+00 : bf16
    %0 = vector.broadcast %cst : bf16 to vector<2x32x64xbf16>
    %c0 = arith.constant 0 : index
    %c0_0 = arith.constant 0 : index
    %c0_1 = arith.constant 0 : index
    %1 = vector.load %arg34[%c0, %c0_0, %c0_1] : memref<2x32x64xbf16, #tpu.memory_space<vmem>>, vector<2x32x64xbf16>
    tpu.vector_store %arg34[%c0, %c0_0, %c0_1], %0 {strides = array<i32>} : memref<2x32x64xbf16, #tpu.memory_space<vmem>>, vector<2x32x64xbf16>,
    %c0_2 = arith.constant 0 : index
    %c0_3 = arith.constant 0 : index
    %c0_4 = arith.constant 0 : index
    %2 = vector.load %arg0[%c0_2, %c0_3, %c0_4] : memref<2x16x1xf32, #tpu.memory_space<vmem>>, vector<2x16x1xf32>
    %3 = arith.truncf %2 : vector<2x16x1xf32> to vector<2x16x1xbf16>
    %c0_5 = arith.constant 0 : index
    %c8 = arith.constant 8 : index
    %c0_6 = arith.constant 0 : index
    %4 = vector.load %arg34[%c0_5, %c8, %c0_6] : memref<2x32x64xbf16, #tpu.memory_space<vmem>>, vector<2x16x1xbf16>
    tpu.vector_store %arg34[%c0_5, %c8, %c0_6], %3 {strides = array<i32>} : memref<2x32x64xbf16, #tpu.memory_space<vmem>>, vector<2x16x1xbf16>,
    %c0_7 = arith.constant 0 : index
    %c7 = arith.constant 7 : index
    %c0_8 = arith.constant 0 : index
    %5 = vector.load %arg34[%c0_7, %c7, %c0_8] : memref<2x32x64xbf16, #tpu.memory_space<vmem>>, vector<2x16x1xbf16>
    %c0_9 = arith.constant 0 : index
    %c8_10 = arith.constant 8 : index
    %c0_11 = arith.constant 0 : index
    %6 = vector.load %arg34[%c0_9, %c8_10, %c0_11] : memref<2x32x64xbf16, #tpu.memory_space<vmem>>, vector<2x16x1xbf16>
    %c0_12 = arith.constant 0 : index
    %c9 = arith.constant 9 : index
    %c0_13 = arith.constant 0 : index
    %7 = vector.load %arg34[%c0_12, %c9, %c0_13] : memref<2x32x64xbf16, #tpu.memory_space<vmem>>, vector<2x16x1xbf16>
    %c0_14 = arith.constant 0 : index
    %c0_15 = arith.constant 0 : index
    %8 = vector.load %arg1[%c0_14, %c0_15] : memref<3x16xf32, #tpu.memory_space<vmem>>, vector<3x16xf32>
    %9 = arith.extf %5 : vector<2x16x1xbf16> to vector<2x16x1xf32>
    %10 = vector.extract_strided_slice %8 {offsets = [0, 0], sizes = [1, 16], strides = [1, 1]} : vector<3x16xf32> to vector<1x16xf32>
    %11 = vector.shape_cast %10 : vector<1x16xf32> to vector<16xf32>
    %12 = vector.shape_cast %11 : vector<16xf32> to vector<1x1x16xf32>
    %13 = vector.broadcast %9 : vector<2x16x1xf32> to vector<2x16x16xf32>
    %14 = vector.broadcast %12 : vector<1x1x16xf32> to vector<2x16x16xf32>
    %15 = arith.mulf %13, %14 : vector<2x16x16xf32>
    %16 = arith.extf %6 : vector<2x16x1xbf16> to vector<2x16x1xf32>
    %17 = vector.extract_strided_slice %8 {offsets = [1, 0], sizes = [1, 16], strides = [1, 1]} : vector<3x16xf32> to vector<1x16xf32>
    %18 = vector.shape_cast %17 : vector<1x16xf32> to vector<16xf32>
    %19 = vector.shape_cast %18 : vector<16xf32> to vector<1x1x16xf32>
    %20 = vector.broadcast %16 : vector<2x16x1xf32> to vector<2x16x16xf32>
    %21 = vector.broadcast %19 : vector<1x1x16xf32> to vector<2x16x16xf32>
    %22 = arith.mulf %20, %21 : vector<2x16x16xf32>
    %23 = arith.addf %15, %22 : vector<2x16x16xf32>
    %24 = arith.extf %7 : vector<2x16x1xbf16> to vector<2x16x1xf32>
    %25 = vector.extract_strided_slice %8 {offsets = [2, 0], sizes = [1, 16], strides = [1, 1]} : vector<3x16xf32> to vector<1x16xf32>
    %26 = vector.shape_cast %25 : vector<1x16xf32> to vector<16xf32>
    %27 = vector.shape_cast %26 : vector<16xf32> to vector<1x1x16xf32>
    %28 = vector.broadcast %24 : vector<2x16x1xf32> to vector<2x16x16xf32>
    %29 = vector.broadcast %27 : vector<1x1x16xf32> to vector<2x16x16xf32>
    %30 = arith.mulf %28, %29 : vector<2x16x16xf32>
    %31 = arith.addf %23, %30 : vector<2x16x16xf32>
    %c0_16 = arith.constant 0 : index
    %c0_17 = arith.constant 0 : index
    %32 = vector.load %arg2[%c0_16, %c0_17] : memref<1x16xf32, #tpu.memory_space<vmem>>, vector<1x16xf32>
    %33 = vector.shape_cast %32 : vector<1x16xf32> to vector<1x1x16xf32>
    %34 = vector.broadcast %33 : vector<1x1x16xf32> to vector<2x16x16xf32>
    %35 = arith.addf %31, %34 : vector<2x16x16xf32>
    %cst_18 = arith.constant 0.000000e+00 : f32
    %36 = vector.broadcast %cst_18 : f32 to vector<2x16x16xf32>
    %37 = arith.maximumf %35, %36 : vector<2x16x16xf32>
    %38 = vector.shape_cast %37 : vector<2x16x16xf32> to vector<32x16xf32>
    %39 = vector.shape_cast %38 : vector<32x16xf32> to vector<2x16x16xf32>
    %40 = arith.truncf %39 : vector<2x16x16xf32> to vector<2x16x16xbf16>
    %c0_19 = arith.constant 0 : index
    %c8_20 = arith.constant 8 : index
    %c0_21 = arith.constant 0 : index
    %41 = vector.load %arg34[%c0_19, %c8_20, %c0_21] : memref<2x32x64xbf16, #tpu.memory_space<vmem>>, vector<2x16x16xbf16>
    tpu.vector_store %arg34[%c0_19, %c8_20, %c0_21], %40 {strides = array<i32>} : memref<2x32x64xbf16, #tpu.memory_space<vmem>>, vector<2x16x16xbf16>,
    %c0_22 = arith.constant 0 : index
    %c7_23 = arith.constant 7 : index
    %c0_24 = arith.constant 0 : index
    %42 = vector.load %arg34[%c0_22, %c7_23, %c0_24] : memref<2x32x64xbf16, #tpu.memory_space<vmem>>, vector<2x16x16xbf16>
    %c0_25 = arith.constant 0 : index
    %c8_26 = arith.constant 8 : index
    %c0_27 = arith.constant 0 : index
    %43 = vector.load %arg34[%c0_25, %c8_26, %c0_27] : memref<2x32x64xbf16, #tpu.memory_space<vmem>>, vector<2x16x16xbf16>
    %c0_28 = arith.constant 0 : index
    %c9_29 = arith.constant 9 : index
    %c0_30 = arith.constant 0 : index
    %44 = vector.load %arg34[%c0_28, %c9_29, %c0_30] : memref<2x32x64xbf16, #tpu.memory_space<vmem>>, vector<2x16x16xbf16>
    %45 = vector.shape_cast %42 : vector<2x16x16xbf16> to vector<32x16xbf16>
    %c0_31 = arith.constant 0 : index
    %c0_32 = arith.constant 0 : index
    %c0_33 = arith.constant 0 : index
    %46 = vector.load %arg3[%c0_31, %c0_32, %c0_33] : memref<3x16x16xbf16, #tpu.memory_space<vmem>>, vector<1x16x16xbf16>
    %47 = vector.shape_cast %46 : vector<1x16x16xbf16> to vector<16x16xbf16>
    %cst_34 = arith.constant dense<0.000000e+00> : vector<32x16xf32>
    %48 = tpu.matmul %45, %47, %cst_34 {dimension_numbers = #tpu.dot_dimension_numbers<[1], [0], [0], [1], [0, 0, 1, 1], [], []>} : vector<32x16xbf16>, vector<16x16xbf16>, vector<32x16xf32> -> vector<32x16xf32>
    %49 = vector.shape_cast %43 : vector<2x16x16xbf16> to vector<32x16xbf16>
    %c1 = arith.constant 1 : index
    %c0_35 = arith.constant 0 : index
    %c0_36 = arith.constant 0 : index
    %50 = vector.load %arg3[%c1, %c0_35, %c0_36] : memref<3x16x16xbf16, #tpu.memory_space<vmem>>, vector<1x16x16xbf16>
    %51 = vector.shape_cast %50 : vector<1x16x16xbf16> to vector<16x16xbf16>
    %cst_37 = arith.constant dense<0.000000e+00> : vector<32x16xf32>
    %52 = tpu.matmul %49, %51, %cst_37 {dimension_numbers = #tpu.dot_dimension_numbers<[1], [0], [0], [1], [0, 0, 1, 1], [], []>} : vector<32x16xbf16>, vector<16x16xbf16>, vector<32x16xf32> -> vector<32x16xf32>
    %53 = arith.addf %48, %52 : vector<32x16xf32>
    %54 = vector.shape_cast %44 : vector<2x16x16xbf16> to vector<32x16xbf16>
    %c2 = arith.constant 2 : index
    %c0_38 = arith.constant 0 : index
    %c0_39 = arith.constant 0 : index
    %55 = vector.load %arg3[%c2, %c0_38, %c0_39] : memref<3x16x16xbf16, #tpu.memory_space<vmem>>, vector<1x16x16xbf16>
    %56 = vector.shape_cast %55 : vector<1x16x16xbf16> to vector<16x16xbf16>
    %cst_40 = arith.constant dense<0.000000e+00> : vector<32x16xf32>
    %57 = tpu.matmul %54, %56, %cst_40 {dimension_numbers = #tpu.dot_dimension_numbers<[1], [0], [0], [1], [0, 0, 1, 1], [], []>} : vector<32x16xbf16>, vector<16x16xbf16>, vector<32x16xf32> -> vector<32x16xf32>
    %58 = arith.addf %53, %57 : vector<32x16xf32>
    %c0_41 = arith.constant 0 : index
    %c0_42 = arith.constant 0 : index
    %59 = vector.load %arg4[%c0_41, %c0_42] : memref<1x16xf32, #tpu.memory_space<vmem>>, vector<1x16xf32>
    %60 = vector.broadcast %59 : vector<1x16xf32> to vector<32x16xf32>
    %61 = arith.addf %58, %60 : vector<32x16xf32>
    %cst_43 = arith.constant 0.000000e+00 : f32
    %62 = vector.broadcast %cst_43 : f32 to vector<32x16xf32>
    %63 = arith.maximumf %61, %62 : vector<32x16xf32>
    %c0_44 = arith.constant 0 : index
    %c8_45 = arith.constant 8 : index
    %c0_46 = arith.constant 0 : index
    %64 = vector.load %arg34[%c0_44, %c8_45, %c0_46] : memref<2x32x64xbf16, #tpu.memory_space<vmem>>, vector<2x16x16xbf16>
    %65 = vector.shape_cast %64 : vector<2x16x16xbf16> to vector<32x16xbf16>
    %66 = arith.extf %65 : vector<32x16xbf16> to vector<32x16xf32>
    %67 = vector.shape_cast %63 : vector<32x16xf32> to vector<2x16x16xf32>
    %68 = arith.truncf %67 : vector<2x16x16xf32> to vector<2x16x16xbf16>
    %c0_47 = arith.constant 0 : index
    %c8_48 = arith.constant 8 : index
    %c0_49 = arith.constant 0 : index
    %69 = vector.load %arg34[%c0_47, %c8_48, %c0_49] : memref<2x32x64xbf16, #tpu.memory_space<vmem>>, vector<2x16x16xbf16>
    tpu.vector_store %arg34[%c0_47, %c8_48, %c0_49], %68 {strides = array<i32>} : memref<2x32x64xbf16, #tpu.memory_space<vmem>>, vector<2x16x16xbf16>,
    %c0_50 = arith.constant 0 : index
    %c7_51 = arith.constant 7 : index
    %c0_52 = arith.constant 0 : index
    %70 = vector.load %arg34[%c0_50, %c7_51, %c0_52] : memref<2x32x64xbf16, #tpu.memory_space<vmem>>, vector<2x16x16xbf16>
    %c0_53 = arith.constant 0 : index
    %c8_54 = arith.constant 8 : index
    %c0_55 = arith.constant 0 : index
    %71 = vector.load %arg34[%c0_53, %c8_54, %c0_55] : memref<2x32x64xbf16, #tpu.memory_space<vmem>>, vector<2x16x16xbf16>
    %c0_56 = arith.constant 0 : index
    %c9_57 = arith.constant 9 : index
    %c0_58 = arith.constant 0 : index
    %72 = vector.load %arg34[%c0_56, %c9_57, %c0_58] : memref<2x32x64xbf16, #tpu.memory_space<vmem>>, vector<2x16x16xbf16>
    %73 = vector.shape_cast %70 : vector<2x16x16xbf16> to vector<32x16xbf16>
    %c0_59 = arith.constant 0 : index
    %c0_60 = arith.constant 0 : index
    %c0_61 = arith.constant 0 : index
    %74 = vector.load %arg5[%c0_59, %c0_60, %c0_61] : memref<3x16x16xbf16, #tpu.memory_space<vmem>>, vector<1x16x16xbf16>
    %75 = vector.shape_cast %74 : vector<1x16x16xbf16> to vector<16x16xbf16>
    %cst_62 = arith.constant dense<0.000000e+00> : vector<32x16xf32>
    %76 = tpu.matmul %73, %75, %cst_62 {dimension_numbers = #tpu.dot_dimension_numbers<[1], [0], [0], [1], [0, 0, 1, 1], [], []>} : vector<32x16xbf16>, vector<16x16xbf16>, vector<32x16xf32> -> vector<32x16xf32>
    %77 = vector.shape_cast %71 : vector<2x16x16xbf16> to vector<32x16xbf16>
    %c1_63 = arith.constant 1 : index
    %c0_64 = arith.constant 0 : index
    %c0_65 = arith.constant 0 : index
    %78 = vector.load %arg5[%c1_63, %c0_64, %c0_65] : memref<3x16x16xbf16, #tpu.memory_space<vmem>>, vector<1x16x16xbf16>
    %79 = vector.shape_cast %78 : vector<1x16x16xbf16> to vector<16x16xbf16>
    %cst_66 = arith.constant dense<0.000000e+00> : vector<32x16xf32>
    %80 = tpu.matmul %77, %79, %cst_66 {dimension_numbers = #tpu.dot_dimension_numbers<[1], [0], [0], [1], [0, 0, 1, 1], [], []>} : vector<32x16xbf16>, vector<16x16xbf16>, vector<32x16xf32> -> vector<32x16xf32>
    %81 = arith.addf %76, %80 : vector<32x16xf32>
    %82 = vector.shape_cast %72 : vector<2x16x16xbf16> to vector<32x16xbf16>
    %c2_67 = arith.constant 2 : index
    %c0_68 = arith.constant 0 : index
    %c0_69 = arith.constant 0 : index
    %83 = vector.load %arg5[%c2_67, %c0_68, %c0_69] : memref<3x16x16xbf16, #tpu.memory_space<vmem>>, vector<1x16x16xbf16>
    %84 = vector.shape_cast %83 : vector<1x16x16xbf16> to vector<16x16xbf16>
    %cst_70 = arith.constant dense<0.000000e+00> : vector<32x16xf32>
    %85 = tpu.matmul %82, %84, %cst_70 {dimension_numbers = #tpu.dot_dimension_numbers<[1], [0], [0], [1], [0, 0, 1, 1], [], []>} : vector<32x16xbf16>, vector<16x16xbf16>, vector<32x16xf32> -> vector<32x16xf32>
    %86 = arith.addf %81, %85 : vector<32x16xf32>
    %c0_71 = arith.constant 0 : index
    %c0_72 = arith.constant 0 : index
    %87 = vector.load %arg6[%c0_71, %c0_72] : memref<1x16xf32, #tpu.memory_space<vmem>>, vector<1x16xf32>
    %88 = vector.broadcast %87 : vector<1x16xf32> to vector<32x16xf32>
    %89 = arith.addf %86, %88 : vector<32x16xf32>
    %90 = arith.addf %89, %66 : vector<32x16xf32>
    %cst_73 = arith.constant 0.000000e+00 : f32
    %91 = vector.broadcast %cst_73 : f32 to vector<32x16xf32>
    %92 = arith.maximumf %90, %91 : vector<32x16xf32>
    %93 = vector.shape_cast %92 : vector<32x16xf32> to vector<2x16x16xf32>
    %94 = arith.truncf %93 : vector<2x16x16xf32> to vector<2x16x16xbf16>
    %c0_74 = arith.constant 0 : index
    %c8_75 = arith.constant 8 : index
    %c0_76 = arith.constant 0 : index
    %95 = vector.load %arg34[%c0_74, %c8_75, %c0_76] : memref<2x32x64xbf16, #tpu.memory_space<vmem>>, vector<2x16x16xbf16>
    tpu.vector_store %arg34[%c0_74, %c8_75, %c0_76], %94 {strides = array<i32>} : memref<2x32x64xbf16, #tpu.memory_space<vmem>>, vector<2x16x16xbf16>,
    %c0_77 = arith.constant 0 : index
    %c7_78 = arith.constant 7 : index
    %c0_79 = arith.constant 0 : index
    %96 = vector.load %arg34[%c0_77, %c7_78, %c0_79] : memref<2x32x64xbf16, #tpu.memory_space<vmem>>, vector<2x16x16xbf16>
    %c0_80 = arith.constant 0 : index
    %c8_81 = arith.constant 8 : index
    %c0_82 = arith.constant 0 : index
    %97 = vector.load %arg34[%c0_80, %c8_81, %c0_82] : memref<2x32x64xbf16, #tpu.memory_space<vmem>>, vector<2x16x16xbf16>
    %c0_83 = arith.constant 0 : index
    %c9_84 = arith.constant 9 : index
    %c0_85 = arith.constant 0 : index
    %98 = vector.load %arg34[%c0_83, %c9_84, %c0_85] : memref<2x32x64xbf16, #tpu.memory_space<vmem>>, vector<2x16x16xbf16>
    %99 = vector.shape_cast %96 : vector<2x16x16xbf16> to vector<32x16xbf16>
    %c0_86 = arith.constant 0 : index
    %c0_87 = arith.constant 0 : index
    %c0_88 = arith.constant 0 : index
    %100 = vector.load %arg7[%c0_86, %c0_87, %c0_88] : memref<3x16x16xbf16, #tpu.memory_space<vmem>>, vector<1x16x16xbf16>
    %101 = vector.shape_cast %100 : vector<1x16x16xbf16> to vector<16x16xbf16>
    %cst_89 = arith.constant dense<0.000000e+00> : vector<32x16xf32>
    %102 = tpu.matmul %99, %101, %cst_89 {dimension_numbers = #tpu.dot_dimension_numbers<[1], [0], [0], [1], [0, 0, 1, 1], [], []>} : vector<32x16xbf16>, vector<16x16xbf16>, vector<32x16xf32> -> vector<32x16xf32>
    %103 = vector.shape_cast %97 : vector<2x16x16xbf16> to vector<32x16xbf16>
    %c1_90 = arith.constant 1 : index
    %c0_91 = arith.constant 0 : index
    %c0_92 = arith.constant 0 : index
    %104 = vector.load %arg7[%c1_90, %c0_91, %c0_92] : memref<3x16x16xbf16, #tpu.memory_space<vmem>>, vector<1x16x16xbf16>
    %105 = vector.shape_cast %104 : vector<1x16x16xbf16> to vector<16x16xbf16>
    %cst_93 = arith.constant dense<0.000000e+00> : vector<32x16xf32>
    %106 = tpu.matmul %103, %105, %cst_93 {dimension_numbers = #tpu.dot_dimension_numbers<[1], [0], [0], [1], [0, 0, 1, 1], [], []>} : vector<32x16xbf16>, vector<16x16xbf16>, vector<32x16xf32> -> vector<32x16xf32>
    %107 = arith.addf %102, %106 : vector<32x16xf32>
    %108 = vector.shape_cast %98 : vector<2x16x16xbf16> to vector<32x16xbf16>
    %c2_94 = arith.constant 2 : index
    %c0_95 = arith.constant 0 : index
    %c0_96 = arith.constant 0 : index
    %109 = vector.load %arg7[%c2_94, %c0_95, %c0_96] : memref<3x16x16xbf16, #tpu.memory_space<vmem>>, vector<1x16x16xbf16>
    %110 = vector.shape_cast %109 : vector<1x16x16xbf16> to vector<16x16xbf16>
    %cst_97 = arith.constant dense<0.000000e+00> : vector<32x16xf32>
    %111 = tpu.matmul %108, %110, %cst_97 {dimension_numbers = #tpu.dot_dimension_numbers<[1], [0], [0], [1], [0, 0, 1, 1], [], []>} : vector<32x16xbf16>, vector<16x16xbf16>, vector<32x16xf32> -> vector<32x16xf32>
    %112 = arith.addf %107, %111 : vector<32x16xf32>
    %c0_98 = arith.constant 0 : index
    %c0_99 = arith.constant 0 : index
    %113 = vector.load %arg8[%c0_98, %c0_99] : memref<1x16xf32, #tpu.memory_space<vmem>>, vector<1x16xf32>
    %114 = vector.broadcast %113 : vector<1x16xf32> to vector<32x16xf32>
    %115 = arith.addf %112, %114 : vector<32x16xf32>
    %cst_100 = arith.constant 0.000000e+00 : f32
    %116 = vector.broadcast %cst_100 : f32 to vector<32x16xf32>
    %117 = arith.maximumf %115, %116 : vector<32x16xf32>
    %c0_101 = arith.constant 0 : index
    %c8_102 = arith.constant 8 : index
    %c0_103 = arith.constant 0 : index
    %118 = vector.load %arg34[%c0_101, %c8_102, %c0_103] : memref<2x32x64xbf16, #tpu.memory_space<vmem>>, vector<2x16x16xbf16>
    %119 = vector.shape_cast %118 : vector<2x16x16xbf16> to vector<32x16xbf16>
    %120 = arith.extf %119 : vector<32x16xbf16> to vector<32x16xf32>
    %121 = vector.shape_cast %117 : vector<32x16xf32> to vector<2x16x16xf32>
    %122 = arith.truncf %121 : vector<2x16x16xf32> to vector<2x16x16xbf16>
    %c0_104 = arith.constant 0 : index
    %c8_105 = arith.constant 8 : index
    %c0_106 = arith.constant 0 : index
    %123 = vector.load %arg34[%c0_104, %c8_105, %c0_106] : memref<2x32x64xbf16, #tpu.memory_space<vmem>>, vector<2x16x16xbf16>
    tpu.vector_store %arg34[%c0_104, %c8_105, %c0_106], %122 {strides = array<i32>} : memref<2x32x64xbf16, #tpu.memory_space<vmem>>, vector<2x16x16xbf16>,
    %c0_107 = arith.constant 0 : index
    %c7_108 = arith.constant 7 : index
    %c0_109 = arith.constant 0 : index
    %124 = vector.load %arg34[%c0_107, %c7_108, %c0_109] : memref<2x32x64xbf16, #tpu.memory_space<vmem>>, vector<2x16x16xbf16>
    %c0_110 = arith.constant 0 : index
    %c8_111 = arith.constant 8 : index
    %c0_112 = arith.constant 0 : index
    %125 = vector.load %arg34[%c0_110, %c8_111, %c0_112] : memref<2x32x64xbf16, #tpu.memory_space<vmem>>, vector<2x16x16xbf16>
    %c0_113 = arith.constant 0 : index
    %c9_114 = arith.constant 9 : index
    %c0_115 = arith.constant 0 : index
    %126 = vector.load %arg34[%c0_113, %c9_114, %c0_115] : memref<2x32x64xbf16, #tpu.memory_space<vmem>>, vector<2x16x16xbf16>
    %127 = vector.shape_cast %124 : vector<2x16x16xbf16> to vector<32x16xbf16>
    %c0_116 = arith.constant 0 : index
    %c0_117 = arith.constant 0 : index
    %c0_118 = arith.constant 0 : index
    %128 = vector.load %arg9[%c0_116, %c0_117, %c0_118] : memref<3x16x16xbf16, #tpu.memory_space<vmem>>, vector<1x16x16xbf16>
    %129 = vector.shape_cast %128 : vector<1x16x16xbf16> to vector<16x16xbf16>
    %cst_119 = arith.constant dense<0.000000e+00> : vector<32x16xf32>
    %130 = tpu.matmul %127, %129, %cst_119 {dimension_numbers = #tpu.dot_dimension_numbers<[1], [0], [0], [1], [0, 0, 1, 1], [], []>} : vector<32x16xbf16>, vector<16x16xbf16>, vector<32x16xf32> -> vector<32x16xf32>
    %131 = vector.shape_cast %125 : vector<2x16x16xbf16> to vector<32x16xbf16>
    %c1_120 = arith.constant 1 : index
    %c0_121 = arith.constant 0 : index
    %c0_122 = arith.constant 0 : index
    %132 = vector.load %arg9[%c1_120, %c0_121, %c0_122] : memref<3x16x16xbf16, #tpu.memory_space<vmem>>, vector<1x16x16xbf16>
    %133 = vector.shape_cast %132 : vector<1x16x16xbf16> to vector<16x16xbf16>
    %cst_123 = arith.constant dense<0.000000e+00> : vector<32x16xf32>
    %134 = tpu.matmul %131, %133, %cst_123 {dimension_numbers = #tpu.dot_dimension_numbers<[1], [0], [0], [1], [0, 0, 1, 1], [], []>} : vector<32x16xbf16>, vector<16x16xbf16>, vector<32x16xf32> -> vector<32x16xf32>
    %135 = arith.addf %130, %134 : vector<32x16xf32>
    %136 = vector.shape_cast %126 : vector<2x16x16xbf16> to vector<32x16xbf16>
    %c2_124 = arith.constant 2 : index
    %c0_125 = arith.constant 0 : index
    %c0_126 = arith.constant 0 : index
    %137 = vector.load %arg9[%c2_124, %c0_125, %c0_126] : memref<3x16x16xbf16, #tpu.memory_space<vmem>>, vector<1x16x16xbf16>
    %138 = vector.shape_cast %137 : vector<1x16x16xbf16> to vector<16x16xbf16>
    %cst_127 = arith.constant dense<0.000000e+00> : vector<32x16xf32>
    %139 = tpu.matmul %136, %138, %cst_127 {dimension_numbers = #tpu.dot_dimension_numbers<[1], [0], [0], [1], [0, 0, 1, 1], [], []>} : vector<32x16xbf16>, vector<16x16xbf16>, vector<32x16xf32> -> vector<32x16xf32>
    %140 = arith.addf %135, %139 : vector<32x16xf32>
    %c0_128 = arith.constant 0 : index
    %c0_129 = arith.constant 0 : index
    %141 = vector.load %arg10[%c0_128, %c0_129] : memref<1x16xf32, #tpu.memory_space<vmem>>, vector<1x16xf32>
    %142 = vector.broadcast %141 : vector<1x16xf32> to vector<32x16xf32>
    %143 = arith.addf %140, %142 : vector<32x16xf32>
    %144 = arith.addf %143, %120 : vector<32x16xf32>
    %cst_130 = arith.constant 0.000000e+00 : f32
    %145 = vector.broadcast %cst_130 : f32 to vector<32x16xf32>
    %146 = arith.maximumf %144, %145 : vector<32x16xf32>
    %147 = vector.shape_cast %146 : vector<32x16xf32> to vector<2x16x16xf32>
    %148 = arith.truncf %147 : vector<2x16x16xf32> to vector<2x16x16xbf16>
    %c0_131 = arith.constant 0 : index
    %c8_132 = arith.constant 8 : index
    %c0_133 = arith.constant 0 : index
    %149 = vector.load %arg34[%c0_131, %c8_132, %c0_133] : memref<2x32x64xbf16, #tpu.memory_space<vmem>>, vector<2x16x16xbf16>
    tpu.vector_store %arg34[%c0_131, %c8_132, %c0_133], %148 {strides = array<i32>} : memref<2x32x64xbf16, #tpu.memory_space<vmem>>, vector<2x16x16xbf16>,
    %c0_134 = arith.constant 0 : index
    %c7_135 = arith.constant 7 : index
    %c0_136 = arith.constant 0 : index
    %150 = vector.load %arg34[%c0_134, %c7_135, %c0_136] : memref<2x32x64xbf16, #tpu.memory_space<vmem>>, vector<2x16x16xbf16>
    %c0_137 = arith.constant 0 : index
    %c8_138 = arith.constant 8 : index
    %c0_139 = arith.constant 0 : index
    %151 = vector.load %arg34[%c0_137, %c8_138, %c0_139] : memref<2x32x64xbf16, #tpu.memory_space<vmem>>, vector<2x16x16xbf16>
    %c0_140 = arith.constant 0 : index
    %c9_141 = arith.constant 9 : index
    %c0_142 = arith.constant 0 : index
    %152 = vector.load %arg34[%c0_140, %c9_141, %c0_142] : memref<2x32x64xbf16, #tpu.memory_space<vmem>>, vector<2x16x16xbf16>
    %153 = vector.shape_cast %150 : vector<2x16x16xbf16> to vector<32x16xbf16>
    %c0_143 = arith.constant 0 : index
    %c0_144 = arith.constant 0 : index
    %c0_145 = arith.constant 0 : index
    %154 = vector.load %arg11[%c0_143, %c0_144, %c0_145] : memref<3x16x32xbf16, #tpu.memory_space<vmem>>, vector<1x16x32xbf16>
    %155 = vector.shape_cast %154 : vector<1x16x32xbf16> to vector<16x32xbf16>
    %cst_146 = arith.constant dense<0.000000e+00> : vector<32x32xf32>
    %156 = tpu.matmul %153, %155, %cst_146 {dimension_numbers = #tpu.dot_dimension_numbers<[1], [0], [0], [1], [0, 0, 1, 1], [], []>} : vector<32x16xbf16>, vector<16x32xbf16>, vector<32x32xf32> -> vector<32x32xf32>
    %157 = vector.shape_cast %151 : vector<2x16x16xbf16> to vector<32x16xbf16>
    %c1_147 = arith.constant 1 : index
    %c0_148 = arith.constant 0 : index
    %c0_149 = arith.constant 0 : index
    %158 = vector.load %arg11[%c1_147, %c0_148, %c0_149] : memref<3x16x32xbf16, #tpu.memory_space<vmem>>, vector<1x16x32xbf16>
    %159 = vector.shape_cast %158 : vector<1x16x32xbf16> to vector<16x32xbf16>
    %cst_150 = arith.constant dense<0.000000e+00> : vector<32x32xf32>
    %160 = tpu.matmul %157, %159, %cst_150 {dimension_numbers = #tpu.dot_dimension_numbers<[1], [0], [0], [1], [0, 0, 1, 1], [], []>} : vector<32x16xbf16>, vector<16x32xbf16>, vector<32x32xf32> -> vector<32x32xf32>
    %161 = arith.addf %156, %160 : vector<32x32xf32>
    %162 = vector.shape_cast %152 : vector<2x16x16xbf16> to vector<32x16xbf16>
    %c2_151 = arith.constant 2 : index
    %c0_152 = arith.constant 0 : index
    %c0_153 = arith.constant 0 : index
    %163 = vector.load %arg11[%c2_151, %c0_152, %c0_153] : memref<3x16x32xbf16, #tpu.memory_space<vmem>>, vector<1x16x32xbf16>
    %164 = vector.shape_cast %163 : vector<1x16x32xbf16> to vector<16x32xbf16>
    %cst_154 = arith.constant dense<0.000000e+00> : vector<32x32xf32>
    %165 = tpu.matmul %162, %164, %cst_154 {dimension_numbers = #tpu.dot_dimension_numbers<[1], [0], [0], [1], [0, 0, 1, 1], [], []>} : vector<32x16xbf16>, vector<16x32xbf16>, vector<32x32xf32> -> vector<32x32xf32>
    %166 = arith.addf %161, %165 : vector<32x32xf32>
    %c0_155 = arith.constant 0 : index
    %c0_156 = arith.constant 0 : index
    %167 = vector.load %arg12[%c0_155, %c0_156] : memref<1x32xf32, #tpu.memory_space<vmem>>, vector<1x32xf32>
    %168 = vector.broadcast %167 : vector<1x32xf32> to vector<32x32xf32>
    %169 = arith.addf %166, %168 : vector<32x32xf32>
    %cst_157 = arith.constant 0.000000e+00 : f32
    %170 = vector.broadcast %cst_157 : f32 to vector<32x32xf32>
    %171 = arith.maximumf %169, %170 : vector<32x32xf32>
    %c0_158 = arith.constant 0 : index
    %c8_159 = arith.constant 8 : index
    %c0_160 = arith.constant 0 : index
    %172 = vector.load %arg34[%c0_158, %c8_159, %c0_160] : memref<2x32x64xbf16, #tpu.memory_space<vmem>>, vector<2x16x16xbf16>
    %173 = vector.shape_cast %172 : vector<2x16x16xbf16> to vector<32x16xbf16>
    %c0_161 = arith.constant 0 : index
    %c0_162 = arith.constant 0 : index
    %174 = vector.load %arg15[%c0_161, %c0_162] : memref<16x32xbf16, #tpu.memory_space<vmem>>, vector<16x32xbf16>
    %cst_163 = arith.constant dense<0.000000e+00> : vector<32x32xf32>
    %175 = tpu.matmul %173, %174, %cst_163 {dimension_numbers = #tpu.dot_dimension_numbers<[1], [0], [0], [1], [0, 0, 1, 1], [], []>} : vector<32x16xbf16>, vector<16x32xbf16>, vector<32x32xf32> -> vector<32x32xf32>
    %c0_164 = arith.constant 0 : index
    %c0_165 = arith.constant 0 : index
    %176 = vector.load %arg16[%c0_164, %c0_165] : memref<1x32xf32, #tpu.memory_space<vmem>>, vector<1x32xf32>
    %177 = vector.broadcast %176 : vector<1x32xf32> to vector<32x32xf32>
    %178 = arith.addf %175, %177 : vector<32x32xf32>
    %179 = vector.shape_cast %171 : vector<32x32xf32> to vector<2x16x32xf32>
    %180 = arith.truncf %179 : vector<2x16x32xf32> to vector<2x16x32xbf16>
    %c0_166 = arith.constant 0 : index
    %c8_167 = arith.constant 8 : index
    %c0_168 = arith.constant 0 : index
    %181 = vector.load %arg34[%c0_166, %c8_167, %c0_168] : memref<2x32x64xbf16, #tpu.memory_space<vmem>>, vector<2x16x32xbf16>
    tpu.vector_store %arg34[%c0_166, %c8_167, %c0_168], %180 {strides = array<i32>} : memref<2x32x64xbf16, #tpu.memory_space<vmem>>, vector<2x16x32xbf16>,
    %c0_169 = arith.constant 0 : index
    %c7_170 = arith.constant 7 : index
    %c0_171 = arith.constant 0 : index
    %182 = vector.load %arg34[%c0_169, %c7_170, %c0_171] : memref<2x32x64xbf16, #tpu.memory_space<vmem>>, vector<2x16x32xbf16>
    %c0_172 = arith.constant 0 : index
    %c8_173 = arith.constant 8 : index
    %c0_174 = arith.constant 0 : index
    %183 = vector.load %arg34[%c0_172, %c8_173, %c0_174] : memref<2x32x64xbf16, #tpu.memory_space<vmem>>, vector<2x16x32xbf16>
    %c0_175 = arith.constant 0 : index
    %c9_176 = arith.constant 9 : index
    %c0_177 = arith.constant 0 : index
    %184 = vector.load %arg34[%c0_175, %c9_176, %c0_177] : memref<2x32x64xbf16, #tpu.memory_space<vmem>>, vector<2x16x32xbf16>
    %185 = vector.shape_cast %182 : vector<2x16x32xbf16> to vector<32x32xbf16>
    %c0_178 = arith.constant 0 : index
    %c0_179 = arith.constant 0 : index
    %c0_180 = arith.constant 0 : index
    %186 = vector.load %arg13[%c0_178, %c0_179, %c0_180] : memref<3x32x32xbf16, #tpu.memory_space<vmem>>, vector<1x32x32xbf16>
    %187 = vector.shape_cast %186 : vector<1x32x32xbf16> to vector<32x32xbf16>
    %cst_181 = arith.constant dense<0.000000e+00> : vector<32x32xf32>
    %188 = tpu.matmul %185, %187, %cst_181 {dimension_numbers = #tpu.dot_dimension_numbers<[1], [0], [0], [1], [0, 0, 1, 1], [], []>} : vector<32x32xbf16>, vector<32x32xbf16>, vector<32x32xf32> -> vector<32x32xf32>
    %189 = vector.shape_cast %183 : vector<2x16x32xbf16> to vector<32x32xbf16>
    %c1_182 = arith.constant 1 : index
    %c0_183 = arith.constant 0 : index
    %c0_184 = arith.constant 0 : index
    %190 = vector.load %arg13[%c1_182, %c0_183, %c0_184] : memref<3x32x32xbf16, #tpu.memory_space<vmem>>, vector<1x32x32xbf16>
    %191 = vector.shape_cast %190 : vector<1x32x32xbf16> to vector<32x32xbf16>
    %cst_185 = arith.constant dense<0.000000e+00> : vector<32x32xf32>
    %192 = tpu.matmul %189, %191, %cst_185 {dimension_numbers = #tpu.dot_dimension_numbers<[1], [0], [0], [1], [0, 0, 1, 1], [], []>} : vector<32x32xbf16>, vector<32x32xbf16>, vector<32x32xf32> -> vector<32x32xf32>
    %193 = arith.addf %188, %192 : vector<32x32xf32>
    %194 = vector.shape_cast %184 : vector<2x16x32xbf16> to vector<32x32xbf16>
    %c2_186 = arith.constant 2 : index
    %c0_187 = arith.constant 0 : index
    %c0_188 = arith.constant 0 : index
    %195 = vector.load %arg13[%c2_186, %c0_187, %c0_188] : memref<3x32x32xbf16, #tpu.memory_space<vmem>>, vector<1x32x32xbf16>
    %196 = vector.shape_cast %195 : vector<1x32x32xbf16> to vector<32x32xbf16>
    %cst_189 = arith.constant dense<0.000000e+00> : vector<32x32xf32>
    %197 = tpu.matmul %194, %196, %cst_189 {dimension_numbers = #tpu.dot_dimension_numbers<[1], [0], [0], [1], [0, 0, 1, 1], [], []>} : vector<32x32xbf16>, vector<32x32xbf16>, vector<32x32xf32> -> vector<32x32xf32>
    %198 = arith.addf %193, %197 : vector<32x32xf32>
    %c0_190 = arith.constant 0 : index
    %c0_191 = arith.constant 0 : index
    %199 = vector.load %arg14[%c0_190, %c0_191] : memref<1x32xf32, #tpu.memory_space<vmem>>, vector<1x32xf32>
    %200 = vector.broadcast %199 : vector<1x32xf32> to vector<32x32xf32>
    %201 = arith.addf %198, %200 : vector<32x32xf32>
    %202 = arith.addf %201, %178 : vector<32x32xf32>
    %cst_192 = arith.constant 0.000000e+00 : f32
    %203 = vector.broadcast %cst_192 : f32 to vector<32x32xf32>
    %204 = arith.maximumf %202, %203 : vector<32x32xf32>
    %205 = vector.shape_cast %204 : vector<32x32xf32> to vector<2x16x32xf32>
    %206 = arith.truncf %205 : vector<2x16x32xf32> to vector<2x16x32xbf16>
    %c0_193 = arith.constant 0 : index
    %c8_194 = arith.constant 8 : index
    %c0_195 = arith.constant 0 : index
    %207 = vector.load %arg34[%c0_193, %c8_194, %c0_195] : memref<2x32x64xbf16, #tpu.memory_space<vmem>>, vector<2x16x32xbf16>
    tpu.vector_store %arg34[%c0_193, %c8_194, %c0_195], %206 {strides = array<i32>} : memref<2x32x64xbf16, #tpu.memory_space<vmem>>, vector<2x16x32xbf16>,
    %c0_196 = arith.constant 0 : index
    %c7_197 = arith.constant 7 : index
    %c0_198 = arith.constant 0 : index
    %208 = vector.load %arg34[%c0_196, %c7_197, %c0_198] : memref<2x32x64xbf16, #tpu.memory_space<vmem>>, vector<2x16x32xbf16>
    %c0_199 = arith.constant 0 : index
    %c8_200 = arith.constant 8 : index
    %c0_201 = arith.constant 0 : index
    %209 = vector.load %arg34[%c0_199, %c8_200, %c0_201] : memref<2x32x64xbf16, #tpu.memory_space<vmem>>, vector<2x16x32xbf16>
    %c0_202 = arith.constant 0 : index
    %c9_203 = arith.constant 9 : index
    %c0_204 = arith.constant 0 : index
    %210 = vector.load %arg34[%c0_202, %c9_203, %c0_204] : memref<2x32x64xbf16, #tpu.memory_space<vmem>>, vector<2x16x32xbf16>
    %211 = vector.shape_cast %208 : vector<2x16x32xbf16> to vector<32x32xbf16>
    %c0_205 = arith.constant 0 : index
    %c0_206 = arith.constant 0 : index
    %c0_207 = arith.constant 0 : index
    %212 = vector.load %arg17[%c0_205, %c0_206, %c0_207] : memref<3x32x32xbf16, #tpu.memory_space<vmem>>, vector<1x32x32xbf16>
    %213 = vector.shape_cast %212 : vector<1x32x32xbf16> to vector<32x32xbf16>
    %cst_208 = arith.constant dense<0.000000e+00> : vector<32x32xf32>
    %214 = tpu.matmul %211, %213, %cst_208 {dimension_numbers = #tpu.dot_dimension_numbers<[1], [0], [0], [1], [0, 0, 1, 1], [], []>} : vector<32x32xbf16>, vector<32x32xbf16>, vector<32x32xf32> -> vector<32x32xf32>
    %215 = vector.shape_cast %209 : vector<2x16x32xbf16> to vector<32x32xbf16>
    %c1_209 = arith.constant 1 : index
    %c0_210 = arith.constant 0 : index
    %c0_211 = arith.constant 0 : index
    %216 = vector.load %arg17[%c1_209, %c0_210, %c0_211] : memref<3x32x32xbf16, #tpu.memory_space<vmem>>, vector<1x32x32xbf16>
    %217 = vector.shape_cast %216 : vector<1x32x32xbf16> to vector<32x32xbf16>
    %cst_212 = arith.constant dense<0.000000e+00> : vector<32x32xf32>
    %218 = tpu.matmul %215, %217, %cst_212 {dimension_numbers = #tpu.dot_dimension_numbers<[1], [0], [0], [1], [0, 0, 1, 1], [], []>} : vector<32x32xbf16>, vector<32x32xbf16>, vector<32x32xf32> -> vector<32x32xf32>
    %219 = arith.addf %214, %218 : vector<32x32xf32>
    %220 = vector.shape_cast %210 : vector<2x16x32xbf16> to vector<32x32xbf16>
    %c2_213 = arith.constant 2 : index
    %c0_214 = arith.constant 0 : index
    %c0_215 = arith.constant 0 : index
    %221 = vector.load %arg17[%c2_213, %c0_214, %c0_215] : memref<3x32x32xbf16, #tpu.memory_space<vmem>>, vector<1x32x32xbf16>
    %222 = vector.shape_cast %221 : vector<1x32x32xbf16> to vector<32x32xbf16>
    %cst_216 = arith.constant dense<0.000000e+00> : vector<32x32xf32>
    %223 = tpu.matmul %220, %222, %cst_216 {dimension_numbers = #tpu.dot_dimension_numbers<[1], [0], [0], [1], [0, 0, 1, 1], [], []>} : vector<32x32xbf16>, vector<32x32xbf16>, vector<32x32xf32> -> vector<32x32xf32>
    %224 = arith.addf %219, %223 : vector<32x32xf32>
    %c0_217 = arith.constant 0 : index
    %c0_218 = arith.constant 0 : index
    %225 = vector.load %arg18[%c0_217, %c0_218] : memref<1x32xf32, #tpu.memory_space<vmem>>, vector<1x32xf32>
    %226 = vector.broadcast %225 : vector<1x32xf32> to vector<32x32xf32>
    %227 = arith.addf %224, %226 : vector<32x32xf32>
    %cst_219 = arith.constant 0.000000e+00 : f32
    %228 = vector.broadcast %cst_219 : f32 to vector<32x32xf32>
    %229 = arith.maximumf %227, %228 : vector<32x32xf32>
    %c0_220 = arith.constant 0 : index
    %c8_221 = arith.constant 8 : index
    %c0_222 = arith.constant 0 : index
    %230 = vector.load %arg34[%c0_220, %c8_221, %c0_222] : memref<2x32x64xbf16, #tpu.memory_space<vmem>>, vector<2x16x32xbf16>
    %231 = vector.shape_cast %230 : vector<2x16x32xbf16> to vector<32x32xbf16>
    %232 = arith.extf %231 : vector<32x32xbf16> to vector<32x32xf32>
    %233 = vector.shape_cast %229 : vector<32x32xf32> to vector<2x16x32xf32>
    %234 = arith.truncf %233 : vector<2x16x32xf32> to vector<2x16x32xbf16>
    %c0_223 = arith.constant 0 : index
    %c8_224 = arith.constant 8 : index
    %c0_225 = arith.constant 0 : index
    %235 = vector.load %arg34[%c0_223, %c8_224, %c0_225] : memref<2x32x64xbf16, #tpu.memory_space<vmem>>, vector<2x16x32xbf16>
    tpu.vector_store %arg34[%c0_223, %c8_224, %c0_225], %234 {strides = array<i32>} : memref<2x32x64xbf16, #tpu.memory_space<vmem>>, vector<2x16x32xbf16>,
    %c0_226 = arith.constant 0 : index
    %c7_227 = arith.constant 7 : index
    %c0_228 = arith.constant 0 : index
    %236 = vector.load %arg34[%c0_226, %c7_227, %c0_228] : memref<2x32x64xbf16, #tpu.memory_space<vmem>>, vector<2x16x32xbf16>
    %c0_229 = arith.constant 0 : index
    %c8_230 = arith.constant 8 : index
    %c0_231 = arith.constant 0 : index
    %237 = vector.load %arg34[%c0_229, %c8_230, %c0_231] : memref<2x32x64xbf16, #tpu.memory_space<vmem>>, vector<2x16x32xbf16>
    %c0_232 = arith.constant 0 : index
    %c9_233 = arith.constant 9 : index
    %c0_234 = arith.constant 0 : index
    %238 = vector.load %arg34[%c0_232, %c9_233, %c0_234] : memref<2x32x64xbf16, #tpu.memory_space<vmem>>, vector<2x16x32xbf16>
    %239 = vector.shape_cast %236 : vector<2x16x32xbf16> to vector<32x32xbf16>
    %c0_235 = arith.constant 0 : index
    %c0_236 = arith.constant 0 : index
    %c0_237 = arith.constant 0 : index
    %240 = vector.load %arg19[%c0_235, %c0_236, %c0_237] : memref<3x32x32xbf16, #tpu.memory_space<vmem>>, vector<1x32x32xbf16>
    %241 = vector.shape_cast %240 : vector<1x32x32xbf16> to vector<32x32xbf16>
    %cst_238 = arith.constant dense<0.000000e+00> : vector<32x32xf32>
    %242 = tpu.matmul %239, %241, %cst_238 {dimension_numbers = #tpu.dot_dimension_numbers<[1], [0], [0], [1], [0, 0, 1, 1], [], []>} : vector<32x32xbf16>, vector<32x32xbf16>, vector<32x32xf32> -> vector<32x32xf32>
    %243 = vector.shape_cast %237 : vector<2x16x32xbf16> to vector<32x32xbf16>
    %c1_239 = arith.constant 1 : index
    %c0_240 = arith.constant 0 : index
    %c0_241 = arith.constant 0 : index
    %244 = vector.load %arg19[%c1_239, %c0_240, %c0_241] : memref<3x32x32xbf16, #tpu.memory_space<vmem>>, vector<1x32x32xbf16>
    %245 = vector.shape_cast %244 : vector<1x32x32xbf16> to vector<32x32xbf16>
    %cst_242 = arith.constant dense<0.000000e+00> : vector<32x32xf32>
    %246 = tpu.matmul %243, %245, %cst_242 {dimension_numbers = #tpu.dot_dimension_numbers<[1], [0], [0], [1], [0, 0, 1, 1], [], []>} : vector<32x32xbf16>, vector<32x32xbf16>, vector<32x32xf32> -> vector<32x32xf32>
    %247 = arith.addf %242, %246 : vector<32x32xf32>
    %248 = vector.shape_cast %238 : vector<2x16x32xbf16> to vector<32x32xbf16>
    %c2_243 = arith.constant 2 : index
    %c0_244 = arith.constant 0 : index
    %c0_245 = arith.constant 0 : index
    %249 = vector.load %arg19[%c2_243, %c0_244, %c0_245] : memref<3x32x32xbf16, #tpu.memory_space<vmem>>, vector<1x32x32xbf16>
    %250 = vector.shape_cast %249 : vector<1x32x32xbf16> to vector<32x32xbf16>
    %cst_246 = arith.constant dense<0.000000e+00> : vector<32x32xf32>
    %251 = tpu.matmul %248, %250, %cst_246 {dimension_numbers = #tpu.dot_dimension_numbers<[1], [0], [0], [1], [0, 0, 1, 1], [], []>} : vector<32x32xbf16>, vector<32x32xbf16>, vector<32x32xf32> -> vector<32x32xf32>
    %252 = arith.addf %247, %251 : vector<32x32xf32>
    %c0_247 = arith.constant 0 : index
    %c0_248 = arith.constant 0 : index
    %253 = vector.load %arg20[%c0_247, %c0_248] : memref<1x32xf32, #tpu.memory_space<vmem>>, vector<1x32xf32>
    %254 = vector.broadcast %253 : vector<1x32xf32> to vector<32x32xf32>
    %255 = arith.addf %252, %254 : vector<32x32xf32>
    %256 = arith.addf %255, %232 : vector<32x32xf32>
    %cst_249 = arith.constant 0.000000e+00 : f32
    %257 = vector.broadcast %cst_249 : f32 to vector<32x32xf32>
    %258 = arith.maximumf %256, %257 : vector<32x32xf32>
    %259 = vector.shape_cast %258 : vector<32x32xf32> to vector<2x16x32xf32>
    %260 = arith.truncf %259 : vector<2x16x32xf32> to vector<2x16x32xbf16>
    %c0_250 = arith.constant 0 : index
    %c8_251 = arith.constant 8 : index
    %c0_252 = arith.constant 0 : index
    %261 = vector.load %arg34[%c0_250, %c8_251, %c0_252] : memref<2x32x64xbf16, #tpu.memory_space<vmem>>, vector<2x16x32xbf16>
    tpu.vector_store %arg34[%c0_250, %c8_251, %c0_252], %260 {strides = array<i32>} : memref<2x32x64xbf16, #tpu.memory_space<vmem>>, vector<2x16x32xbf16>,
    %c0_253 = arith.constant 0 : index
    %c7_254 = arith.constant 7 : index
    %c0_255 = arith.constant 0 : index
    %262 = vector.load %arg34[%c0_253, %c7_254, %c0_255] : memref<2x32x64xbf16, #tpu.memory_space<vmem>>, vector<2x16x32xbf16>
    %c0_256 = arith.constant 0 : index
    %c8_257 = arith.constant 8 : index
    %c0_258 = arith.constant 0 : index
    %263 = vector.load %arg34[%c0_256, %c8_257, %c0_258] : memref<2x32x64xbf16, #tpu.memory_space<vmem>>, vector<2x16x32xbf16>
    %c0_259 = arith.constant 0 : index
    %c9_260 = arith.constant 9 : index
    %c0_261 = arith.constant 0 : index
    %264 = vector.load %arg34[%c0_259, %c9_260, %c0_261] : memref<2x32x64xbf16, #tpu.memory_space<vmem>>, vector<2x16x32xbf16>
    %265 = vector.shape_cast %262 : vector<2x16x32xbf16> to vector<32x32xbf16>
    %c0_262 = arith.constant 0 : index
    %c0_263 = arith.constant 0 : index
    %c0_264 = arith.constant 0 : index
    %266 = vector.load %arg21[%c0_262, %c0_263, %c0_264] : memref<3x32x64xbf16, #tpu.memory_space<vmem>>, vector<1x32x64xbf16>
    %267 = vector.shape_cast %266 : vector<1x32x64xbf16> to vector<32x64xbf16>
    %cst_265 = arith.constant dense<0.000000e+00> : vector<32x64xf32>
    %268 = tpu.matmul %265, %267, %cst_265 {dimension_numbers = #tpu.dot_dimension_numbers<[1], [0], [0], [1], [0, 0, 1, 1], [], []>} : vector<32x32xbf16>, vector<32x64xbf16>, vector<32x64xf32> -> vector<32x64xf32>
    %269 = vector.shape_cast %263 : vector<2x16x32xbf16> to vector<32x32xbf16>
    %c1_266 = arith.constant 1 : index
    %c0_267 = arith.constant 0 : index
    %c0_268 = arith.constant 0 : index
    %270 = vector.load %arg21[%c1_266, %c0_267, %c0_268] : memref<3x32x64xbf16, #tpu.memory_space<vmem>>, vector<1x32x64xbf16>
    %271 = vector.shape_cast %270 : vector<1x32x64xbf16> to vector<32x64xbf16>
    %cst_269 = arith.constant dense<0.000000e+00> : vector<32x64xf32>
    %272 = tpu.matmul %269, %271, %cst_269 {dimension_numbers = #tpu.dot_dimension_numbers<[1], [0], [0], [1], [0, 0, 1, 1], [], []>} : vector<32x32xbf16>, vector<32x64xbf16>, vector<32x64xf32> -> vector<32x64xf32>
    %273 = arith.addf %268, %272 : vector<32x64xf32>
    %274 = vector.shape_cast %264 : vector<2x16x32xbf16> to vector<32x32xbf16>
    %c2_270 = arith.constant 2 : index
    %c0_271 = arith.constant 0 : index
    %c0_272 = arith.constant 0 : index
    %275 = vector.load %arg21[%c2_270, %c0_271, %c0_272] : memref<3x32x64xbf16, #tpu.memory_space<vmem>>, vector<1x32x64xbf16>
    %276 = vector.shape_cast %275 : vector<1x32x64xbf16> to vector<32x64xbf16>
    %cst_273 = arith.constant dense<0.000000e+00> : vector<32x64xf32>
    %277 = tpu.matmul %274, %276, %cst_273 {dimension_numbers = #tpu.dot_dimension_numbers<[1], [0], [0], [1], [0, 0, 1, 1], [], []>} : vector<32x32xbf16>, vector<32x64xbf16>, vector<32x64xf32> -> vector<32x64xf32>
    %278 = arith.addf %273, %277 : vector<32x64xf32>
    %c0_274 = arith.constant 0 : index
    %c0_275 = arith.constant 0 : index
    %279 = vector.load %arg22[%c0_274, %c0_275] : memref<1x64xf32, #tpu.memory_space<vmem>>, vector<1x64xf32>
    %280 = vector.broadcast %279 : vector<1x64xf32> to vector<32x64xf32>
    %281 = arith.addf %278, %280 : vector<32x64xf32>
    %cst_276 = arith.constant 0.000000e+00 : f32
    %282 = vector.broadcast %cst_276 : f32 to vector<32x64xf32>
    %283 = arith.maximumf %281, %282 : vector<32x64xf32>
    %c0_277 = arith.constant 0 : index
    %c8_278 = arith.constant 8 : index
    %c0_279 = arith.constant 0 : index
    %284 = vector.load %arg34[%c0_277, %c8_278, %c0_279] : memref<2x32x64xbf16, #tpu.memory_space<vmem>>, vector<2x16x32xbf16>
    %285 = vector.shape_cast %284 : vector<2x16x32xbf16> to vector<32x32xbf16>
    %c0_280 = arith.constant 0 : index
    %c0_281 = arith.constant 0 : index
    %286 = vector.load %arg25[%c0_280, %c0_281] : memref<32x64xbf16, #tpu.memory_space<vmem>>, vector<32x64xbf16>
    %cst_282 = arith.constant dense<0.000000e+00> : vector<32x64xf32>
    %287 = tpu.matmul %285, %286, %cst_282 {dimension_numbers = #tpu.dot_dimension_numbers<[1], [0], [0], [1], [0, 0, 1, 1], [], []>} : vector<32x32xbf16>, vector<32x64xbf16>, vector<32x64xf32> -> vector<32x64xf32>
    %c0_283 = arith.constant 0 : index
    %c0_284 = arith.constant 0 : index
    %288 = vector.load %arg26[%c0_283, %c0_284] : memref<1x64xf32, #tpu.memory_space<vmem>>, vector<1x64xf32>
    %289 = vector.broadcast %288 : vector<1x64xf32> to vector<32x64xf32>
    %290 = arith.addf %287, %289 : vector<32x64xf32>
    %291 = vector.shape_cast %283 : vector<32x64xf32> to vector<2x16x64xf32>
    %292 = arith.truncf %291 : vector<2x16x64xf32> to vector<2x16x64xbf16>
    %c0_285 = arith.constant 0 : index
    %c8_286 = arith.constant 8 : index
    %c0_287 = arith.constant 0 : index
    %293 = vector.load %arg34[%c0_285, %c8_286, %c0_287] : memref<2x32x64xbf16, #tpu.memory_space<vmem>>, vector<2x16x64xbf16>
    tpu.vector_store %arg34[%c0_285, %c8_286, %c0_287], %292 {strides = array<i32>} : memref<2x32x64xbf16, #tpu.memory_space<vmem>>, vector<2x16x64xbf16>,
    %c0_288 = arith.constant 0 : index
    %c7_289 = arith.constant 7 : index
    %c0_290 = arith.constant 0 : index
    %294 = vector.load %arg34[%c0_288, %c7_289, %c0_290] : memref<2x32x64xbf16, #tpu.memory_space<vmem>>, vector<2x16x64xbf16>
    %c0_291 = arith.constant 0 : index
    %c8_292 = arith.constant 8 : index
    %c0_293 = arith.constant 0 : index
    %295 = vector.load %arg34[%c0_291, %c8_292, %c0_293] : memref<2x32x64xbf16, #tpu.memory_space<vmem>>, vector<2x16x64xbf16>
    %c0_294 = arith.constant 0 : index
    %c9_295 = arith.constant 9 : index
    %c0_296 = arith.constant 0 : index
    %296 = vector.load %arg34[%c0_294, %c9_295, %c0_296] : memref<2x32x64xbf16, #tpu.memory_space<vmem>>, vector<2x16x64xbf16>
    %297 = vector.shape_cast %294 : vector<2x16x64xbf16> to vector<32x64xbf16>
    %c0_297 = arith.constant 0 : index
    %c0_298 = arith.constant 0 : index
    %c0_299 = arith.constant 0 : index
    %298 = vector.load %arg23[%c0_297, %c0_298, %c0_299] : memref<3x64x64xbf16, #tpu.memory_space<vmem>>, vector<1x64x64xbf16>
    %299 = vector.shape_cast %298 : vector<1x64x64xbf16> to vector<64x64xbf16>
    %cst_300 = arith.constant dense<0.000000e+00> : vector<32x64xf32>
    %300 = tpu.matmul %297, %299, %cst_300 {dimension_numbers = #tpu.dot_dimension_numbers<[1], [0], [0], [1], [0, 0, 1, 1], [], []>} : vector<32x64xbf16>, vector<64x64xbf16>, vector<32x64xf32> -> vector<32x64xf32>
    %301 = vector.shape_cast %295 : vector<2x16x64xbf16> to vector<32x64xbf16>
    %c1_301 = arith.constant 1 : index
    %c0_302 = arith.constant 0 : index
    %c0_303 = arith.constant 0 : index
    %302 = vector.load %arg23[%c1_301, %c0_302, %c0_303] : memref<3x64x64xbf16, #tpu.memory_space<vmem>>, vector<1x64x64xbf16>
    %303 = vector.shape_cast %302 : vector<1x64x64xbf16> to vector<64x64xbf16>
    %cst_304 = arith.constant dense<0.000000e+00> : vector<32x64xf32>
    %304 = tpu.matmul %301, %303, %cst_304 {dimension_numbers = #tpu.dot_dimension_numbers<[1], [0], [0], [1], [0, 0, 1, 1], [], []>} : vector<32x64xbf16>, vector<64x64xbf16>, vector<32x64xf32> -> vector<32x64xf32>
    %305 = arith.addf %300, %304 : vector<32x64xf32>
    %306 = vector.shape_cast %296 : vector<2x16x64xbf16> to vector<32x64xbf16>
    %c2_305 = arith.constant 2 : index
    %c0_306 = arith.constant 0 : index
    %c0_307 = arith.constant 0 : index
    %307 = vector.load %arg23[%c2_305, %c0_306, %c0_307] : memref<3x64x64xbf16, #tpu.memory_space<vmem>>, vector<1x64x64xbf16>
    %308 = vector.shape_cast %307 : vector<1x64x64xbf16> to vector<64x64xbf16>
    %cst_308 = arith.constant dense<0.000000e+00> : vector<32x64xf32>
    %309 = tpu.matmul %306, %308, %cst_308 {dimension_numbers = #tpu.dot_dimension_numbers<[1], [0], [0], [1], [0, 0, 1, 1], [], []>} : vector<32x64xbf16>, vector<64x64xbf16>, vector<32x64xf32> -> vector<32x64xf32>
    %310 = arith.addf %305, %309 : vector<32x64xf32>
    %c0_309 = arith.constant 0 : index
    %c0_310 = arith.constant 0 : index
    %311 = vector.load %arg24[%c0_309, %c0_310] : memref<1x64xf32, #tpu.memory_space<vmem>>, vector<1x64xf32>
    %312 = vector.broadcast %311 : vector<1x64xf32> to vector<32x64xf32>
    %313 = arith.addf %310, %312 : vector<32x64xf32>
    %314 = arith.addf %313, %290 : vector<32x64xf32>
    %cst_311 = arith.constant 0.000000e+00 : f32
    %315 = vector.broadcast %cst_311 : f32 to vector<32x64xf32>
    %316 = arith.maximumf %314, %315 : vector<32x64xf32>
    %317 = vector.shape_cast %316 : vector<32x64xf32> to vector<2x16x64xf32>
    %318 = arith.truncf %317 : vector<2x16x64xf32> to vector<2x16x64xbf16>
    %c0_312 = arith.constant 0 : index
    %c8_313 = arith.constant 8 : index
    %c0_314 = arith.constant 0 : index
    %319 = vector.load %arg34[%c0_312, %c8_313, %c0_314] : memref<2x32x64xbf16, #tpu.memory_space<vmem>>, vector<2x16x64xbf16>
    tpu.vector_store %arg34[%c0_312, %c8_313, %c0_314], %318 {strides = array<i32>} : memref<2x32x64xbf16, #tpu.memory_space<vmem>>, vector<2x16x64xbf16>,
    %c0_315 = arith.constant 0 : index
    %c7_316 = arith.constant 7 : index
    %c0_317 = arith.constant 0 : index
    %320 = vector.load %arg34[%c0_315, %c7_316, %c0_317] : memref<2x32x64xbf16, #tpu.memory_space<vmem>>, vector<2x16x64xbf16>
    %c0_318 = arith.constant 0 : index
    %c8_319 = arith.constant 8 : index
    %c0_320 = arith.constant 0 : index
    %321 = vector.load %arg34[%c0_318, %c8_319, %c0_320] : memref<2x32x64xbf16, #tpu.memory_space<vmem>>, vector<2x16x64xbf16>
    %c0_321 = arith.constant 0 : index
    %c9_322 = arith.constant 9 : index
    %c0_323 = arith.constant 0 : index
    %322 = vector.load %arg34[%c0_321, %c9_322, %c0_323] : memref<2x32x64xbf16, #tpu.memory_space<vmem>>, vector<2x16x64xbf16>
    %323 = vector.shape_cast %320 : vector<2x16x64xbf16> to vector<32x64xbf16>
    %c0_324 = arith.constant 0 : index
    %c0_325 = arith.constant 0 : index
    %c0_326 = arith.constant 0 : index
    %324 = vector.load %arg27[%c0_324, %c0_325, %c0_326] : memref<3x64x64xbf16, #tpu.memory_space<vmem>>, vector<1x64x64xbf16>
    %325 = vector.shape_cast %324 : vector<1x64x64xbf16> to vector<64x64xbf16>
    %cst_327 = arith.constant dense<0.000000e+00> : vector<32x64xf32>
    %326 = tpu.matmul %323, %325, %cst_327 {dimension_numbers = #tpu.dot_dimension_numbers<[1], [0], [0], [1], [0, 0, 1, 1], [], []>} : vector<32x64xbf16>, vector<64x64xbf16>, vector<32x64xf32> -> vector<32x64xf32>
    %327 = vector.shape_cast %321 : vector<2x16x64xbf16> to vector<32x64xbf16>
    %c1_328 = arith.constant 1 : index
    %c0_329 = arith.constant 0 : index
    %c0_330 = arith.constant 0 : index
    %328 = vector.load %arg27[%c1_328, %c0_329, %c0_330] : memref<3x64x64xbf16, #tpu.memory_space<vmem>>, vector<1x64x64xbf16>
    %329 = vector.shape_cast %328 : vector<1x64x64xbf16> to vector<64x64xbf16>
    %cst_331 = arith.constant dense<0.000000e+00> : vector<32x64xf32>
    %330 = tpu.matmul %327, %329, %cst_331 {dimension_numbers = #tpu.dot_dimension_numbers<[1], [0], [0], [1], [0, 0, 1, 1], [], []>} : vector<32x64xbf16>, vector<64x64xbf16>, vector<32x64xf32> -> vector<32x64xf32>
    %331 = arith.addf %326, %330 : vector<32x64xf32>
    %332 = vector.shape_cast %322 : vector<2x16x64xbf16> to vector<32x64xbf16>
    %c2_332 = arith.constant 2 : index
    %c0_333 = arith.constant 0 : index
    %c0_334 = arith.constant 0 : index
    %333 = vector.load %arg27[%c2_332, %c0_333, %c0_334] : memref<3x64x64xbf16, #tpu.memory_space<vmem>>, vector<1x64x64xbf16>
    %334 = vector.shape_cast %333 : vector<1x64x64xbf16> to vector<64x64xbf16>
    %cst_335 = arith.constant dense<0.000000e+00> : vector<32x64xf32>
    %335 = tpu.matmul %332, %334, %cst_335 {dimension_numbers = #tpu.dot_dimension_numbers<[1], [0], [0], [1], [0, 0, 1, 1], [], []>} : vector<32x64xbf16>, vector<64x64xbf16>, vector<32x64xf32> -> vector<32x64xf32>
    %336 = arith.addf %331, %335 : vector<32x64xf32>
    %c0_336 = arith.constant 0 : index
    %c0_337 = arith.constant 0 : index
    %337 = vector.load %arg28[%c0_336, %c0_337] : memref<1x64xf32, #tpu.memory_space<vmem>>, vector<1x64xf32>
    %338 = vector.broadcast %337 : vector<1x64xf32> to vector<32x64xf32>
    %339 = arith.addf %336, %338 : vector<32x64xf32>
    %cst_338 = arith.constant 0.000000e+00 : f32
    %340 = vector.broadcast %cst_338 : f32 to vector<32x64xf32>
    %341 = arith.maximumf %339, %340 : vector<32x64xf32>
    %c0_339 = arith.constant 0 : index
    %c8_340 = arith.constant 8 : index
    %c0_341 = arith.constant 0 : index
    %342 = vector.load %arg34[%c0_339, %c8_340, %c0_341] : memref<2x32x64xbf16, #tpu.memory_space<vmem>>, vector<2x16x64xbf16>
    %343 = vector.shape_cast %342 : vector<2x16x64xbf16> to vector<32x64xbf16>
    %344 = arith.extf %343 : vector<32x64xbf16> to vector<32x64xf32>
    %345 = vector.shape_cast %341 : vector<32x64xf32> to vector<2x16x64xf32>
    %346 = arith.truncf %345 : vector<2x16x64xf32> to vector<2x16x64xbf16>
    %c0_342 = arith.constant 0 : index
    %c8_343 = arith.constant 8 : index
    %c0_344 = arith.constant 0 : index
    %347 = vector.load %arg34[%c0_342, %c8_343, %c0_344] : memref<2x32x64xbf16, #tpu.memory_space<vmem>>, vector<2x16x64xbf16>
    tpu.vector_store %arg34[%c0_342, %c8_343, %c0_344], %346 {strides = array<i32>} : memref<2x32x64xbf16, #tpu.memory_space<vmem>>, vector<2x16x64xbf16>,
    %c0_345 = arith.constant 0 : index
    %c7_346 = arith.constant 7 : index
    %c0_347 = arith.constant 0 : index
    %348 = vector.load %arg34[%c0_345, %c7_346, %c0_347] : memref<2x32x64xbf16, #tpu.memory_space<vmem>>, vector<2x16x64xbf16>
    %c0_348 = arith.constant 0 : index
    %c8_349 = arith.constant 8 : index
    %c0_350 = arith.constant 0 : index
    %349 = vector.load %arg34[%c0_348, %c8_349, %c0_350] : memref<2x32x64xbf16, #tpu.memory_space<vmem>>, vector<2x16x64xbf16>
    %c0_351 = arith.constant 0 : index
    %c9_352 = arith.constant 9 : index
    %c0_353 = arith.constant 0 : index
    %350 = vector.load %arg34[%c0_351, %c9_352, %c0_353] : memref<2x32x64xbf16, #tpu.memory_space<vmem>>, vector<2x16x64xbf16>
    %351 = vector.shape_cast %348 : vector<2x16x64xbf16> to vector<32x64xbf16>
    %c0_354 = arith.constant 0 : index
    %c0_355 = arith.constant 0 : index
    %c0_356 = arith.constant 0 : index
    %352 = vector.load %arg29[%c0_354, %c0_355, %c0_356] : memref<3x64x64xbf16, #tpu.memory_space<vmem>>, vector<1x64x64xbf16>
    %353 = vector.shape_cast %352 : vector<1x64x64xbf16> to vector<64x64xbf16>
    %cst_357 = arith.constant dense<0.000000e+00> : vector<32x64xf32>
    %354 = tpu.matmul %351, %353, %cst_357 {dimension_numbers = #tpu.dot_dimension_numbers<[1], [0], [0], [1], [0, 0, 1, 1], [], []>} : vector<32x64xbf16>, vector<64x64xbf16>, vector<32x64xf32> -> vector<32x64xf32>
    %355 = vector.shape_cast %349 : vector<2x16x64xbf16> to vector<32x64xbf16>
    %c1_358 = arith.constant 1 : index
    %c0_359 = arith.constant 0 : index
    %c0_360 = arith.constant 0 : index
    %356 = vector.load %arg29[%c1_358, %c0_359, %c0_360] : memref<3x64x64xbf16, #tpu.memory_space<vmem>>, vector<1x64x64xbf16>
    %357 = vector.shape_cast %356 : vector<1x64x64xbf16> to vector<64x64xbf16>
    %cst_361 = arith.constant dense<0.000000e+00> : vector<32x64xf32>
    %358 = tpu.matmul %355, %357, %cst_361 {dimension_numbers = #tpu.dot_dimension_numbers<[1], [0], [0], [1], [0, 0, 1, 1], [], []>} : vector<32x64xbf16>, vector<64x64xbf16>, vector<32x64xf32> -> vector<32x64xf32>
    %359 = arith.addf %354, %358 : vector<32x64xf32>
    %360 = vector.shape_cast %350 : vector<2x16x64xbf16> to vector<32x64xbf16>
    %c2_362 = arith.constant 2 : index
    %c0_363 = arith.constant 0 : index
    %c0_364 = arith.constant 0 : index
    %361 = vector.load %arg29[%c2_362, %c0_363, %c0_364] : memref<3x64x64xbf16, #tpu.memory_space<vmem>>, vector<1x64x64xbf16>
    %362 = vector.shape_cast %361 : vector<1x64x64xbf16> to vector<64x64xbf16>
    %cst_365 = arith.constant dense<0.000000e+00> : vector<32x64xf32>
    %363 = tpu.matmul %360, %362, %cst_365 {dimension_numbers = #tpu.dot_dimension_numbers<[1], [0], [0], [1], [0, 0, 1, 1], [], []>} : vector<32x64xbf16>, vector<64x64xbf16>, vector<32x64xf32> -> vector<32x64xf32>
    %364 = arith.addf %359, %363 : vector<32x64xf32>
    %c0_366 = arith.constant 0 : index
    %c0_367 = arith.constant 0 : index
    %365 = vector.load %arg30[%c0_366, %c0_367] : memref<1x64xf32, #tpu.memory_space<vmem>>, vector<1x64xf32>
    %366 = vector.broadcast %365 : vector<1x64xf32> to vector<32x64xf32>
    %367 = arith.addf %364, %366 : vector<32x64xf32>
    %368 = arith.addf %367, %344 : vector<32x64xf32>
    %cst_368 = arith.constant 0.000000e+00 : f32
    %369 = vector.broadcast %cst_368 : f32 to vector<32x64xf32>
    %370 = arith.maximumf %368, %369 : vector<32x64xf32>
    %371 = vector.shape_cast %370 : vector<32x64xf32> to vector<2x16x64xf32>
    %372 = arith.truncf %371 : vector<2x16x64xf32> to vector<2x16x64xbf16>
    %c0_369 = arith.constant 0 : index
    %c8_370 = arith.constant 8 : index
    %c0_371 = arith.constant 0 : index
    %373 = vector.load %arg34[%c0_369, %c8_370, %c0_371] : memref<2x32x64xbf16, #tpu.memory_space<vmem>>, vector<2x16x64xbf16>
    tpu.vector_store %arg34[%c0_369, %c8_370, %c0_371], %372 {strides = array<i32>} : memref<2x32x64xbf16, #tpu.memory_space<vmem>>, vector<2x16x64xbf16>,
    %374 = vector.shape_cast %370 : vector<32x64xf32> to vector<2x16x64xf32>
    %cst_372 = arith.constant dense<0.000000e+00> : vector<2x64xf32>
    %375 = vector.multi_reduction <add>, %374, %cst_372 [1] : vector<2x16x64xf32> to vector<2x64xf32>
    %c0_373 = arith.constant 0 : index
    %c0_374 = arith.constant 0 : index
    %376 = vector.load %arg31[%c0_373, %c0_374] : memref<1x64xf32, #tpu.memory_space<vmem>>, vector<1x64xf32>
    %377 = vector.broadcast %376 : vector<1x64xf32> to vector<2x64xf32>
    %378 = arith.mulf %375, %377 : vector<2x64xf32>
    %cst_375 = arith.constant dense<0.000000e+00> : vector<2xf32>
    %379 = vector.multi_reduction <add>, %378, %cst_375 [1] : vector<2x64xf32> to vector<2xf32>
    %380 = vector.shape_cast %379 : vector<2xf32> to vector<2x1xf32>
    %c0_376 = arith.constant 0 : index
    %c0_377 = arith.constant 0 : index
    %381 = vector.load %arg32[%c0_376, %c0_377] : memref<1x1xf32, #tpu.memory_space<vmem>>, vector<1x1xf32>
    %382 = vector.broadcast %381 : vector<1x1xf32> to vector<2x1xf32>
    %383 = arith.addf %380, %382 : vector<2x1xf32>
    %c0_378 = arith.constant 0 : index
    %c0_379 = arith.constant 0 : index
    %384 = vector.load %arg33[%c0_378, %c0_379] : memref<2x1xf32, #tpu.memory_space<vmem>>, vector<2x1xf32>
    tpu.vector_store %arg33[%c0_378, %c0_379], %383 {strides = array<i32>} : memref<2x1xf32, #tpu.memory_space<vmem>>, vector<2x1xf32>,
    return
  }
}

</mosaic_0001>

<llo_original>
// kernel: resnet_forward.1
$region0: #{resnet_forward.1}
  #allocation0 [shape = 'u32[]', space=smem, size = 0x4, offset = 0x4, fixed_abs, tag = 'smem constant byte address 0x4 - core index']
  #allocation1 [shape = 'u32[144,128]{1,0:T(1,128)}', space=vmem, size = 0x12000, scoped, tag = 'internal scratch']
  #allocation2 [shape = 'bf16[2,32,64]{2,1,0:T(8,128)(2,1)}', space=vmem, size = 0x4000, scoped, tag = 'scratch operand']
  #allocation3 [shape = 'f32[1,1]{1,0:T(1,128)S(1)}', space=vmem, size = 0x200, scoped, tag = 'scoped memory for resnet_forward.1']
  %s0 = inlined_call_operand.smem [shape: u32[34], index: -1, kind: input, shape index: {}]
  %s1 = sld [smem:[%s0]]
  %s2 = scalar_lea.smem %s0, 1
  %s3 = sld [smem:[%s2]]
  %s4 = scalar_lea.smem %s0, 2
  %s5 = sld [smem:[%s4]]
  %s6 = scalar_lea.smem %s0, 3
  %s7 = sld [smem:[%s6]]
  %s8 = scalar_lea.smem %s0, 4
  %s9 = sld [smem:[%s8]]
  %s10 = scalar_lea.smem %s0, 5
  %s11 = sld [smem:[%s10]]
  %s12 = scalar_lea.smem %s0, 6
  %s13 = sld [smem:[%s12]]
  %s14 = scalar_lea.smem %s0, 7
  %s15 = sld [smem:[%s14]]
  %s16 = scalar_lea.smem %s0, 8
  %s17 = sld [smem:[%s16]]
  %s18 = scalar_lea.smem %s0, 9
  %s19 = sld [smem:[%s18]]
  %s20 = scalar_lea.smem %s0, 10
  %s21 = sld [smem:[%s20]]
  %s22 = scalar_lea.smem %s0, 11
  %s23 = sld [smem:[%s22]]
  %s24 = scalar_lea.smem %s0, 12
  %s25 = sld [smem:[%s24]]
  %s26 = scalar_lea.smem %s0, 13
  %s27 = sld [smem:[%s26]]
  %s28 = scalar_lea.smem %s0, 14
  %s29 = sld [smem:[%s28]]
  %s30 = scalar_lea.smem %s0, 15
  %s31 = sld [smem:[%s30]]
  %s32 = scalar_lea.smem %s0, 16
  %s33 = sld [smem:[%s32]]
  %s34 = scalar_lea.smem %s0, 17
  %s35 = sld [smem:[%s34]]
  %s36 = scalar_lea.smem %s0, 18
  %s37 = sld [smem:[%s36]]
  %s38 = scalar_lea.smem %s0, 19
  %s39 = sld [smem:[%s38]]
  %s40 = scalar_lea.smem %s0, 20
  %s41 = sld [smem:[%s40]]
  %s42 = scalar_lea.smem %s0, 21
  %s43 = sld [smem:[%s42]]
  %s44 = scalar_lea.smem %s0, 22
  %s45 = sld [smem:[%s44]]
  %s46 = scalar_lea.smem %s0, 23
  %s47 = sld [smem:[%s46]]
  %s48 = scalar_lea.smem %s0, 24
  %s49 = sld [smem:[%s48]]
  %s50 = scalar_lea.smem %s0, 25
  %s51 = sld [smem:[%s50]]
  %s52 = scalar_lea.smem %s0, 26
  %s53 = sld [smem:[%s52]]
  %s54 = scalar_lea.smem %s0, 27
  %s55 = sld [smem:[%s54]]
  %s56 = scalar_lea.smem %s0, 28
  %s57 = sld [smem:[%s56]]
  %s58 = scalar_lea.smem %s0, 29
  %s59 = sld [smem:[%s58]]
  %s60 = scalar_lea.smem %s0, 30
  %s61 = sld [smem:[%s60]]
  %s62 = scalar_lea.smem %s0, 31
  %s63 = sld [smem:[%s62]]
  %s64 = scalar_lea.smem %s0, 32
  %s65 = sld [smem:[%s64]]
  %s66 = scalar_lea.smem %s0, 33
  %s67 = sld [smem:[%s66]]
  %s68 = sld [smem:[#allocation0]]
  $region142: #{resnet_forward.1} parent=0
    _
  %s70 = ssub.s32 1, %s68
  %s71 = scalar_select 0, %s70, %s68
  %v72 = vstv %s65
  %73 = vst [vmem:[#allocation3] sm:$0x1] %v72
  // Predicated region
  $region2: #{resnet_forward.1} parent=0 // pred_check
    _
  $region3: #{resnet_forward.1} parent=0 // pred_check_branch
    %75 = sbr.rel (0) target = $region5
  $region4: #{resnet_forward.1} parent=0 // pred_region
    _
  $region5: #{resnet_forward.1} parent=0 // pred_fallthru
    _
  // Predicated region
  $region6: #{resnet_forward.1} parent=0 // pred_check
    _
  $region7: #{resnet_forward.1} parent=0 // pred_check_branch
    %77 = sbr.rel (0) target = $region9
  $region8: #{resnet_forward.1} parent=0 // pred_region
    _
  $region9: #{resnet_forward.1} parent=0 // pred_fallthru
    _
  // Predicated region
  $region10: #{resnet_forward.1} parent=0 // pred_check
    _
  $region11: #{resnet_forward.1} parent=0 // pred_check_branch
    %79 = sbr.rel (0) target = $region13
  $region12: #{resnet_forward.1} parent=0 // pred_region
    _
  $region13: #{resnet_forward.1} parent=0 // pred_fallthru
    _
  // Predicated region
  $region14: #{resnet_forward.1} parent=0 // pred_check
    _
  $region15: #{resnet_forward.1} parent=0 // pred_check_branch
    %81 = sbr.rel (0) target = $region17
  $region16: #{resnet_forward.1} parent=0 // pred_region
    _
  $region17: #{resnet_forward.1} parent=0 // pred_fallthru
    _
  // Predicated region
  $region18: #{resnet_forward.1} parent=0 // pred_check
    _
  $region19: #{resnet_forward.1} parent=0 // pred_check_branch
    %83 = sbr.rel (0) target = $region21
  $region20: #{resnet_forward.1} parent=0 // pred_region
    _
  $region21: #{resnet_forward.1} parent=0 // pred_fallthru
    _
  // Predicated region
  $region22: #{resnet_forward.1} parent=0 // pred_check
    _
  $region23: #{resnet_forward.1} parent=0 // pred_check_branch
    %85 = sbr.rel (0) target = $region25
  $region24: #{resnet_forward.1} parent=0 // pred_region
    _
  $region25: #{resnet_forward.1} parent=0 // pred_fallthru
    _
  // Predicated region
  $region26: #{resnet_forward.1} parent=0 // pred_check
    _
  $region27: #{resnet_forward.1} parent=0 // pred_check_branch
    %87 = sbr.rel (0) target = $region29
  $region28: #{resnet_forward.1} parent=0 // pred_region
    _
  $region29: #{resnet_forward.1} parent=0 // pred_fallthru
    _
  // Predicated region
  $region30: #{resnet_forward.1} parent=0 // pred_check
    _
  $region31: #{resnet_forward.1} parent=0 // pred_check_branch
    %89 = sbr.rel (0) target = $region33
  $region32: #{resnet_forward.1} parent=0 // pred_region
    _
  $region33: #{resnet_forward.1} parent=0 // pred_fallthru
    _
  // Predicated region
  $region34: #{resnet_forward.1} parent=0 // pred_check
    _
  $region35: #{resnet_forward.1} parent=0 // pred_check_branch
    %91 = sbr.rel (0) target = $region37
  $region36: #{resnet_forward.1} parent=0 // pred_region
    _
  $region37: #{resnet_forward.1} parent=0 // pred_fallthru
    _
  // Predicated region
  $region38: #{resnet_forward.1} parent=0 // pred_check
    _
  $region39: #{resnet_forward.1} parent=0 // pred_check_branch
    %93 = sbr.rel (0) target = $region41
  $region40: #{resnet_forward.1} parent=0 // pred_region
    _
  $region41: #{resnet_forward.1} parent=0 // pred_fallthru
    _
  // Predicated region
  $region42: #{resnet_forward.1} parent=0 // pred_check
    _
  $region43: #{resnet_forward.1} parent=0 // pred_check_branch
    %95 = sbr.rel (0) target = $region45
  $region44: #{resnet_forward.1} parent=0 // pred_region
    _
  $region45: #{resnet_forward.1} parent=0 // pred_fallthru
    _
  // Predicated region
  $region46: #{resnet_forward.1} parent=0 // pred_check
    _
  $region47: #{resnet_forward.1} parent=0 // pred_check_branch
    %97 = sbr.rel (0) target = $region49
  $region48: #{resnet_forward.1} parent=0 // pred_region
    _
  $region49: #{resnet_forward.1} parent=0 // pred_fallthru
    _
  // Predicated region
  $region50: #{resnet_forward.1} parent=0 // pred_check
    _
  $region51: #{resnet_forward.1} parent=0 // pred_check_branch
    %99 = sbr.rel (0) target = $region53
  $region52: #{resnet_forward.1} parent=0 // pred_region
    _
  $region53: #{resnet_forward.1} parent=0 // pred_fallthru
    _
  // Predicated region
  $region54: #{resnet_forward.1} parent=0 // pred_check
    _
  $region55: #{resnet_forward.1} parent=0 // pred_check_branch
    %101 = sbr.rel (0) target = $region57
  $region56: #{resnet_forward.1} parent=0 // pred_region
    _
  $region57: #{resnet_forward.1} parent=0 // pred_fallthru
    _
  // Predicated region
  $region58: #{resnet_forward.1} parent=0 // pred_check
    _
  $region59: #{resnet_forward.1} parent=0 // pred_check_branch
    %103 = sbr.rel (0) target = $region61
  $region60: #{resnet_forward.1} parent=0 // pred_region
    _
  $region61: #{resnet_forward.1} parent=0 // pred_fallthru
    _
  // Predicated region
  $region62: #{resnet_forward.1} parent=0 // pred_check
    _
  $region63: #{resnet_forward.1} parent=0 // pred_check_branch
    %105 = sbr.rel (0) target = $region65
  $region64: #{resnet_forward.1} parent=0 // pred_region
    _
  $region65: #{resnet_forward.1} parent=0 // pred_fallthru
    _
  // Predicated region
  $region66: #{resnet_forward.1} parent=0 // pred_check
    _
  $region67: #{resnet_forward.1} parent=0 // pred_check_branch
    %107 = sbr.rel (0) target = $region69
  $region68: #{resnet_forward.1} parent=0 // pred_region
    _
  $region69: #{resnet_forward.1} parent=0 // pred_fallthru
    _
  // Predicated region
  $region70: #{resnet_forward.1} parent=0 // pred_check
    _
  $region71: #{resnet_forward.1} parent=0 // pred_check_branch
    %109 = sbr.rel (0) target = $region73
  $region72: #{resnet_forward.1} parent=0 // pred_region
    _
  $region73: #{resnet_forward.1} parent=0 // pred_fallthru
    _
  // Predicated region
  $region74: #{resnet_forward.1} parent=0 // pred_check
    _
  $region75: #{resnet_forward.1} parent=0 // pred_check_branch
    %111 = sbr.rel (0) target = $region77
  $region76: #{resnet_forward.1} parent=0 // pred_region
    _
  $region77: #{resnet_forward.1} parent=0 // pred_fallthru
    _
  // Predicated region
  $region78: #{resnet_forward.1} parent=0 // pred_check
    _
  $region79: #{resnet_forward.1} parent=0 // pred_check_branch
    %113 = sbr.rel (0) target = $region81
  $region80: #{resnet_forward.1} parent=0 // pred_region
    _
  $region81: #{resnet_forward.1} parent=0 // pred_fallthru
    _
  // Predicated region
  $region82: #{resnet_forward.1} parent=0 // pred_check
    _
  $region83: #{resnet_forward.1} parent=0 // pred_check_branch
    %115 = sbr.rel (0) target = $region85
  $region84: #{resnet_forward.1} parent=0 // pred_region
    _
  $region85: #{resnet_forward.1} parent=0 // pred_fallthru
    _
  // Predicated region
  $region86: #{resnet_forward.1} parent=0 // pred_check
    _
  $region87: #{resnet_forward.1} parent=0 // pred_check_branch
    %117 = sbr.rel (0) target = $region89
  $region88: #{resnet_forward.1} parent=0 // pred_region
    _
  $region89: #{resnet_forward.1} parent=0 // pred_fallthru
    _
  // Predicated region
  $region90: #{resnet_forward.1} parent=0 // pred_check
    _
  $region91: #{resnet_forward.1} parent=0 // pred_check_branch
    %119 = sbr.rel (0) target = $region93
  $region92: #{resnet_forward.1} parent=0 // pred_region
    _
  $region93: #{resnet_forward.1} parent=0 // pred_fallthru
    _
  // Predicated region
  $region94: #{resnet_forward.1} parent=0 // pred_check
    _
  $region95: #{resnet_forward.1} parent=0 // pred_check_branch
    %121 = sbr.rel (0) target = $region97
  $region96: #{resnet_forward.1} parent=0 // pred_region
    _
  $region97: #{resnet_forward.1} parent=0 // pred_fallthru
    _
  // Predicated region
  $region98: #{resnet_forward.1} parent=0 // pred_check
    _
  $region99: #{resnet_forward.1} parent=0 // pred_check_branch
    %123 = sbr.rel (0) target = $region101
  $region100: #{resnet_forward.1} parent=0 // pred_region
    _
  $region101: #{resnet_forward.1} parent=0 // pred_fallthru
    _
  // Predicated region
  $region102: #{resnet_forward.1} parent=0 // pred_check
    _
  $region103: #{resnet_forward.1} parent=0 // pred_check_branch
    %125 = sbr.rel (0) target = $region105
  $region104: #{resnet_forward.1} parent=0 // pred_region
    _
  $region105: #{resnet_forward.1} parent=0 // pred_fallthru
    _
  // Predicated region
  $region106: #{resnet_forward.1} parent=0 // pred_check
    _
  $region107: #{resnet_forward.1} parent=0 // pred_check_branch
    %127 = sbr.rel (0) target = $region109
  $region108: #{resnet_forward.1} parent=0 // pred_region
    _
  $region109: #{resnet_forward.1} parent=0 // pred_fallthru
    _
  // Predicated region
  $region110: #{resnet_forward.1} parent=0 // pred_check
    _
  $region111: #{resnet_forward.1} parent=0 // pred_check_branch
    %129 = sbr.rel (0) target = $region113
  $region112: #{resnet_forward.1} parent=0 // pred_region
    _
  $region113: #{resnet_forward.1} parent=0 // pred_fallthru
    _
  // Predicated region
  $region114: #{resnet_forward.1} parent=0 // pred_check
    _
  $region115: #{resnet_forward.1} parent=0 // pred_check_branch
    %131 = sbr.rel (0) target = $region117
  $region116: #{resnet_forward.1} parent=0 // pred_region
    _
  $region117: #{resnet_forward.1} parent=0 // pred_fallthru
    _
  // Predicated region
  $region118: #{resnet_forward.1} parent=0 // pred_check
    _
  $region119: #{resnet_forward.1} parent=0 // pred_check_branch
    %133 = sbr.rel (0) target = $region121
  $region120: #{resnet_forward.1} parent=0 // pred_region
    _
  $region121: #{resnet_forward.1} parent=0 // pred_fallthru
    _
  // Predicated region
  $region122: #{resnet_forward.1} parent=0 // pred_check
    _
  $region123: #{resnet_forward.1} parent=0 // pred_check_branch
    %135 = sbr.rel (0) target = $region125
  $region124: #{resnet_forward.1} parent=0 // pred_region
    _
  $region125: #{resnet_forward.1} parent=0 // pred_fallthru
    _
  // Predicated region
  $region126: #{resnet_forward.1} parent=0 // pred_check
    _
  $region127: #{resnet_forward.1} parent=0 // pred_check_branch
    %137 = sbr.rel (0) target = $region129
  $region128: #{resnet_forward.1} parent=0 // pred_region
    _
  $region129: #{resnet_forward.1} parent=0 // pred_fallthru
    _
  // Predicated region
  $region130: #{resnet_forward.1} parent=0 // pred_check
    _
  $region131: #{resnet_forward.1} parent=0 // pred_check_branch
    %139 = sbr.rel (0) target = $region133
  $region132: #{resnet_forward.1} parent=0 // pred_region
    _
  $region133: #{resnet_forward.1} parent=0 // pred_fallthru
    _
  %vm141 = vcmask 519168
  %142 = vst.msk [vmem:[#allocation2] sm:$0xf] %vm141, 0
  %143 = vst.msk [vmem:[#allocation2 + $0x4] sm:$0xf] %vm141, 0
  %144 = vst.msk [vmem:[#allocation2 + $0x8] sm:$0xf] %vm141, 0
  %145 = vst.msk [vmem:[#allocation2 + $0xc] sm:$0xf] %vm141, 0
  %146 = vst.msk [vmem:[#allocation2 + $0x10] sm:$0xf] %vm141, 0
  %147 = vst.msk [vmem:[#allocation2 + $0x14] sm:$0xf] %vm141, 0
  %148 = vst.msk [vmem:[#allocation2 + $0x18] sm:$0xf] %vm141, 0
  %149 = vst.msk [vmem:[#allocation2 + $0x1c] sm:$0xf] %vm141, 0
  %v150 = vld [vmem:[%s1] sm:$0xff]
  %v151 = vld [vmem:[%s1 + $0x8] sm:$0xff]
  %v152 = vld [vmem:[%s1 + $0x10] sm:$0xff]
  %v153 = vld [vmem:[%s1 + $0x18] sm:$0xff]
  %v154 = vpack.c.bf16 %v151, %v150
  %v155 = vpack.c.bf16 %v153, %v152
  %v158 = vunpack.c.l.b16 %v154
  %v159 = vunpack.c.h.b16 %v154
  %v160 = vunpack.c.l.b16 %v155
  %v161 = vunpack.c.h.b16 %v155
  %v162 = vpack.c.b16 %v158, %v158
  %v163 = vpack.c.b16 %v159, %v159
  %v164 = vpack.c.b16 %v160, %v160
  %v165 = vpack.c.b16 %v161, %v161
  %vm170 = vcmask 3072
  %171 = vst.msk [vmem:[#allocation2 + $0x4] sm:$0xf] %vm170, %v162
  %172 = vst.msk [vmem:[#allocation2 + $0x8] sm:$0xf] %vm170, %v163
  %173 = vst.msk [vmem:[#allocation2 + $0x14] sm:$0xf] %vm170, %v164
  %174 = vst.msk [vmem:[#allocation2 + $0x18] sm:$0xf] %vm170, %v165
  %v175 = vld [vmem:[#allocation2] sm:$0x8]
  %v176 = vld [vmem:[#allocation2 + $0x4] sm:$0xf]
  %v177 = vld [vmem:[#allocation2 + $0x8] sm:$0xf]
  %v178 = vld [vmem:[#allocation2 + $0x10] sm:$0x8]
  %v179 = vld [vmem:[#allocation2 + $0x14] sm:$0xf]
  %v180 = vld [vmem:[#allocation2 + $0x18] sm:$0xf]
  %v181 = vld [vmem:[#allocation2 + $0xc] sm:$0x1]
  %v182 = vld [vmem:[#allocation2 + $0x1c] sm:$0x1]
  %v183 = vld [vmem:[%s3] sm:$0x7]
  %v184 = vunpack.c.l.bf16 %v175
  %v185 = vunpack.c.l.bf16 %v176
  %v186 = vunpack.c.l.bf16 %v177
  %v187 = vunpack.c.l.bf16 %v178
  %v188 = vunpack.c.l.bf16 %v179
  %v189 = vunpack.c.l.bf16 %v180
  %191 = vset.pattern.permute.xlu0 0
  %192 = vperm.xlu0 %191, %v184
  %v193 = vpop.permute.xlu0 %192
  %196 = vset.pattern.permute.xlu0 0
  %197 = vperm.xlu0 %196, %v185
  %v198 = vpop.permute.xlu0 %197
  %201 = vset.pattern.permute.xlu0 0
  %202 = vperm.xlu0 %201, %v186
  %v203 = vpop.permute.xlu0 %202
  %206 = vset.pattern.permute.xlu0 0
  %207 = vperm.xlu0 %206, %v187
  %v208 = vpop.permute.xlu0 %207
  %211 = vset.pattern.permute.xlu0 0
  %212 = vperm.xlu0 %211, %v188
  %v213 = vpop.permute.xlu0 %212
  %216 = vset.pattern.permute.xlu0 0
  %217 = vperm.xlu0 %216, %v189
  %v218 = vpop.permute.xlu0 %217
  %v220 = vlaneseq
  %v221 = vshrl.u32 %v220, 7
  %v222 = vsub.s32 0, %v221
  %v223 = vrot.slane %v183, %v222
  %v224 = vmul.f32 %v193, %v223
  %v225 = vmul.f32 %v198, %v223
  %v226 = vmul.f32 %v203, %v223
  %v227 = vmul.f32 %v208, %v223
  %v228 = vmul.f32 %v213, %v223
  %v229 = vmul.f32 %v218, %v223
  %v230 = vlaneseq
  %v231 = vshrl.u32 %v230, 7
  %v232 = vsub.s32 1, %v231
  %v233 = vrot.slane %v183, %v232
  %v234 = vmul.f32 %v198, %v233
  %v235 = vmul.f32 %v203, %v233
  %v236 = vmul.f32 %v213, %v233
  %v237 = vmul.f32 %v218, %v233
  %vm242 = vcmask 1046528
  %v243 = vrot.slane %v234, 1
  %v244 = vrot.slane %v235, 1
  %v245 = vsel %vm242, %v243, %v244
  %v246 = vrot.slane %v236, 1
  %v247 = vrot.slane %v237, 1
  %v248 = vsel %vm242, %v246, %v247
  %v255 = vadd.f32 %v224, %v243
  %v256 = vadd.f32 %v225, %v245
  %v257 = vadd.f32 %v226, %v244
  %v258 = vadd.f32 %v227, %v246
  %v259 = vadd.f32 %v228, %v248
  %v260 = vadd.f32 %v229, %v247
  %v261 = vunpack.c.l.bf16 %v181
  %v262 = vunpack.c.l.bf16 %v182
  %263 = vset.pattern.permute.xlu0 0
  %264 = vperm.xlu0 %263, %v185
  %v265 = vpop.permute.xlu0 %264
  %267 = vset.pattern.permute.xlu0 0
  %268 = vperm.xlu0 %267, %v186
  %v269 = vpop.permute.xlu0 %268
  %272 = vset.pattern.permute.xlu0 0
  %273 = vperm.xlu0 %272, %v261
  %v274 = vpop.permute.xlu0 %273
  %276 = vset.pattern.permute.xlu0 0
  %277 = vperm.xlu0 %276, %v188
  %v278 = vpop.permute.xlu0 %277
  %280 = vset.pattern.permute.xlu0 0
  %281 = vperm.xlu0 %280, %v189
  %v282 = vpop.permute.xlu0 %281
  %285 = vset.pattern.permute.xlu0 0
  %286 = vperm.xlu0 %285, %v262
  %v287 = vpop.permute.xlu0 %286
  %v289 = vlaneseq
  %v290 = vshrl.u32 %v289, 7
  %v291 = vsub.s32 2, %v290
  %v292 = vrot.slane %v183, %v291
  %v293 = vmul.f32 %v265, %v292
  %v294 = vmul.f32 %v269, %v292
  %v295 = vmul.f32 %v274, %v292
  %v296 = vmul.f32 %v278, %v292
  %v297 = vmul.f32 %v282, %v292
  %v298 = vmul.f32 %v287, %v292
  %vm305 = vcmask 1045504
  %v306 = vrot.slane %v293, 2
  %v307 = vrot.slane %v294, 2
  %v308 = vsel %vm305, %v306, %v307
  %v309 = vrot.slane %v295, 2
  %v310 = vsel %vm305, %v307, %v309
  %v311 = vrot.slane %v296, 2
  %v312 = vrot.slane %v297, 2
  %v313 = vsel %vm305, %v311, %v312
  %v314 = vrot.slane %v298, 2
  %v315 = vsel %vm305, %v312, %v314
  %v322 = vadd.f32 %v255, %v306
  %v323 = vadd.f32 %v256, %v308
  %v324 = vadd.f32 %v257, %v310
  %v325 = vadd.f32 %v258, %v311
  %v326 = vadd.f32 %v259, %v313
  %v327 = vadd.f32 %v260, %v315
  %v328 = vld [vmem:[%s5] sm:$0x1]
  %v330 = vlaneseq
  %v331 = vshrl.u32 %v330, 7
  %v332 = vsub.s32 0, %v331
  %v333 = vrot.slane %v328, %v332
  %v335 = vadd.f32 %v322, %v333
  %v336 = vadd.f32 %v323, %v333
  %v337 = vadd.f32 %v324, %v333
  %v338 = vadd.f32 %v325, %v333
  %v339 = vadd.f32 %v326, %v333
  %v340 = vadd.f32 %v327, %v333
  %v341 = vmax.f32 %v335, 0.0
  %v342 = vmax.f32 %v336, 0.0
  %v343 = vmax.f32 %v337, 0.0
  %v344 = vmax.f32 %v338, 0.0
  %v345 = vmax.f32 %v339, 0.0
  %v346 = vmax.f32 %v340, 0.0
  %v347 = vpack.c.bf16 %v342, %v341
  %v348 = vpack.c.bf16 %v343, %v343
  %v349 = vpack.c.bf16 %v345, %v344
  %v350 = vpack.c.bf16 %v346, %v346
  %v355 = vunpack.c.l.b16 %v347
  %v356 = vunpack.c.h.b16 %v347
  %v357 = vunpack.c.l.b16 %v348
  %v358 = vunpack.c.l.b16 %v349
  %v359 = vunpack.c.h.b16 %v349
  %v360 = vunpack.c.l.b16 %v350
  %v361 = vpack.c.b16 %v355, %v355
  %v362 = vpack.c.b16 %v356, %v356
  %v363 = vpack.c.b16 %v357, %v357
  %v364 = vpack.c.b16 %v358, %v358
  %v365 = vpack.c.b16 %v359, %v359
  %v366 = vpack.c.b16 %v360, %v360
  %vm367 = vsmask.f32 256
  %vm368 = vsmask.f32 4368
  %vm369 = vmor %vm367, %vm368
  %v371 = vshrl.u32 %v361, 16
  %v373 = vrot.slane %v371, 7
  %v374 = vrot.slane %v373, 4
  %v376 = vshrl.u32 %v362, 16
  %v378 = vrot.slane %v376, 7
  %v379 = vshll.u32 %v362, 16
  %v381 = vor.u32 %v378, %v379
  %v382 = vsel %vm369, %v374, %v381
  %v383 = vrot.slane %v378, 4
  %v385 = vshrl.u32 %v363, 16
  %v387 = vrot.slane %v385, 7
  %v388 = vshll.u32 %v363, 16
  %v390 = vor.u32 %v387, %v388
  %v391 = vsel %vm369, %v383, %v390
  %v393 = vshrl.u32 %v364, 16
  %v395 = vrot.slane %v393, 7
  %v396 = vrot.slane %v395, 4
  %v398 = vshrl.u32 %v365, 16
  %v400 = vrot.slane %v398, 7
  %v401 = vshll.u32 %v365, 16
  %v403 = vor.u32 %v400, %v401
  %v404 = vsel %vm369, %v396, %v403
  %v405 = vrot.slane %v400, 4
  %v407 = vshrl.u32 %v366, 16
  %v409 = vrot.slane %v407, 7
  %v410 = vshll.u32 %v366, 16
  %v412 = vor.u32 %v409, %v410
  %v413 = vsel %vm369, %v405, %v412
  %vm418 = vcmask 125952
  %419 = vst.msk [vmem:[#allocation2 + $0x4] sm:$0xf] %vm418, %v382
  %420 = vst.msk [vmem:[#allocation2 + $0x8] sm:$0xf] %vm418, %v391
  %421 = vst.msk [vmem:[#allocation2 + $0x14] sm:$0xf] %vm418, %v404
  %422 = vst.msk [vmem:[#allocation2 + $0x18] sm:$0xf] %vm418, %v413
  %v423 = vld [vmem:[#allocation2] sm:$0x8]
  %v424 = vld [vmem:[#allocation2 + $0x4] sm:$0xf]
  %v425 = vld [vmem:[#allocation2 + $0x8] sm:$0xf]
  %v426 = vld [vmem:[#allocation2 + $0x10] sm:$0x8]
  %v427 = vld [vmem:[#allocation2 + $0x14] sm:$0xf]
  %v428 = vld [vmem:[#allocation2 + $0x18] sm:$0xf]
  %v429 = vld [vmem:[#allocation2 + $0xc] sm:$0x1]
  %v430 = vld [vmem:[#allocation2 + $0x1c] sm:$0x1]
  %v432 = vshrl.u32 %v423, 16
  %v434 = vrot.slane %v432, 7
  %v435 = vrot.slane %v434, 4
  %v437 = vshrl.u32 %v424, 16
  %v439 = vrot.slane %v437, 7
  %v440 = vshll.u32 %v424, 16
  %v442 = vor.u32 %v439, %v440
  %v443 = vsel %vm369, %v435, %v442
  %v444 = vrot.slane %v439, 4
  %v446 = vshrl.u32 %v425, 16
  %v448 = vrot.slane %v446, 7
  %v449 = vshll.u32 %v425, 16
  %v451 = vor.u32 %v448, %v449
  %v452 = vsel %vm369, %v444, %v451
  %v454 = vshrl.u32 %v426, 16
  %v456 = vrot.slane %v454, 7
  %v457 = vrot.slane %v456, 4
  %v459 = vshrl.u32 %v427, 16
  %v461 = vrot.slane %v459, 7
  %v462 = vshll.u32 %v427, 16
  %v464 = vor.u32 %v461, %v462
  %v465 = vsel %vm369, %v457, %v464
  %v466 = vrot.slane %v461, 4
  %v468 = vshrl.u32 %v428, 16
  %v470 = vrot.slane %v468, 7
  %v471 = vshll.u32 %v428, 16
  %v473 = vor.u32 %v470, %v471
  %v474 = vsel %vm369, %v466, %v473
  %v475 = vld [vmem:[%s7] sm:$0xf]
  %v476 = vld [vmem:[%s7 + $0x4] sm:$0xf]
  %s477 = scalar_lea.vmem %s7, 8
  %v478 = vld [vmem:[%s477] sm:$0xf]
  %v479 = vld [vmem:[%s477 + $0x4] sm:$0xf]
  %v484 = vunpack.c.l.b16 %v424
  %v485 = vunpack.c.l.b16 %v425
  %v486 = vunpack.c.l.b16 %v427
  %v487 = vunpack.c.l.b16 %v428
  %v488 = vpack.c.b16 %v485, %v484
  %v489 = vpack.c.b16 %v487, %v486
  %v492 = vunpack.c.l.b16 %v478
  %v493 = vunpack.c.l.b16 %v479
  %v494 = vpack.c.b16 %v493, %v492
  %vm496 = vcmask 130048
  %v498 = vsel %vm496, %v488, 0
  %v501 = vsel %vm496, %v489, 0
  %503 = vmatprep.subr.bf16.mxu0 0
  %504 = vmatpush1.bf16.msra.mxu0 0
  %505 = vmatprep.subr.bf16.mxu0 0
  %506 = vmatpush1.bf16.msra.mxu0 0
  %507 = vmatprep.subr.bf16.mxu0 0
  %508 = vmatpush1.bf16.msra.mxu0 0
  %509 = vmatprep.subr.bf16.mxu0 0
  %510 = vmatpush1.bf16.msra.mxu0 0
  %511 = vmatprep.subr.bf16.mxu0 0
  %512 = vmatpush1.bf16.msra.mxu0 0
  %513 = vmatprep.subr.bf16.mxu0 0
  %514 = vmatpush1.bf16.msra.mxu0 0
  %515 = vmatprep.subr.bf16.mxu0 0
  %516 = vmatpush1.bf16.msra.mxu0 0
  %517 = vmatprep.subr.bf16.mxu0 0
  %518 = vmatpush1.bf16.msra.mxu0 %v494
  %519 = vmatprep.subr.bf16.mxu0 0
  %520 = vmatpush2.bf16.msra.mxu0 0
  %521 = vmatprep.subr.bf16.mxu0 0
  %522 = vmatpush2.bf16.msra.mxu0 0
  %523 = vmatprep.subr.bf16.mxu0 0
  %524 = vmatpush2.bf16.msra.mxu0 0
  %525 = vmatprep.subr.bf16.mxu0 0
  %526 = vmatpush2.bf16.msra.mxu0 0
  %527 = vmatprep.subr.bf16.mxu0 0
  %528 = vmatpush2.bf16.msra.mxu0 0
  %529 = vmatprep.subr.bf16.mxu0 0
  %530 = vmatpush2.bf16.msra.mxu0 0
  %531 = vmatprep.subr.bf16.mxu0 0
  %532 = vmatpush2.bf16.msra.mxu0 0
  %533 = vmatprep.subr.bf16.mxu0 0
  %534 = vmatpush2.bf16.msra.mxu0 0
  %535 = vmatprep.mubr.bf16.mxu0 0
  %536 = vmatmul.mubr.bf16.gmra.mxu0 %v498
  %v537 = vpop.f32.mrf.mxu0
  %v538 = vadd.f32 0.0, %v537
  %v539 = vpop.f32.mrf.mxu0
  %v540 = vpop.f32.mrf.mxu0
  %v541 = vadd.f32 0.0, %v540
  %v542 = vpop.f32.mrf.mxu0
  %543 = vmatprep.mubr.bf16.mxu0 0
  %544 = vmatmul.mubr.bf16.gmra.mxu0 %v501
  %v545 = vpop.f32.mrf.mxu0
  %v546 = vadd.f32 0.0, %v545
  %v547 = vpop.f32.mrf.mxu0
  %v548 = vpop.f32.mrf.mxu0
  %v549 = vadd.f32 0.0, %v548
  %v550 = vpop.f32.mrf.mxu0
  %551 = vdwg.mxu0
  %v552 = vunpack.c.l.b16 %v443
  %v553 = vunpack.c.l.b16 %v452
  %v554 = vunpack.c.l.b16 %v465
  %v555 = vunpack.c.l.b16 %v474
  %v556 = vpack.c.b16 %v553, %v552
  %v557 = vpack.c.b16 %v555, %v554
  %v560 = vunpack.c.l.b16 %v475
  %v561 = vunpack.c.l.b16 %v476
  %v562 = vpack.c.b16 %v561, %v560
  %v565 = vsel %vm496, %v556, 0
  %v568 = vsel %vm496, %v557, 0
  %570 = vmatprep.subr.bf16.mxu0 0
  %571 = vmatpush1.bf16.msra.mxu0 0
  %572 = vmatprep.subr.bf16.mxu0 0
  %573 = vmatpush1.bf16.msra.mxu0 0
  %574 = vmatprep.subr.bf16.mxu0 0
  %575 = vmatpush1.bf16.msra.mxu0 0
  %576 = vmatprep.subr.bf16.mxu0 0
  %577 = vmatpush1.bf16.msra.mxu0 0
  %578 = vmatprep.subr.bf16.mxu0 0
  %579 = vmatpush1.bf16.msra.mxu0 0
  %580 = vmatprep.subr.bf16.mxu0 0
  %581 = vmatpush1.bf16.msra.mxu0 0
  %582 = vmatprep.subr.bf16.mxu0 0
  %583 = vmatpush1.bf16.msra.mxu0 0
  %584 = vmatprep.subr.bf16.mxu0 0
  %585 = vmatpush1.bf16.msra.mxu0 %v562
  %586 = vmatprep.subr.bf16.mxu0 0
  %587 = vmatpush2.bf16.msra.mxu0 0
  %588 = vmatprep.subr.bf16.mxu0 0
  %589 = vmatpush2.bf16.msra.mxu0 0
  %590 = vmatprep.subr.bf16.mxu0 0
  %591 = vmatpush2.bf16.msra.mxu0 0
  %592 = vmatprep.subr.bf16.mxu0 0
  %593 = vmatpush2.bf16.msra.mxu0 0
  %594 = vmatprep.subr.bf16.mxu0 0
  %595 = vmatpush2.bf16.msra.mxu0 0
  %596 = vmatprep.subr.bf16.mxu0 0
  %597 = vmatpush2.bf16.msra.mxu0 0
  %598 = vmatprep.subr.bf16.mxu0 0
  %599 = vmatpush2.bf16.msra.mxu0 0
  %600 = vmatprep.subr.bf16.mxu0 0
  %601 = vmatpush2.bf16.msra.mxu0 0
  %602 = vmatprep.mubr.bf16.mxu0 0
  %603 = vmatmul.mubr.bf16.gmra.mxu0 %v565
  %v604 = vpop.f32.mrf.mxu0
  %v605 = vadd.f32 %v538, %v604
  %v606 = vpop.f32.mrf.mxu0
  %v607 = vpop.f32.mrf.mxu0
  %v608 = vadd.f32 %v541, %v607
  %v609 = vpop.f32.mrf.mxu0
  %610 = vmatprep.mubr.bf16.mxu0 0
  %611 = vmatmul.mubr.bf16.gmra.mxu0 %v568
  %v612 = vpop.f32.mrf.mxu0
  %v613 = vadd.f32 %v546, %v612
  %v614 = vpop.f32.mrf.mxu0
  %v615 = vpop.f32.mrf.mxu0
  %v616 = vadd.f32 %v549, %v615
  %v617 = vpop.f32.mrf.mxu0
  %618 = vdwg.mxu0
  %vm619 = vsmask.f32 3328
  %vm620 = vsmask.f32 7440
  %vm621 = vmor %vm619, %vm620
  %v622 = vrot.slane %v437, 4
  %v623 = vrot.slane %v440, 5
  %v624 = vor.u32 %v622, %v623
  %v625 = vrot.slane %v624, 4
  %v626 = vrot.slane %v449, 5
  %v627 = vsel %vm621, %v625, %v626
  %v628 = vrot.slane %v446, 4
  %v629 = vor.u32 %v628, %v626
  %v630 = vrot.slane %v629, 4
  %v632 = vshll.u32 %v429, 16
  %v634 = vrot.slane %v632, 5
  %v635 = vsel %vm621, %v630, %v634
  %v636 = vrot.slane %v459, 4
  %v637 = vrot.slane %v462, 5
  %v638 = vor.u32 %v636, %v637
  %v639 = vrot.slane %v638, 4
  %v640 = vrot.slane %v471, 5
  %v641 = vsel %vm621, %v639, %v640
  %v642 = vrot.slane %v468, 4
  %v643 = vor.u32 %v642, %v640
  %v644 = vrot.slane %v643, 4
  %v646 = vshll.u32 %v430, 16
  %v648 = vrot.slane %v646, 5
  %v649 = vsel %vm621, %v644, %v648
  %s650 = scalar_lea.vmem %s7, 16
  %v651 = vld [vmem:[%s650] sm:$0xf]
  %v652 = vld [vmem:[%s650 + $0x4] sm:$0xf]
  %v653 = vunpack.c.l.b16 %v627
  %v654 = vunpack.c.l.b16 %v635
  %v655 = vunpack.c.l.b16 %v641
  %v656 = vunpack.c.l.b16 %v649
  %v657 = vpack.c.b16 %v654, %v653
  %v658 = vpack.c.b16 %v656, %v655
  %v661 = vunpack.c.l.b16 %v651
  %v662 = vunpack.c.l.b16 %v652
  %v663 = vpack.c.b16 %v662, %v661
  %v666 = vsel %vm496, %v657, 0
  %v669 = vsel %vm496, %v658, 0
  %671 = vmatprep.subr.bf16.mxu0 0
  %672 = vmatpush1.bf16.msra.mxu0 0
  %673 = vmatprep.subr.bf16.mxu0 0
  %674 = vmatpush1.bf16.msra.mxu0 0
  %675 = vmatprep.subr.bf16.mxu0 0
  %676 = vmatpush1.bf16.msra.mxu0 0
  %677 = vmatprep.subr.bf16.mxu0 0
  %678 = vmatpush1.bf16.msra.mxu0 0
  %679 = vmatprep.subr.bf16.mxu0 0
  %680 = vmatpush1.bf16.msra.mxu0 0
  %681 = vmatprep.subr.bf16.mxu0 0
  %682 = vmatpush1.bf16.msra.mxu0 0
  %683 = vmatprep.subr.bf16.mxu0 0
  %684 = vmatpush1.bf16.msra.mxu0 0
  %685 = vmatprep.subr.bf16.mxu0 0
  %686 = vmatpush1.bf16.msra.mxu0 %v663
  %687 = vmatprep.subr.bf16.mxu0 0
  %688 = vmatpush2.bf16.msra.mxu0 0
  %689 = vmatprep.subr.bf16.mxu0 0
  %690 = vmatpush2.bf16.msra.mxu0 0
  %691 = vmatprep.subr.bf16.mxu0 0
  %692 = vmatpush2.bf16.msra.mxu0 0
  %693 = vmatprep.subr.bf16.mxu0 0
  %694 = vmatpush2.bf16.msra.mxu0 0
  %695 = vmatprep.subr.bf16.mxu0 0
  %696 = vmatpush2.bf16.msra.mxu0 0
  %697 = vmatprep.subr.bf16.mxu0 0
  %698 = vmatpush2.bf16.msra.mxu0 0
  %699 = vmatprep.subr.bf16.mxu0 0
  %700 = vmatpush2.bf16.msra.mxu0 0
  %701 = vmatprep.subr.bf16.mxu0 0
  %702 = vmatpush2.bf16.msra.mxu0 0
  %703 = vmatprep.mubr.bf16.mxu0 0
  %704 = vmatmul.mubr.bf16.gmra.mxu0 %v666
  %v705 = vpop.f32.mrf.mxu0
  %v706 = vadd.f32 0.0, %v705
  %v707 = vpop.f32.mrf.mxu0
  %v708 = vpop.f32.mrf.mxu0
  %v709 = vadd.f32 0.0, %v708
  %v710 = vpop.f32.mrf.mxu0
  %711 = vmatprep.mubr.bf16.mxu0 0
  %712 = vmatmul.mubr.bf16.gmra.mxu0 %v669
  %v713 = vpop.f32.mrf.mxu0
  %v714 = vadd.f32 0.0, %v713
  %v715 = vpop.f32.mrf.mxu0
  %v716 = vpop.f32.mrf.mxu0
  %v717 = vadd.f32 0.0, %v716
  %v718 = vpop.f32.mrf.mxu0
  %719 = vdwg.mxu0
  %v720 = vadd.f32 %v605, %v706
  %v721 = vadd.f32 %v608, %v709
  %v722 = vadd.f32 %v613, %v714
  %v723 = vadd.f32 %v616, %v717
  %v724 = vld [vmem:[%s9] sm:$0x1]
  %v726 = vlaneseq
  %v727 = vshrl.u32 %v726, 7
  %v728 = vsub.s32 0, %v727
  %v729 = vrot.slane %v724, %v728
  %v731 = vadd.f32 %v720, %v729
  %v732 = vadd.f32 %v721, %v729
  %v733 = vadd.f32 %v722, %v729
  %v734 = vadd.f32 %v723, %v729
  %v735 = vmax.f32 %v731, 0.0
  %v736 = vmax.f32 %v732, 0.0
  %v737 = vmax.f32 %v733, 0.0
  %v738 = vmax.f32 %v734, 0.0
  %v739 = vunpack.c.l.bf16 %v424
  %v740 = vunpack.c.l.bf16 %v425
  %v741 = vunpack.c.l.bf16 %v427
  %v742 = vunpack.c.l.bf16 %v428
  %v743 = vpack.c.bf16 %v736, %v735
  %v744 = vpack.c.bf16 %v738, %v737
  %v747 = vunpack.c.l.b16 %v743
  %v748 = vunpack.c.h.b16 %v743
  %v749 = vunpack.c.l.b16 %v744
  %v750 = vunpack.c.h.b16 %v744
  %v751 = vpack.c.b16 %v747, %v747
  %v752 = vpack.c.b16 %v748, %v748
  %v753 = vpack.c.b16 %v749, %v749
  %v754 = vpack.c.b16 %v750, %v750
  %759 = vst.msk [vmem:[#allocation2 + $0x4] sm:$0xf] %vm418, %v751
  %760 = vst.msk [vmem:[#allocation2 + $0x8] sm:$0xf] %vm418, %v752
  %761 = vst.msk [vmem:[#allocation2 + $0x14] sm:$0xf] %vm418, %v753
  %762 = vst.msk [vmem:[#allocation2 + $0x18] sm:$0xf] %vm418, %v754
  %v763 = vld [vmem:[#allocation2] sm:$0x8]
  %v764 = vld [vmem:[#allocation2 + $0x4] sm:$0xf]
  %v765 = vld [vmem:[#allocation2 + $0x8] sm:$0xf]
  %v766 = vld [vmem:[#allocation2 + $0x10] sm:$0x8]
  %v767 = vld [vmem:[#allocation2 + $0x14] sm:$0xf]
  %v768 = vld [vmem:[#allocation2 + $0x18] sm:$0xf]
  %v769 = vld [vmem:[#allocation2 + $0xc] sm:$0x1]
  %v770 = vld [vmem:[#allocation2 + $0x1c] sm:$0x1]
  %v772 = vshrl.u32 %v763, 16
  %v774 = vrot.slane %v772, 7
  %v775 = vrot.slane %v774, 4
  %v777 = vshrl.u32 %v764, 16
  %v779 = vrot.slane %v777, 7
  %v780 = vshll.u32 %v764, 16
  %v782 = vor.u32 %v779, %v780
  %v783 = vsel %vm369, %v775, %v782
  %v784 = vrot.slane %v779, 4
  %v786 = vshrl.u32 %v765, 16
  %v788 = vrot.slane %v786, 7
  %v789 = vshll.u32 %v765, 16
  %v791 = vor.u32 %v788, %v789
  %v792 = vsel %vm369, %v784, %v791
  %v794 = vshrl.u32 %v766, 16
  %v796 = vrot.slane %v794, 7
  %v797 = vrot.slane %v796, 4
  %v799 = vshrl.u32 %v767, 16
  %v801 = vrot.slane %v799, 7
  %v802 = vshll.u32 %v767, 16
  %v804 = vor.u32 %v801, %v802
  %v805 = vsel %vm369, %v797, %v804
  %v806 = vrot.slane %v801, 4
  %v808 = vshrl.u32 %v768, 16
  %v810 = vrot.slane %v808, 7
  %v811 = vshll.u32 %v768, 16
  %v813 = vor.u32 %v810, %v811
  %v814 = vsel %vm369, %v806, %v813
  %v815 = vld [vmem:[%s11] sm:$0xf]
  %v816 = vld [vmem:[%s11 + $0x4] sm:$0xf]
  %s817 = scalar_lea.vmem %s11, 8
  %v818 = vld [vmem:[%s817] sm:$0xf]
  %v819 = vld [vmem:[%s817 + $0x4] sm:$0xf]
  %v824 = vunpack.c.l.b16 %v764
  %v825 = vunpack.c.l.b16 %v765
  %v826 = vunpack.c.l.b16 %v767
  %v827 = vunpack.c.l.b16 %v768
  %v828 = vpack.c.b16 %v825, %v824
  %v829 = vpack.c.b16 %v827, %v826
  %v832 = vunpack.c.l.b16 %v818
  %v833 = vunpack.c.l.b16 %v819
  %v834 = vpack.c.b16 %v833, %v832
  %v837 = vsel %vm496, %v828, 0
  %v840 = vsel %vm496, %v829, 0
  %842 = vmatprep.subr.bf16.mxu0 0
  %843 = vmatpush1.bf16.msra.mxu0 0
  %844 = vmatprep.subr.bf16.mxu0 0
  %845 = vmatpush1.bf16.msra.mxu0 0
  %846 = vmatprep.subr.bf16.mxu0 0
  %847 = vmatpush1.bf16.msra.mxu0 0
  %848 = vmatprep.subr.bf16.mxu0 0
  %849 = vmatpush1.bf16.msra.mxu0 0
  %850 = vmatprep.subr.bf16.mxu0 0
  %851 = vmatpush1.bf16.msra.mxu0 0
  %852 = vmatprep.subr.bf16.mxu0 0
  %853 = vmatpush1.bf16.msra.mxu0 0
  %854 = vmatprep.subr.bf16.mxu0 0
  %855 = vmatpush1.bf16.msra.mxu0 0
  %856 = vmatprep.subr.bf16.mxu0 0
  %857 = vmatpush1.bf16.msra.mxu0 %v834
  %858 = vmatprep.subr.bf16.mxu0 0
  %859 = vmatpush2.bf16.msra.mxu0 0
  %860 = vmatprep.subr.bf16.mxu0 0
  %861 = vmatpush2.bf16.msra.mxu0 0
  %862 = vmatprep.subr.bf16.mxu0 0
  %863 = vmatpush2.bf16.msra.mxu0 0
  %864 = vmatprep.subr.bf16.mxu0 0
  %865 = vmatpush2.bf16.msra.mxu0 0
  %866 = vmatprep.subr.bf16.mxu0 0
  %867 = vmatpush2.bf16.msra.mxu0 0
  %868 = vmatprep.subr.bf16.mxu0 0
  %869 = vmatpush2.bf16.msra.mxu0 0
  %870 = vmatprep.subr.bf16.mxu0 0
  %871 = vmatpush2.bf16.msra.mxu0 0
  %872 = vmatprep.subr.bf16.mxu0 0
  %873 = vmatpush2.bf16.msra.mxu0 0
  %874 = vmatprep.mubr.bf16.mxu0 0
  %875 = vmatmul.mubr.bf16.gmra.mxu0 %v837
  %v876 = vpop.f32.mrf.mxu0
  %v877 = vadd.f32 0.0, %v876
  %v878 = vpop.f32.mrf.mxu0
  %v879 = vpop.f32.mrf.mxu0
  %v880 = vadd.f32 0.0, %v879
  %v881 = vpop.f32.mrf.mxu0
  %882 = vmatprep.mubr.bf16.mxu0 0
  %883 = vmatmul.mubr.bf16.gmra.mxu0 %v840
  %v884 = vpop.f32.mrf.mxu0
  %v885 = vadd.f32 0.0, %v884
  %v886 = vpop.f32.mrf.mxu0
  %v887 = vpop.f32.mrf.mxu0
  %v888 = vadd.f32 0.0, %v887
  %v889 = vpop.f32.mrf.mxu0
  %890 = vdwg.mxu0
  %v891 = vunpack.c.l.b16 %v783
  %v892 = vunpack.c.l.b16 %v792
  %v893 = vunpack.c.l.b16 %v805
  %v894 = vunpack.c.l.b16 %v814
  %v895 = vpack.c.b16 %v892, %v891
  %v896 = vpack.c.b16 %v894, %v893
  %v899 = vunpack.c.l.b16 %v815
  %v900 = vunpack.c.l.b16 %v816
  %v901 = vpack.c.b16 %v900, %v899
  %v904 = vsel %vm496, %v895, 0
  %v907 = vsel %vm496, %v896, 0
  %909 = vmatprep.subr.bf16.mxu0 0
  %910 = vmatpush1.bf16.msra.mxu0 0
  %911 = vmatprep.subr.bf16.mxu0 0
  %912 = vmatpush1.bf16.msra.mxu0 0
  %913 = vmatprep.subr.bf16.mxu0 0
  %914 = vmatpush1.bf16.msra.mxu0 0
  %915 = vmatprep.subr.bf16.mxu0 0
  %916 = vmatpush1.bf16.msra.mxu0 0
  %917 = vmatprep.subr.bf16.mxu0 0
  %918 = vmatpush1.bf16.msra.mxu0 0
  %919 = vmatprep.subr.bf16.mxu0 0
  %920 = vmatpush1.bf16.msra.mxu0 0
  %921 = vmatprep.subr.bf16.mxu0 0
  %922 = vmatpush1.bf16.msra.mxu0 0
  %923 = vmatprep.subr.bf16.mxu0 0
  %924 = vmatpush1.bf16.msra.mxu0 %v901
  %925 = vmatprep.subr.bf16.mxu0 0
  %926 = vmatpush2.bf16.msra.mxu0 0
  %927 = vmatprep.subr.bf16.mxu0 0
  %928 = vmatpush2.bf16.msra.mxu0 0
  %929 = vmatprep.subr.bf16.mxu0 0
  %930 = vmatpush2.bf16.msra.mxu0 0
  %931 = vmatprep.subr.bf16.mxu0 0
  %932 = vmatpush2.bf16.msra.mxu0 0
  %933 = vmatprep.subr.bf16.mxu0 0
  %934 = vmatpush2.bf16.msra.mxu0 0
  %935 = vmatprep.subr.bf16.mxu0 0
  %936 = vmatpush2.bf16.msra.mxu0 0
  %937 = vmatprep.subr.bf16.mxu0 0
  %938 = vmatpush2.bf16.msra.mxu0 0
  %939 = vmatprep.subr.bf16.mxu0 0
  %940 = vmatpush2.bf16.msra.mxu0 0
  %941 = vmatprep.mubr.bf16.mxu0 0
  %942 = vmatmul.mubr.bf16.gmra.mxu0 %v904
  %v943 = vpop.f32.mrf.mxu0
  %v944 = vadd.f32 %v877, %v943
  %v945 = vpop.f32.mrf.mxu0
  %v946 = vpop.f32.mrf.mxu0
  %v947 = vadd.f32 %v880, %v946
  %v948 = vpop.f32.mrf.mxu0
  %949 = vmatprep.mubr.bf16.mxu0 0
  %950 = vmatmul.mubr.bf16.gmra.mxu0 %v907
  %v951 = vpop.f32.mrf.mxu0
  %v952 = vadd.f32 %v885, %v951
  %v953 = vpop.f32.mrf.mxu0
  %v954 = vpop.f32.mrf.mxu0
  %v955 = vadd.f32 %v888, %v954
  %v956 = vpop.f32.mrf.mxu0
  %957 = vdwg.mxu0
  %v958 = vrot.slane %v777, 4
  %v959 = vrot.slane %v780, 5
  %v960 = vor.u32 %v958, %v959
  %v961 = vrot.slane %v960, 4
  %v962 = vrot.slane %v789, 5
  %v963 = vsel %vm621, %v961, %v962
  %v964 = vrot.slane %v786, 4
  %v965 = vor.u32 %v964, %v962
  %v966 = vrot.slane %v965, 4
  %v968 = vshll.u32 %v769, 16
  %v970 = vrot.slane %v968, 5
  %v971 = vsel %vm621, %v966, %v970
  %v972 = vrot.slane %v799, 4
  %v973 = vrot.slane %v802, 5
  %v974 = vor.u32 %v972, %v973
  %v975 = vrot.slane %v974, 4
  %v976 = vrot.slane %v811, 5
  %v977 = vsel %vm621, %v975, %v976
  %v978 = vrot.slane %v808, 4
  %v979 = vor.u32 %v978, %v976
  %v980 = vrot.slane %v979, 4
  %v982 = vshll.u32 %v770, 16
  %v984 = vrot.slane %v982, 5
  %v985 = vsel %vm621, %v980, %v984
  %s986 = scalar_lea.vmem %s11, 16
  %v987 = vld [vmem:[%s986] sm:$0xf]
  %v988 = vld [vmem:[%s986 + $0x4] sm:$0xf]
  %v989 = vunpack.c.l.b16 %v963
  %v990 = vunpack.c.l.b16 %v971
  %v991 = vunpack.c.l.b16 %v977
  %v992 = vunpack.c.l.b16 %v985
  %v993 = vpack.c.b16 %v990, %v989
  %v994 = vpack.c.b16 %v992, %v991
  %v997 = vunpack.c.l.b16 %v987
  %v998 = vunpack.c.l.b16 %v988
  %v999 = vpack.c.b16 %v998, %v997
  %v1002 = vsel %vm496, %v993, 0
  %v1005 = vsel %vm496, %v994, 0
  %1007 = vmatprep.subr.bf16.mxu0 0
  %1008 = vmatpush1.bf16.msra.mxu0 0
  %1009 = vmatprep.subr.bf16.mxu0 0
  %1010 = vmatpush1.bf16.msra.mxu0 0
  %1011 = vmatprep.subr.bf16.mxu0 0
  %1012 = vmatpush1.bf16.msra.mxu0 0
  %1013 = vmatprep.subr.bf16.mxu0 0
  %1014 = vmatpush1.bf16.msra.mxu0 0
  %1015 = vmatprep.subr.bf16.mxu0 0
  %1016 = vmatpush1.bf16.msra.mxu0 0
  %1017 = vmatprep.subr.bf16.mxu0 0
  %1018 = vmatpush1.bf16.msra.mxu0 0
  %1019 = vmatprep.subr.bf16.mxu0 0
  %1020 = vmatpush1.bf16.msra.mxu0 0
  %1021 = vmatprep.subr.bf16.mxu0 0
  %1022 = vmatpush1.bf16.msra.mxu0 %v999
  %1023 = vmatprep.subr.bf16.mxu0 0
  %1024 = vmatpush2.bf16.msra.mxu0 0
  %1025 = vmatprep.subr.bf16.mxu0 0
  %1026 = vmatpush2.bf16.msra.mxu0 0
  %1027 = vmatprep.subr.bf16.mxu0 0
  %1028 = vmatpush2.bf16.msra.mxu0 0
  %1029 = vmatprep.subr.bf16.mxu0 0
  %1030 = vmatpush2.bf16.msra.mxu0 0
  %1031 = vmatprep.subr.bf16.mxu0 0
  %1032 = vmatpush2.bf16.msra.mxu0 0
  %1033 = vmatprep.subr.bf16.mxu0 0
  %1034 = vmatpush2.bf16.msra.mxu0 0
  %1035 = vmatprep.subr.bf16.mxu0 0
  %1036 = vmatpush2.bf16.msra.mxu0 0
  %1037 = vmatprep.subr.bf16.mxu0 0
  %1038 = vmatpush2.bf16.msra.mxu0 0
  %1039 = vmatprep.mubr.bf16.mxu0 0
  %1040 = vmatmul.mubr.bf16.gmra.mxu0 %v1002
  %v1041 = vpop.f32.mrf.mxu0
  %v1042 = vadd.f32 0.0, %v1041
  %v1043 = vpop.f32.mrf.mxu0
  %v1044 = vpop.f32.mrf.mxu0
  %v1045 = vadd.f32 0.0, %v1044
  %v1046 = vpop.f32.mrf.mxu0
  %1047 = vmatprep.mubr.bf16.mxu0 0
  %1048 = vmatmul.mubr.bf16.gmra.mxu0 %v1005
  %v1049 = vpop.f32.mrf.mxu0
  %v1050 = vadd.f32 0.0, %v1049
  %v1051 = vpop.f32.mrf.mxu0
  %v1052 = vpop.f32.mrf.mxu0
  %v1053 = vadd.f32 0.0, %v1052
  %v1054 = vpop.f32.mrf.mxu0
  %1055 = vdwg.mxu0
  %v1056 = vadd.f32 %v944, %v1042
  %v1057 = vadd.f32 %v947, %v1045
  %v1058 = vadd.f32 %v952, %v1050
  %v1059 = vadd.f32 %v955, %v1053
  %v1060 = vld [vmem:[%s13] sm:$0x1]
  %v1062 = vlaneseq
  %v1063 = vshrl.u32 %v1062, 7
  %v1064 = vsub.s32 0, %v1063
  %v1065 = vrot.slane %v1060, %v1064
  %v1067 = vadd.f32 %v1056, %v1065
  %v1068 = vadd.f32 %v1057, %v1065
  %v1069 = vadd.f32 %v1058, %v1065
  %v1070 = vadd.f32 %v1059, %v1065
  %v1071 = vadd.f32 %v1067, %v739
  %v1072 = vadd.f32 %v1068, %v740
  %v1073 = vadd.f32 %v1069, %v741
  %v1074 = vadd.f32 %v1070, %v742
  %v1075 = vmax.f32 %v1071, 0.0
  %v1076 = vmax.f32 %v1072, 0.0
  %v1077 = vmax.f32 %v1073, 0.0
  %v1078 = vmax.f32 %v1074, 0.0
  %v1079 = vpack.c.bf16 %v1076, %v1075
  %v1080 = vpack.c.bf16 %v1078, %v1077
  %v1083 = vunpack.c.l.b16 %v1079
  %v1084 = vunpack.c.h.b16 %v1079
  %v1085 = vunpack.c.l.b16 %v1080
  %v1086 = vunpack.c.h.b16 %v1080
  %v1087 = vpack.c.b16 %v1083, %v1083
  %v1088 = vpack.c.b16 %v1084, %v1084
  %v1089 = vpack.c.b16 %v1085, %v1085
  %v1090 = vpack.c.b16 %v1086, %v1086
  %1095 = vst.msk [vmem:[#allocation2 + $0x4] sm:$0xf] %vm418, %v1087
  %1096 = vst.msk [vmem:[#allocation2 + $0x8] sm:$0xf] %vm418, %v1088
  %1097 = vst.msk [vmem:[#allocation2 + $0x14] sm:$0xf] %vm418, %v1089
  %1098 = vst.msk [vmem:[#allocation2 + $0x18] sm:$0xf] %vm418, %v1090
  %v1099 = vld [vmem:[#allocation2] sm:$0x8]
  %v1100 = vld [vmem:[#allocation2 + $0x4] sm:$0xf]
  %v1101 = vld [vmem:[#allocation2 + $0x8] sm:$0xf]
  %v1102 = vld [vmem:[#allocation2 + $0x10] sm:$0x8]
  %v1103 = vld [vmem:[#allocation2 + $0x14] sm:$0xf]
  %v1104 = vld [vmem:[#allocation2 + $0x18] sm:$0xf]
  %v1105 = vld [vmem:[#allocation2 + $0xc] sm:$0x1]
  %v1106 = vld [vmem:[#allocation2 + $0x1c] sm:$0x1]
  %v1108 = vshrl.u32 %v1099, 16
  %v1110 = vrot.slane %v1108, 7
  %v1111 = vrot.slane %v1110, 4
  %v1113 = vshrl.u32 %v1100, 16
  %v1115 = vrot.slane %v1113, 7
  %v1116 = vshll.u32 %v1100, 16
  %v1118 = vor.u32 %v1115, %v1116
  %v1119 = vsel %vm369, %v1111, %v1118
  %v1120 = vrot.slane %v1115, 4
  %v1122 = vshrl.u32 %v1101, 16
  %v1124 = vrot.slane %v1122, 7
  %v1125 = vshll.u32 %v1101, 16
  %v1127 = vor.u32 %v1124, %v1125
  %v1128 = vsel %vm369, %v1120, %v1127
  %v1130 = vshrl.u32 %v1102, 16
  %v1132 = vrot.slane %v1130, 7
  %v1133 = vrot.slane %v1132, 4
  %v1135 = vshrl.u32 %v1103, 16
  %v1137 = vrot.slane %v1135, 7
  %v1138 = vshll.u32 %v1103, 16
  %v1140 = vor.u32 %v1137, %v1138
  %v1141 = vsel %vm369, %v1133, %v1140
  %v1142 = vrot.slane %v1137, 4
  %v1144 = vshrl.u32 %v1104, 16
  %v1146 = vrot.slane %v1144, 7
  %v1147 = vshll.u32 %v1104, 16
  %v1149 = vor.u32 %v1146, %v1147
  %v1150 = vsel %vm369, %v1142, %v1149
  %v1151 = vld [vmem:[%s15] sm:$0xf]
  %v1152 = vld [vmem:[%s15 + $0x4] sm:$0xf]
  %s1153 = scalar_lea.vmem %s15, 8
  %v1154 = vld [vmem:[%s1153] sm:$0xf]
  %v1155 = vld [vmem:[%s1153 + $0x4] sm:$0xf]
  %v1160 = vunpack.c.l.b16 %v1100
  %v1161 = vunpack.c.l.b16 %v1101
  %v1162 = vunpack.c.l.b16 %v1103
  %v1163 = vunpack.c.l.b16 %v1104
  %v1164 = vpack.c.b16 %v1161, %v1160
  %v1165 = vpack.c.b16 %v1163, %v1162
  %v1168 = vunpack.c.l.b16 %v1154
  %v1169 = vunpack.c.l.b16 %v1155
  %v1170 = vpack.c.b16 %v1169, %v1168
  %v1173 = vsel %vm496, %v1164, 0
  %v1176 = vsel %vm496, %v1165, 0
  %1178 = vmatprep.subr.bf16.mxu0 0
  %1179 = vmatpush1.bf16.msra.mxu0 0
  %1180 = vmatprep.subr.bf16.mxu0 0
  %1181 = vmatpush1.bf16.msra.mxu0 0
  %1182 = vmatprep.subr.bf16.mxu0 0
  %1183 = vmatpush1.bf16.msra.mxu0 0
  %1184 = vmatprep.subr.bf16.mxu0 0
  %1185 = vmatpush1.bf16.msra.mxu0 0
  %1186 = vmatprep.subr.bf16.mxu0 0
  %1187 = vmatpush1.bf16.msra.mxu0 0
  %1188 = vmatprep.subr.bf16.mxu0 0
  %1189 = vmatpush1.bf16.msra.mxu0 0
  %1190 = vmatprep.subr.bf16.mxu0 0
  %1191 = vmatpush1.bf16.msra.mxu0 0
  %1192 = vmatprep.subr.bf16.mxu0 0
  %1193 = vmatpush1.bf16.msra.mxu0 %v1170
  %1194 = vmatprep.subr.bf16.mxu0 0
  %1195 = vmatpush2.bf16.msra.mxu0 0
  %1196 = vmatprep.subr.bf16.mxu0 0
  %1197 = vmatpush2.bf16.msra.mxu0 0
  %1198 = vmatprep.subr.bf16.mxu0 0
  %1199 = vmatpush2.bf16.msra.mxu0 0
  %1200 = vmatprep.subr.bf16.mxu0 0
  %1201 = vmatpush2.bf16.msra.mxu0 0
  %1202 = vmatprep.subr.bf16.mxu0 0
  %1203 = vmatpush2.bf16.msra.mxu0 0
  %1204 = vmatprep.subr.bf16.mxu0 0
  %1205 = vmatpush2.bf16.msra.mxu0 0
  %1206 = vmatprep.subr.bf16.mxu0 0
  %1207 = vmatpush2.bf16.msra.mxu0 0
  %1208 = vmatprep.subr.bf16.mxu0 0
  %1209 = vmatpush2.bf16.msra.mxu0 0
  %1210 = vmatprep.mubr.bf16.mxu0 0
  %1211 = vmatmul.mubr.bf16.gmra.mxu0 %v1173
  %v1212 = vpop.f32.mrf.mxu0
  %v1213 = vadd.f32 0.0, %v1212
  %v1214 = vpop.f32.mrf.mxu0
  %v1215 = vpop.f32.mrf.mxu0
  %v1216 = vadd.f32 0.0, %v1215
  %v1217 = vpop.f32.mrf.mxu0
  %1218 = vmatprep.mubr.bf16.mxu0 0
  %1219 = vmatmul.mubr.bf16.gmra.mxu0 %v1176
  %v1220 = vpop.f32.mrf.mxu0
  %v1221 = vadd.f32 0.0, %v1220
  %v1222 = vpop.f32.mrf.mxu0
  %v1223 = vpop.f32.mrf.mxu0
  %v1224 = vadd.f32 0.0, %v1223
  %v1225 = vpop.f32.mrf.mxu0
  %1226 = vdwg.mxu0
  %v1227 = vunpack.c.l.b16 %v1119
  %v1228 = vunpack.c.l.b16 %v1128
  %v1229 = vunpack.c.l.b16 %v1141
  %v1230 = vunpack.c.l.b16 %v1150
  %v1231 = vpack.c.b16 %v1228, %v1227
  %v1232 = vpack.c.b16 %v1230, %v1229
  %v1235 = vunpack.c.l.b16 %v1151
  %v1236 = vunpack.c.l.b16 %v1152
  %v1237 = vpack.c.b16 %v1236, %v1235
  %v1240 = vsel %vm496, %v1231, 0
  %v1243 = vsel %vm496, %v1232, 0
  %1245 = vmatprep.subr.bf16.mxu0 0
  %1246 = vmatpush1.bf16.msra.mxu0 0
  %1247 = vmatprep.subr.bf16.mxu0 0
  %1248 = vmatpush1.bf16.msra.mxu0 0
  %1249 = vmatprep.subr.bf16.mxu0 0
  %1250 = vmatpush1.bf16.msra.mxu0 0
  %1251 = vmatprep.subr.bf16.mxu0 0
  %1252 = vmatpush1.bf16.msra.mxu0 0
  %1253 = vmatprep.subr.bf16.mxu0 0
  %1254 = vmatpush1.bf16.msra.mxu0 0
  %1255 = vmatprep.subr.bf16.mxu0 0
  %1256 = vmatpush1.bf16.msra.mxu0 0
  %1257 = vmatprep.subr.bf16.mxu0 0
  %1258 = vmatpush1.bf16.msra.mxu0 0
  %1259 = vmatprep.subr.bf16.mxu0 0
  %1260 = vmatpush1.bf16.msra.mxu0 %v1237
  %1261 = vmatprep.subr.bf16.mxu0 0
  %1262 = vmatpush2.bf16.msra.mxu0 0
  %1263 = vmatprep.subr.bf16.mxu0 0
  %1264 = vmatpush2.bf16.msra.mxu0 0
  %1265 = vmatprep.subr.bf16.mxu0 0
  %1266 = vmatpush2.bf16.msra.mxu0 0
  %1267 = vmatprep.subr.bf16.mxu0 0
  %1268 = vmatpush2.bf16.msra.mxu0 0
  %1269 = vmatprep.subr.bf16.mxu0 0
  %1270 = vmatpush2.bf16.msra.mxu0 0
  %1271 = vmatprep.subr.bf16.mxu0 0
  %1272 = vmatpush2.bf16.msra.mxu0 0
  %1273 = vmatprep.subr.bf16.mxu0 0
  %1274 = vmatpush2.bf16.msra.mxu0 0
  %1275 = vmatprep.subr.bf16.mxu0 0
  %1276 = vmatpush2.bf16.msra.mxu0 0
  %1277 = vmatprep.mubr.bf16.mxu0 0
  %1278 = vmatmul.mubr.bf16.gmra.mxu0 %v1240
  %v1279 = vpop.f32.mrf.mxu0
  %v1280 = vadd.f32 %v1213, %v1279
  %v1281 = vpop.f32.mrf.mxu0
  %v1282 = vpop.f32.mrf.mxu0
  %v1283 = vadd.f32 %v1216, %v1282
  %v1284 = vpop.f32.mrf.mxu0
  %1285 = vmatprep.mubr.bf16.mxu0 0
  %1286 = vmatmul.mubr.bf16.gmra.mxu0 %v1243
  %v1287 = vpop.f32.mrf.mxu0
  %v1288 = vadd.f32 %v1221, %v1287
  %v1289 = vpop.f32.mrf.mxu0
  %v1290 = vpop.f32.mrf.mxu0
  %v1291 = vadd.f32 %v1224, %v1290
  %v1292 = vpop.f32.mrf.mxu0
  %1293 = vdwg.mxu0
  %v1294 = vrot.slane %v1113, 4
  %v1295 = vrot.slane %v1116, 5
  %v1296 = vor.u32 %v1294, %v1295
  %v1297 = vrot.slane %v1296, 4
  %v1298 = vrot.slane %v1125, 5
  %v1299 = vsel %vm621, %v1297, %v1298
  %v1300 = vrot.slane %v1122, 4
  %v1301 = vor.u32 %v1300, %v1298
  %v1302 = vrot.slane %v1301, 4
  %v1304 = vshll.u32 %v1105, 16
  %v1306 = vrot.slane %v1304, 5
  %v1307 = vsel %vm621, %v1302, %v1306
  %v1308 = vrot.slane %v1135, 4
  %v1309 = vrot.slane %v1138, 5
  %v1310 = vor.u32 %v1308, %v1309
  %v1311 = vrot.slane %v1310, 4
  %v1312 = vrot.slane %v1147, 5
  %v1313 = vsel %vm621, %v1311, %v1312
  %v1314 = vrot.slane %v1144, 4
  %v1315 = vor.u32 %v1314, %v1312
  %v1316 = vrot.slane %v1315, 4
  %v1318 = vshll.u32 %v1106, 16
  %v1320 = vrot.slane %v1318, 5
  %v1321 = vsel %vm621, %v1316, %v1320
  %s1322 = scalar_lea.vmem %s15, 16
  %v1323 = vld [vmem:[%s1322] sm:$0xf]
  %v1324 = vld [vmem:[%s1322 + $0x4] sm:$0xf]
  %v1325 = vunpack.c.l.b16 %v1299
  %v1326 = vunpack.c.l.b16 %v1307
  %v1327 = vunpack.c.l.b16 %v1313
  %v1328 = vunpack.c.l.b16 %v1321
  %v1329 = vpack.c.b16 %v1326, %v1325
  %v1330 = vpack.c.b16 %v1328, %v1327
  %v1333 = vunpack.c.l.b16 %v1323
  %v1334 = vunpack.c.l.b16 %v1324
  %v1335 = vpack.c.b16 %v1334, %v1333
  %v1338 = vsel %vm496, %v1329, 0
  %v1341 = vsel %vm496, %v1330, 0
  %1343 = vmatprep.subr.bf16.mxu0 0
  %1344 = vmatpush1.bf16.msra.mxu0 0
  %1345 = vmatprep.subr.bf16.mxu0 0
  %1346 = vmatpush1.bf16.msra.mxu0 0
  %1347 = vmatprep.subr.bf16.mxu0 0
  %1348 = vmatpush1.bf16.msra.mxu0 0
  %1349 = vmatprep.subr.bf16.mxu0 0
  %1350 = vmatpush1.bf16.msra.mxu0 0
  %1351 = vmatprep.subr.bf16.mxu0 0
  %1352 = vmatpush1.bf16.msra.mxu0 0
  %1353 = vmatprep.subr.bf16.mxu0 0
  %1354 = vmatpush1.bf16.msra.mxu0 0
  %1355 = vmatprep.subr.bf16.mxu0 0
  %1356 = vmatpush1.bf16.msra.mxu0 0
  %1357 = vmatprep.subr.bf16.mxu0 0
  %1358 = vmatpush1.bf16.msra.mxu0 %v1335
  %1359 = vmatprep.subr.bf16.mxu0 0
  %1360 = vmatpush2.bf16.msra.mxu0 0
  %1361 = vmatprep.subr.bf16.mxu0 0
  %1362 = vmatpush2.bf16.msra.mxu0 0
  %1363 = vmatprep.subr.bf16.mxu0 0
  %1364 = vmatpush2.bf16.msra.mxu0 0
  %1365 = vmatprep.subr.bf16.mxu0 0
  %1366 = vmatpush2.bf16.msra.mxu0 0
  %1367 = vmatprep.subr.bf16.mxu0 0
  %1368 = vmatpush2.bf16.msra.mxu0 0
  %1369 = vmatprep.subr.bf16.mxu0 0
  %1370 = vmatpush2.bf16.msra.mxu0 0
  %1371 = vmatprep.subr.bf16.mxu0 0
  %1372 = vmatpush2.bf16.msra.mxu0 0
  %1373 = vmatprep.subr.bf16.mxu0 0
  %1374 = vmatpush2.bf16.msra.mxu0 0
  %1375 = vmatprep.mubr.bf16.mxu0 0
  %1376 = vmatmul.mubr.bf16.gmra.mxu0 %v1338
  %v1377 = vpop.f32.mrf.mxu0
  %v1378 = vadd.f32 0.0, %v1377
  %v1379 = vpop.f32.mrf.mxu0
  %v1380 = vpop.f32.mrf.mxu0
  %v1381 = vadd.f32 0.0, %v1380
  %v1382 = vpop.f32.mrf.mxu0
  %1383 = vmatprep.mubr.bf16.mxu0 0
  %1384 = vmatmul.mubr.bf16.gmra.mxu0 %v1341
  %v1385 = vpop.f32.mrf.mxu0
  %v1386 = vadd.f32 0.0, %v1385
  %v1387 = vpop.f32.mrf.mxu0
  %v1388 = vpop.f32.mrf.mxu0
  %v1389 = vadd.f32 0.0, %v1388
  %v1390 = vpop.f32.mrf.mxu0
  %1391 = vdwg.mxu0
  %v1392 = vadd.f32 %v1280, %v1378
  %v1393 = vadd.f32 %v1283, %v1381
  %v1394 = vadd.f32 %v1288, %v1386
  %v1395 = vadd.f32 %v1291, %v1389
  %v1396 = vld [vmem:[%s17] sm:$0x1]
  %v1398 = vlaneseq
  %v1399 = vshrl.u32 %v1398, 7
  %v1400 = vsub.s32 0, %v1399
  %v1401 = vrot.slane %v1396, %v1400
  %v1403 = vadd.f32 %v1392, %v1401
  %v1404 = vadd.f32 %v1393, %v1401
  %v1405 = vadd.f32 %v1394, %v1401
  %v1406 = vadd.f32 %v1395, %v1401
  %v1407 = vmax.f32 %v1403, 0.0
  %v1408 = vmax.f32 %v1404, 0.0
  %v1409 = vmax.f32 %v1405, 0.0
  %v1410 = vmax.f32 %v1406, 0.0
  %v1411 = vunpack.c.l.bf16 %v1100
  %v1412 = vunpack.c.l.bf16 %v1101
  %v1413 = vunpack.c.l.bf16 %v1103
  %v1414 = vunpack.c.l.bf16 %v1104
  %v1415 = vpack.c.bf16 %v1408, %v1407
  %v1416 = vpack.c.bf16 %v1410, %v1409
  %v1419 = vunpack.c.l.b16 %v1415
  %v1420 = vunpack.c.h.b16 %v1415
  %v1421 = vunpack.c.l.b16 %v1416
  %v1422 = vunpack.c.h.b16 %v1416
  %v1423 = vpack.c.b16 %v1419, %v1419
  %v1424 = vpack.c.b16 %v1420, %v1420
  %v1425 = vpack.c.b16 %v1421, %v1421
  %v1426 = vpack.c.b16 %v1422, %v1422
  %1431 = vst.msk [vmem:[#allocation2 + $0x4] sm:$0xf] %vm418, %v1423
  %1432 = vst.msk [vmem:[#allocation2 + $0x8] sm:$0xf] %vm418, %v1424
  %1433 = vst.msk [vmem:[#allocation2 + $0x14] sm:$0xf] %vm418, %v1425
  %1434 = vst.msk [vmem:[#allocation2 + $0x18] sm:$0xf] %vm418, %v1426
  %v1435 = vld [vmem:[#allocation2] sm:$0x8]
  %v1436 = vld [vmem:[#allocation2 + $0x4] sm:$0xf]
  %v1437 = vld [vmem:[#allocation2 + $0x8] sm:$0xf]
  %v1438 = vld [vmem:[#allocation2 + $0x10] sm:$0x8]
  %v1439 = vld [vmem:[#allocation2 + $0x14] sm:$0xf]
  %v1440 = vld [vmem:[#allocation2 + $0x18] sm:$0xf]
  %v1441 = vld [vmem:[#allocation2 + $0xc] sm:$0x1]
  %v1442 = vld [vmem:[#allocation2 + $0x1c] sm:$0x1]
  %v1444 = vshrl.u32 %v1435, 16
  %v1446 = vrot.slane %v1444, 7
  %v1447 = vrot.slane %v1446, 4
  %v1449 = vshrl.u32 %v1436, 16
  %v1451 = vrot.slane %v1449, 7
  %v1452 = vshll.u32 %v1436, 16
  %v1454 = vor.u32 %v1451, %v1452
  %v1455 = vsel %vm369, %v1447, %v1454
  %v1456 = vrot.slane %v1451, 4
  %v1458 = vshrl.u32 %v1437, 16
  %v1460 = vrot.slane %v1458, 7
  %v1461 = vshll.u32 %v1437, 16
  %v1463 = vor.u32 %v1460, %v1461
  %v1464 = vsel %vm369, %v1456, %v1463
  %v1466 = vshrl.u32 %v1438, 16
  %v1468 = vrot.slane %v1466, 7
  %v1469 = vrot.slane %v1468, 4
  %v1471 = vshrl.u32 %v1439, 16
  %v1473 = vrot.slane %v1471, 7
  %v1474 = vshll.u32 %v1439, 16
  %v1476 = vor.u32 %v1473, %v1474
  %v1477 = vsel %vm369, %v1469, %v1476
  %v1478 = vrot.slane %v1473, 4
  %v1480 = vshrl.u32 %v1440, 16
  %v1482 = vrot.slane %v1480, 7
  %v1483 = vshll.u32 %v1440, 16
  %v1485 = vor.u32 %v1482, %v1483
  %v1486 = vsel %vm369, %v1478, %v1485
  %v1487 = vld [vmem:[%s19] sm:$0xf]
  %v1488 = vld [vmem:[%s19 + $0x4] sm:$0xf]
  %s1489 = scalar_lea.vmem %s19, 8
  %v1490 = vld [vmem:[%s1489] sm:$0xf]
  %v1491 = vld [vmem:[%s1489 + $0x4] sm:$0xf]
  %v1496 = vunpack.c.l.b16 %v1436
  %v1497 = vunpack.c.l.b16 %v1437
  %v1498 = vunpack.c.l.b16 %v1439
  %v1499 = vunpack.c.l.b16 %v1440
  %v1500 = vpack.c.b16 %v1497, %v1496
  %v1501 = vpack.c.b16 %v1499, %v1498
  %v1504 = vunpack.c.l.b16 %v1490
  %v1505 = vunpack.c.l.b16 %v1491
  %v1506 = vpack.c.b16 %v1505, %v1504
  %v1509 = vsel %vm496, %v1500, 0
  %v1512 = vsel %vm496, %v1501, 0
  %1514 = vmatprep.subr.bf16.mxu0 0
  %1515 = vmatpush1.bf16.msra.mxu0 0
  %1516 = vmatprep.subr.bf16.mxu0 0
  %1517 = vmatpush1.bf16.msra.mxu0 0
  %1518 = vmatprep.subr.bf16.mxu0 0
  %1519 = vmatpush1.bf16.msra.mxu0 0
  %1520 = vmatprep.subr.bf16.mxu0 0
  %1521 = vmatpush1.bf16.msra.mxu0 0
  %1522 = vmatprep.subr.bf16.mxu0 0
  %1523 = vmatpush1.bf16.msra.mxu0 0
  %1524 = vmatprep.subr.bf16.mxu0 0
  %1525 = vmatpush1.bf16.msra.mxu0 0
  %1526 = vmatprep.subr.bf16.mxu0 0
  %1527 = vmatpush1.bf16.msra.mxu0 0
  %1528 = vmatprep.subr.bf16.mxu0 0
  %1529 = vmatpush1.bf16.msra.mxu0 %v1506
  %1530 = vmatprep.subr.bf16.mxu0 0
  %1531 = vmatpush2.bf16.msra.mxu0 0
  %1532 = vmatprep.subr.bf16.mxu0 0
  %1533 = vmatpush2.bf16.msra.mxu0 0
  %1534 = vmatprep.subr.bf16.mxu0 0
  %1535 = vmatpush2.bf16.msra.mxu0 0
  %1536 = vmatprep.subr.bf16.mxu0 0
  %1537 = vmatpush2.bf16.msra.mxu0 0
  %1538 = vmatprep.subr.bf16.mxu0 0
  %1539 = vmatpush2.bf16.msra.mxu0 0
  %1540 = vmatprep.subr.bf16.mxu0 0
  %1541 = vmatpush2.bf16.msra.mxu0 0
  %1542 = vmatprep.subr.bf16.mxu0 0
  %1543 = vmatpush2.bf16.msra.mxu0 0
  %1544 = vmatprep.subr.bf16.mxu0 0
  %1545 = vmatpush2.bf16.msra.mxu0 0
  %1546 = vmatprep.mubr.bf16.mxu0 0
  %1547 = vmatmul.mubr.bf16.gmra.mxu0 %v1509
  %v1548 = vpop.f32.mrf.mxu0
  %v1549 = vadd.f32 0.0, %v1548
  %v1550 = vpop.f32.mrf.mxu0
  %v1551 = vpop.f32.mrf.mxu0
  %v1552 = vadd.f32 0.0, %v1551
  %v1553 = vpop.f32.mrf.mxu0
  %1554 = vmatprep.mubr.bf16.mxu0 0
  %1555 = vmatmul.mubr.bf16.gmra.mxu0 %v1512
  %v1556 = vpop.f32.mrf.mxu0
  %v1557 = vadd.f32 0.0, %v1556
  %v1558 = vpop.f32.mrf.mxu0
  %v1559 = vpop.f32.mrf.mxu0
  %v1560 = vadd.f32 0.0, %v1559
  %v1561 = vpop.f32.mrf.mxu0
  %1562 = vdwg.mxu0
  %v1563 = vunpack.c.l.b16 %v1455
  %v1564 = vunpack.c.l.b16 %v1464
  %v1565 = vunpack.c.l.b16 %v1477
  %v1566 = vunpack.c.l.b16 %v1486
  %v1567 = vpack.c.b16 %v1564, %v1563
  %v1568 = vpack.c.b16 %v1566, %v1565
  %v1571 = vunpack.c.l.b16 %v1487
  %v1572 = vunpack.c.l.b16 %v1488
  %v1573 = vpack.c.b16 %v1572, %v1571
  %v1576 = vsel %vm496, %v1567, 0
  %v1579 = vsel %vm496, %v1568, 0
  %1581 = vmatprep.subr.bf16.mxu0 0
  %1582 = vmatpush1.bf16.msra.mxu0 0
  %1583 = vmatprep.subr.bf16.mxu0 0
  %1584 = vmatpush1.bf16.msra.mxu0 0
  %1585 = vmatprep.subr.bf16.mxu0 0
  %1586 = vmatpush1.bf16.msra.mxu0 0
  %1587 = vmatprep.subr.bf16.mxu0 0
  %1588 = vmatpush1.bf16.msra.mxu0 0
  %1589 = vmatprep.subr.bf16.mxu0 0
  %1590 = vmatpush1.bf16.msra.mxu0 0
  %1591 = vmatprep.subr.bf16.mxu0 0
  %1592 = vmatpush1.bf16.msra.mxu0 0
  %1593 = vmatprep.subr.bf16.mxu0 0
  %1594 = vmatpush1.bf16.msra.mxu0 0
  %1595 = vmatprep.subr.bf16.mxu0 0
  %1596 = vmatpush1.bf16.msra.mxu0 %v1573
  %1597 = vmatprep.subr.bf16.mxu0 0
  %1598 = vmatpush2.bf16.msra.mxu0 0
  %1599 = vmatprep.subr.bf16.mxu0 0
  %1600 = vmatpush2.bf16.msra.mxu0 0
  %1601 = vmatprep.subr.bf16.mxu0 0
  %1602 = vmatpush2.bf16.msra.mxu0 0
  %1603 = vmatprep.subr.bf16.mxu0 0
  %1604 = vmatpush2.bf16.msra.mxu0 0
  %1605 = vmatprep.subr.bf16.mxu0 0
  %1606 = vmatpush2.bf16.msra.mxu0 0
  %1607 = vmatprep.subr.bf16.mxu0 0
  %1608 = vmatpush2.bf16.msra.mxu0 0
  %1609 = vmatprep.subr.bf16.mxu0 0
  %1610 = vmatpush2.bf16.msra.mxu0 0
  %1611 = vmatprep.subr.bf16.mxu0 0
  %1612 = vmatpush2.bf16.msra.mxu0 0
  %1613 = vmatprep.mubr.bf16.mxu0 0
  %1614 = vmatmul.mubr.bf16.gmra.mxu0 %v1576
  %v1615 = vpop.f32.mrf.mxu0
  %v1616 = vadd.f32 %v1549, %v1615
  %v1617 = vpop.f32.mrf.mxu0
  %v1618 = vpop.f32.mrf.mxu0
  %v1619 = vadd.f32 %v1552, %v1618
  %v1620 = vpop.f32.mrf.mxu0
  %1621 = vmatprep.mubr.bf16.mxu0 0
  %1622 = vmatmul.mubr.bf16.gmra.mxu0 %v1579
  %v1623 = vpop.f32.mrf.mxu0
  %v1624 = vadd.f32 %v1557, %v1623
  %v1625 = vpop.f32.mrf.mxu0
  %v1626 = vpop.f32.mrf.mxu0
  %v1627 = vadd.f32 %v1560, %v1626
  %v1628 = vpop.f32.mrf.mxu0
  %1629 = vdwg.mxu0
  %v1630 = vrot.slane %v1449, 4
  %v1631 = vrot.slane %v1452, 5
  %v1632 = vor.u32 %v1630, %v1631
  %v1633 = vrot.slane %v1632, 4
  %v1634 = vrot.slane %v1461, 5
  %v1635 = vsel %vm621, %v1633, %v1634
  %v1636 = vrot.slane %v1458, 4
  %v1637 = vor.u32 %v1636, %v1634
  %v1638 = vrot.slane %v1637, 4
  %v1640 = vshll.u32 %v1441, 16
  %v1642 = vrot.slane %v1640, 5
  %v1643 = vsel %vm621, %v1638, %v1642
  %v1644 = vrot.slane %v1471, 4
  %v1645 = vrot.slane %v1474, 5
  %v1646 = vor.u32 %v1644, %v1645
  %v1647 = vrot.slane %v1646, 4
  %v1648 = vrot.slane %v1483, 5
  %v1649 = vsel %vm621, %v1647, %v1648
  %v1650 = vrot.slane %v1480, 4
  %v1651 = vor.u32 %v1650, %v1648
  %v1652 = vrot.slane %v1651, 4
  %v1654 = vshll.u32 %v1442, 16
  %v1656 = vrot.slane %v1654, 5
  %v1657 = vsel %vm621, %v1652, %v1656
  %s1658 = scalar_lea.vmem %s19, 16
  %v1659 = vld [vmem:[%s1658] sm:$0xf]
  %v1660 = vld [vmem:[%s1658 + $0x4] sm:$0xf]
  %v1661 = vunpack.c.l.b16 %v1635
  %v1662 = vunpack.c.l.b16 %v1643
  %v1663 = vunpack.c.l.b16 %v1649
  %v1664 = vunpack.c.l.b16 %v1657
  %v1665 = vpack.c.b16 %v1662, %v1661
  %v1666 = vpack.c.b16 %v1664, %v1663
  %v1669 = vunpack.c.l.b16 %v1659
  %v1670 = vunpack.c.l.b16 %v1660
  %v1671 = vpack.c.b16 %v1670, %v1669
  %v1674 = vsel %vm496, %v1665, 0
  %v1677 = vsel %vm496, %v1666, 0
  %1679 = vmatprep.subr.bf16.mxu0 0
  %1680 = vmatpush1.bf16.msra.mxu0 0
  %1681 = vmatprep.subr.bf16.mxu0 0
  %1682 = vmatpush1.bf16.msra.mxu0 0
  %1683 = vmatprep.subr.bf16.mxu0 0
  %1684 = vmatpush1.bf16.msra.mxu0 0
  %1685 = vmatprep.subr.bf16.mxu0 0
  %1686 = vmatpush1.bf16.msra.mxu0 0
  %1687 = vmatprep.subr.bf16.mxu0 0
  %1688 = vmatpush1.bf16.msra.mxu0 0
  %1689 = vmatprep.subr.bf16.mxu0 0
  %1690 = vmatpush1.bf16.msra.mxu0 0
  %1691 = vmatprep.subr.bf16.mxu0 0
  %1692 = vmatpush1.bf16.msra.mxu0 0
  %1693 = vmatprep.subr.bf16.mxu0 0
  %1694 = vmatpush1.bf16.msra.mxu0 %v1671
  %1695 = vmatprep.subr.bf16.mxu0 0
  %1696 = vmatpush2.bf16.msra.mxu0 0
  %1697 = vmatprep.subr.bf16.mxu0 0
  %1698 = vmatpush2.bf16.msra.mxu0 0
  %1699 = vmatprep.subr.bf16.mxu0 0
  %1700 = vmatpush2.bf16.msra.mxu0 0
  %1701 = vmatprep.subr.bf16.mxu0 0
  %1702 = vmatpush2.bf16.msra.mxu0 0
  %1703 = vmatprep.subr.bf16.mxu0 0
  %1704 = vmatpush2.bf16.msra.mxu0 0
  %1705 = vmatprep.subr.bf16.mxu0 0
  %1706 = vmatpush2.bf16.msra.mxu0 0
  %1707 = vmatprep.subr.bf16.mxu0 0
  %1708 = vmatpush2.bf16.msra.mxu0 0
  %1709 = vmatprep.subr.bf16.mxu0 0
  %1710 = vmatpush2.bf16.msra.mxu0 0
  %1711 = vmatprep.mubr.bf16.mxu0 0
  %1712 = vmatmul.mubr.bf16.gmra.mxu0 %v1674
  %v1713 = vpop.f32.mrf.mxu0
  %v1714 = vadd.f32 0.0, %v1713
  %v1715 = vpop.f32.mrf.mxu0
  %v1716 = vpop.f32.mrf.mxu0
  %v1717 = vadd.f32 0.0, %v1716
  %v1718 = vpop.f32.mrf.mxu0
  %1719 = vmatprep.mubr.bf16.mxu0 0
  %1720 = vmatmul.mubr.bf16.gmra.mxu0 %v1677
  %v1721 = vpop.f32.mrf.mxu0
  %v1722 = vadd.f32 0.0, %v1721
  %v1723 = vpop.f32.mrf.mxu0
  %v1724 = vpop.f32.mrf.mxu0
  %v1725 = vadd.f32 0.0, %v1724
  %v1726 = vpop.f32.mrf.mxu0
  %1727 = vdwg.mxu0
  %v1728 = vadd.f32 %v1616, %v1714
  %v1729 = vadd.f32 %v1619, %v1717
  %v1730 = vadd.f32 %v1624, %v1722
  %v1731 = vadd.f32 %v1627, %v1725
  %v1732 = vld [vmem:[%s21] sm:$0x1]
  %v1734 = vlaneseq
  %v1735 = vshrl.u32 %v1734, 7
  %v1736 = vsub.s32 0, %v1735
  %v1737 = vrot.slane %v1732, %v1736
  %v1739 = vadd.f32 %v1728, %v1737
  %v1740 = vadd.f32 %v1729, %v1737
  %v1741 = vadd.f32 %v1730, %v1737
  %v1742 = vadd.f32 %v1731, %v1737
  %v1743 = vadd.f32 %v1739, %v1411
  %v1744 = vadd.f32 %v1740, %v1412
  %v1745 = vadd.f32 %v1741, %v1413
  %v1746 = vadd.f32 %v1742, %v1414
  %v1747 = vmax.f32 %v1743, 0.0
  %v1748 = vmax.f32 %v1744, 0.0
  %v1749 = vmax.f32 %v1745, 0.0
  %v1750 = vmax.f32 %v1746, 0.0
  %v1751 = vpack.c.bf16 %v1748, %v1747
  %v1752 = vpack.c.bf16 %v1750, %v1749
  %v1755 = vunpack.c.l.b16 %v1751
  %v1756 = vunpack.c.h.b16 %v1751
  %v1757 = vunpack.c.l.b16 %v1752
  %v1758 = vunpack.c.h.b16 %v1752
  %v1759 = vpack.c.b16 %v1755, %v1755
  %v1760 = vpack.c.b16 %v1756, %v1756
  %v1761 = vpack.c.b16 %v1757, %v1757
  %v1762 = vpack.c.b16 %v1758, %v1758
  %1767 = vst.msk [vmem:[#allocation2 + $0x4] sm:$0xf] %vm418, %v1759
  %1768 = vst.msk [vmem:[#allocation2 + $0x8] sm:$0xf] %vm418, %v1760
  %1769 = vst.msk [vmem:[#allocation2 + $0x14] sm:$0xf] %vm418, %v1761
  %1770 = vst.msk [vmem:[#allocation2 + $0x18] sm:$0xf] %vm418, %v1762
  %v1771 = vld [vmem:[#allocation2] sm:$0x8]
  %v1772 = vld [vmem:[#allocation2 + $0x4] sm:$0xf]
  %v1773 = vld [vmem:[#allocation2 + $0x8] sm:$0xf]
  %v1774 = vld [vmem:[#allocation2 + $0x10] sm:$0x8]
  %v1775 = vld [vmem:[#allocation2 + $0x14] sm:$0xf]
  %v1776 = vld [vmem:[#allocation2 + $0x18] sm:$0xf]
  %v1777 = vld [vmem:[#allocation2 + $0xc] sm:$0x1]
  %v1778 = vld [vmem:[#allocation2 + $0x1c] sm:$0x1]
  %v1780 = vshrl.u32 %v1771, 16
  %v1782 = vrot.slane %v1780, 7
  %v1783 = vrot.slane %v1782, 4
  %v1785 = vshrl.u32 %v1772, 16
  %v1787 = vrot.slane %v1785, 7
  %v1788 = vshll.u32 %v1772, 16
  %v1790 = vor.u32 %v1787, %v1788
  %v1791 = vsel %vm369, %v1783, %v1790
  %v1792 = vrot.slane %v1787, 4
  %v1794 = vshrl.u32 %v1773, 16
  %v1796 = vrot.slane %v1794, 7
  %v1797 = vshll.u32 %v1773, 16
  %v1799 = vor.u32 %v1796, %v1797
  %v1800 = vsel %vm369, %v1792, %v1799
  %v1802 = vshrl.u32 %v1774, 16
  %v1804 = vrot.slane %v1802, 7
  %v1805 = vrot.slane %v1804, 4
  %v1807 = vshrl.u32 %v1775, 16
  %v1809 = vrot.slane %v1807, 7
  %v1810 = vshll.u32 %v1775, 16
  %v1812 = vor.u32 %v1809, %v1810
  %v1813 = vsel %vm369, %v1805, %v1812
  %v1814 = vrot.slane %v1809, 4
  %v1816 = vshrl.u32 %v1776, 16
  %v1818 = vrot.slane %v1816, 7
  %v1819 = vshll.u32 %v1776, 16
  %v1821 = vor.u32 %v1818, %v1819
  %v1822 = vsel %vm369, %v1814, %v1821
  %v1823 = vld [vmem:[%s23] sm:$0xf]
  %v1824 = vld [vmem:[%s23 + $0x4] sm:$0xf]
  %s1825 = scalar_lea.vmem %s23, 8
  %v1826 = vld [vmem:[%s1825] sm:$0xf]
  %v1827 = vld [vmem:[%s1825 + $0x4] sm:$0xf]
  %v1832 = vunpack.c.l.b16 %v1772
  %v1833 = vunpack.c.l.b16 %v1773
  %v1834 = vunpack.c.l.b16 %v1775
  %v1835 = vunpack.c.l.b16 %v1776
  %v1836 = vpack.c.b16 %v1833, %v1832
  %v1837 = vpack.c.b16 %v1835, %v1834
  %v1840 = vunpack.c.l.b16 %v1826
  %v1841 = vunpack.c.l.b16 %v1827
  %v1842 = vpack.c.b16 %v1841, %v1840
  %v1845 = vsel %vm496, %v1836, 0
  %v1848 = vsel %vm496, %v1837, 0
  %1850 = vmatprep.subr.bf16.mxu0 0
  %1851 = vmatpush1.bf16.msra.mxu0 0
  %1852 = vmatprep.subr.bf16.mxu0 0
  %1853 = vmatpush1.bf16.msra.mxu0 0
  %1854 = vmatprep.subr.bf16.mxu0 0
  %1855 = vmatpush1.bf16.msra.mxu0 0
  %1856 = vmatprep.subr.bf16.mxu0 0
  %1857 = vmatpush1.bf16.msra.mxu0 0
  %1858 = vmatprep.subr.bf16.mxu0 0
  %1859 = vmatpush1.bf16.msra.mxu0 0
  %1860 = vmatprep.subr.bf16.mxu0 0
  %1861 = vmatpush1.bf16.msra.mxu0 0
  %1862 = vmatprep.subr.bf16.mxu0 0
  %1863 = vmatpush1.bf16.msra.mxu0 0
  %1864 = vmatprep.subr.bf16.mxu0 0
  %1865 = vmatpush1.bf16.msra.mxu0 %v1842
  %1866 = vmatprep.subr.bf16.mxu0 0
  %1867 = vmatpush2.bf16.msra.mxu0 0
  %1868 = vmatprep.subr.bf16.mxu0 0
  %1869 = vmatpush2.bf16.msra.mxu0 0
  %1870 = vmatprep.subr.bf16.mxu0 0
  %1871 = vmatpush2.bf16.msra.mxu0 0
  %1872 = vmatprep.subr.bf16.mxu0 0
  %1873 = vmatpush2.bf16.msra.mxu0 0
  %1874 = vmatprep.subr.bf16.mxu0 0
  %1875 = vmatpush2.bf16.msra.mxu0 0
  %1876 = vmatprep.subr.bf16.mxu0 0
  %1877 = vmatpush2.bf16.msra.mxu0 0
  %1878 = vmatprep.subr.bf16.mxu0 0
  %1879 = vmatpush2.bf16.msra.mxu0 0
  %1880 = vmatprep.subr.bf16.mxu0 0
  %1881 = vmatpush2.bf16.msra.mxu0 0
  %1882 = vmatprep.mubr.bf16.mxu0 0
  %1883 = vmatmul.mubr.bf16.gmra.mxu0 %v1845
  %v1884 = vpop.f32.mrf.mxu0
  %v1885 = vadd.f32 0.0, %v1884
  %v1886 = vpop.f32.mrf.mxu0
  %v1887 = vpop.f32.mrf.mxu0
  %v1888 = vadd.f32 0.0, %v1887
  %v1889 = vpop.f32.mrf.mxu0
  %1890 = vmatprep.mubr.bf16.mxu0 0
  %1891 = vmatmul.mubr.bf16.gmra.mxu0 %v1848
  %v1892 = vpop.f32.mrf.mxu0
  %v1893 = vadd.f32 0.0, %v1892
  %v1894 = vpop.f32.mrf.mxu0
  %v1895 = vpop.f32.mrf.mxu0
  %v1896 = vadd.f32 0.0, %v1895
  %v1897 = vpop.f32.mrf.mxu0
  %1898 = vdwg.mxu0
  %v1899 = vunpack.c.l.b16 %v1791
  %v1900 = vunpack.c.l.b16 %v1800
  %v1901 = vunpack.c.l.b16 %v1813
  %v1902 = vunpack.c.l.b16 %v1822
  %v1903 = vpack.c.b16 %v1900, %v1899
  %v1904 = vpack.c.b16 %v1902, %v1901
  %v1907 = vunpack.c.l.b16 %v1823
  %v1908 = vunpack.c.l.b16 %v1824
  %v1909 = vpack.c.b16 %v1908, %v1907
  %v1912 = vsel %vm496, %v1903, 0
  %v1915 = vsel %vm496, %v1904, 0
  %1917 = vmatprep.subr.bf16.mxu0 0
  %1918 = vmatpush1.bf16.msra.mxu0 0
  %1919 = vmatprep.subr.bf16.mxu0 0
  %1920 = vmatpush1.bf16.msra.mxu0 0
  %1921 = vmatprep.subr.bf16.mxu0 0
  %1922 = vmatpush1.bf16.msra.mxu0 0
  %1923 = vmatprep.subr.bf16.mxu0 0
  %1924 = vmatpush1.bf16.msra.mxu0 0
  %1925 = vmatprep.subr.bf16.mxu0 0
  %1926 = vmatpush1.bf16.msra.mxu0 0
  %1927 = vmatprep.subr.bf16.mxu0 0
  %1928 = vmatpush1.bf16.msra.mxu0 0
  %1929 = vmatprep.subr.bf16.mxu0 0
  %1930 = vmatpush1.bf16.msra.mxu0 0
  %1931 = vmatprep.subr.bf16.mxu0 0
  %1932 = vmatpush1.bf16.msra.mxu0 %v1909
  %1933 = vmatprep.subr.bf16.mxu0 0
  %1934 = vmatpush2.bf16.msra.mxu0 0
  %1935 = vmatprep.subr.bf16.mxu0 0
  %1936 = vmatpush2.bf16.msra.mxu0 0
  %1937 = vmatprep.subr.bf16.mxu0 0
  %1938 = vmatpush2.bf16.msra.mxu0 0
  %1939 = vmatprep.subr.bf16.mxu0 0
  %1940 = vmatpush2.bf16.msra.mxu0 0
  %1941 = vmatprep.subr.bf16.mxu0 0
  %1942 = vmatpush2.bf16.msra.mxu0 0
  %1943 = vmatprep.subr.bf16.mxu0 0
  %1944 = vmatpush2.bf16.msra.mxu0 0
  %1945 = vmatprep.subr.bf16.mxu0 0
  %1946 = vmatpush2.bf16.msra.mxu0 0
  %1947 = vmatprep.subr.bf16.mxu0 0
  %1948 = vmatpush2.bf16.msra.mxu0 0
  %1949 = vmatprep.mubr.bf16.mxu0 0
  %1950 = vmatmul.mubr.bf16.gmra.mxu0 %v1912
  %v1951 = vpop.f32.mrf.mxu0
  %v1952 = vadd.f32 %v1885, %v1951
  %v1953 = vpop.f32.mrf.mxu0
  %v1954 = vpop.f32.mrf.mxu0
  %v1955 = vadd.f32 %v1888, %v1954
  %v1956 = vpop.f32.mrf.mxu0
  %1957 = vmatprep.mubr.bf16.mxu0 0
  %1958 = vmatmul.mubr.bf16.gmra.mxu0 %v1915
  %v1959 = vpop.f32.mrf.mxu0
  %v1960 = vadd.f32 %v1893, %v1959
  %v1961 = vpop.f32.mrf.mxu0
  %v1962 = vpop.f32.mrf.mxu0
  %v1963 = vadd.f32 %v1896, %v1962
  %v1964 = vpop.f32.mrf.mxu0
  %1965 = vdwg.mxu0
  %v1966 = vrot.slane %v1785, 4
  %v1967 = vrot.slane %v1788, 5
  %v1968 = vor.u32 %v1966, %v1967
  %v1969 = vrot.slane %v1968, 4
  %v1970 = vrot.slane %v1797, 5
  %v1971 = vsel %vm621, %v1969, %v1970
  %v1972 = vrot.slane %v1794, 4
  %v1973 = vor.u32 %v1972, %v1970
  %v1974 = vrot.slane %v1973, 4
  %v1976 = vshll.u32 %v1777, 16
  %v1978 = vrot.slane %v1976, 5
  %v1979 = vsel %vm621, %v1974, %v1978
  %v1980 = vrot.slane %v1807, 4
  %v1981 = vrot.slane %v1810, 5
  %v1982 = vor.u32 %v1980, %v1981
  %v1983 = vrot.slane %v1982, 4
  %v1984 = vrot.slane %v1819, 5
  %v1985 = vsel %vm621, %v1983, %v1984
  %v1986 = vrot.slane %v1816, 4
  %v1987 = vor.u32 %v1986, %v1984
  %v1988 = vrot.slane %v1987, 4
  %v1990 = vshll.u32 %v1778, 16
  %v1992 = vrot.slane %v1990, 5
  %v1993 = vsel %vm621, %v1988, %v1992
  %s1994 = scalar_lea.vmem %s23, 16
  %v1995 = vld [vmem:[%s1994] sm:$0xf]
  %v1996 = vld [vmem:[%s1994 + $0x4] sm:$0xf]
  %v1997 = vunpack.c.l.b16 %v1971
  %v1998 = vunpack.c.l.b16 %v1979
  %v1999 = vunpack.c.l.b16 %v1985
  %v2000 = vunpack.c.l.b16 %v1993
  %v2001 = vpack.c.b16 %v1998, %v1997
  %v2002 = vpack.c.b16 %v2000, %v1999
  %v2005 = vunpack.c.l.b16 %v1995
  %v2006 = vunpack.c.l.b16 %v1996
  %v2007 = vpack.c.b16 %v2006, %v2005
  %v2010 = vsel %vm496, %v2001, 0
  %v2013 = vsel %vm496, %v2002, 0
  %2015 = vmatprep.subr.bf16.mxu0 0
  %2016 = vmatpush1.bf16.msra.mxu0 0
  %2017 = vmatprep.subr.bf16.mxu0 0
  %2018 = vmatpush1.bf16.msra.mxu0 0
  %2019 = vmatprep.subr.bf16.mxu0 0
  %2020 = vmatpush1.bf16.msra.mxu0 0
  %2021 = vmatprep.subr.bf16.mxu0 0
  %2022 = vmatpush1.bf16.msra.mxu0 0
  %2023 = vmatprep.subr.bf16.mxu0 0
  %2024 = vmatpush1.bf16.msra.mxu0 0
  %2025 = vmatprep.subr.bf16.mxu0 0
  %2026 = vmatpush1.bf16.msra.mxu0 0
  %2027 = vmatprep.subr.bf16.mxu0 0
  %2028 = vmatpush1.bf16.msra.mxu0 0
  %2029 = vmatprep.subr.bf16.mxu0 0
  %2030 = vmatpush1.bf16.msra.mxu0 %v2007
  %2031 = vmatprep.subr.bf16.mxu0 0
  %2032 = vmatpush2.bf16.msra.mxu0 0
  %2033 = vmatprep.subr.bf16.mxu0 0
  %2034 = vmatpush2.bf16.msra.mxu0 0
  %2035 = vmatprep.subr.bf16.mxu0 0
  %2036 = vmatpush2.bf16.msra.mxu0 0
  %2037 = vmatprep.subr.bf16.mxu0 0
  %2038 = vmatpush2.bf16.msra.mxu0 0
  %2039 = vmatprep.subr.bf16.mxu0 0
  %2040 = vmatpush2.bf16.msra.mxu0 0
  %2041 = vmatprep.subr.bf16.mxu0 0
  %2042 = vmatpush2.bf16.msra.mxu0 0
  %2043 = vmatprep.subr.bf16.mxu0 0
  %2044 = vmatpush2.bf16.msra.mxu0 0
  %2045 = vmatprep.subr.bf16.mxu0 0
  %2046 = vmatpush2.bf16.msra.mxu0 0
  %2047 = vmatprep.mubr.bf16.mxu0 0
  %2048 = vmatmul.mubr.bf16.gmra.mxu0 %v2010
  %v2049 = vpop.f32.mrf.mxu0
  %v2050 = vadd.f32 0.0, %v2049
  %v2051 = vpop.f32.mrf.mxu0
  %v2052 = vpop.f32.mrf.mxu0
  %v2053 = vadd.f32 0.0, %v2052
  %v2054 = vpop.f32.mrf.mxu0
  %2055 = vmatprep.mubr.bf16.mxu0 0
  %2056 = vmatmul.mubr.bf16.gmra.mxu0 %v2013
  %v2057 = vpop.f32.mrf.mxu0
  %v2058 = vadd.f32 0.0, %v2057
  %v2059 = vpop.f32.mrf.mxu0
  %v2060 = vpop.f32.mrf.mxu0
  %v2061 = vadd.f32 0.0, %v2060
  %v2062 = vpop.f32.mrf.mxu0
  %2063 = vdwg.mxu0
  %v2064 = vadd.f32 %v1952, %v2050
  %v2065 = vadd.f32 %v1955, %v2053
  %v2066 = vadd.f32 %v1960, %v2058
  %v2067 = vadd.f32 %v1963, %v2061
  %v2068 = vld [vmem:[%s25] sm:$0x1]
  %v2070 = vlaneseq
  %v2071 = vshrl.u32 %v2070, 7
  %v2072 = vsub.s32 0, %v2071
  %v2073 = vrot.slane %v2068, %v2072
  %v2075 = vadd.f32 %v2064, %v2073
  %v2076 = vadd.f32 %v2065, %v2073
  %v2077 = vadd.f32 %v2066, %v2073
  %v2078 = vadd.f32 %v2067, %v2073
  %v2079 = vmax.f32 %v2075, 0.0
  %v2080 = vmax.f32 %v2076, 0.0
  %v2081 = vmax.f32 %v2077, 0.0
  %v2082 = vmax.f32 %v2078, 0.0
  %v2083 = vld [vmem:[%s31] sm:$0xf]
  %v2084 = vld [vmem:[%s31 + $0x4] sm:$0xf]
  %v2085 = vld [vmem:[%s33] sm:$0x1]
  %v2087 = vlaneseq
  %v2088 = vshrl.u32 %v2087, 7
  %v2089 = vsub.s32 0, %v2088
  %v2090 = vrot.slane %v2085, %v2089
  %v2094 = vunpack.c.l.b16 %v2083
  %v2095 = vunpack.c.l.b16 %v2084
  %v2096 = vpack.c.b16 %v2095, %v2094
  %2098 = vmatprep.subr.bf16.mxu0 0
  %2099 = vmatpush1.bf16.msra.mxu0 0
  %2100 = vmatprep.subr.bf16.mxu0 0
  %2101 = vmatpush1.bf16.msra.mxu0 0
  %2102 = vmatprep.subr.bf16.mxu0 0
  %2103 = vmatpush1.bf16.msra.mxu0 0
  %2104 = vmatprep.subr.bf16.mxu0 0
  %2105 = vmatpush1.bf16.msra.mxu0 0
  %2106 = vmatprep.subr.bf16.mxu0 0
  %2107 = vmatpush1.bf16.msra.mxu0 0
  %2108 = vmatprep.subr.bf16.mxu0 0
  %2109 = vmatpush1.bf16.msra.mxu0 0
  %2110 = vmatprep.subr.bf16.mxu0 0
  %2111 = vmatpush1.bf16.msra.mxu0 0
  %2112 = vmatprep.subr.bf16.mxu0 0
  %2113 = vmatpush1.bf16.msra.mxu0 %v2096
  %2114 = vmatprep.subr.bf16.mxu0 0
  %2115 = vmatpush2.bf16.msra.mxu0 0
  %2116 = vmatprep.subr.bf16.mxu0 0
  %2117 = vmatpush2.bf16.msra.mxu0 0
  %2118 = vmatprep.subr.bf16.mxu0 0
  %2119 = vmatpush2.bf16.msra.mxu0 0
  %2120 = vmatprep.subr.bf16.mxu0 0
  %2121 = vmatpush2.bf16.msra.mxu0 0
  %2122 = vmatprep.subr.bf16.mxu0 0
  %2123 = vmatpush2.bf16.msra.mxu0 0
  %2124 = vmatprep.subr.bf16.mxu0 0
  %2125 = vmatpush2.bf16.msra.mxu0 0
  %2126 = vmatprep.subr.bf16.mxu0 0
  %2127 = vmatpush2.bf16.msra.mxu0 0
  %2128 = vmatprep.subr.bf16.mxu0 0
  %2129 = vmatpush2.bf16.msra.mxu0 0
  %2130 = vmatprep.mubr.bf16.mxu0 0
  %2131 = vmatmul.mubr.bf16.gmra.mxu0 %v1845
  %v2132 = vpop.f32.mrf.mxu0
  %v2133 = vadd.f32 %v2090, %v2132
  %v2134 = vpop.f32.mrf.mxu0
  %v2135 = vpop.f32.mrf.mxu0
  %v2136 = vadd.f32 %v2090, %v2135
  %v2137 = vpop.f32.mrf.mxu0
  %2138 = vmatprep.mubr.bf16.mxu0 0
  %2139 = vmatmul.mubr.bf16.gmra.mxu0 %v1848
  %v2140 = vpop.f32.mrf.mxu0
  %v2141 = vadd.f32 %v2090, %v2140
  %v2142 = vpop.f32.mrf.mxu0
  %v2143 = vpop.f32.mrf.mxu0
  %v2144 = vadd.f32 %v2090, %v2143
  %v2145 = vpop.f32.mrf.mxu0
  %2146 = vdwg.mxu0
  %v2147 = vpack.c.bf16 %v2080, %v2079
  %v2148 = vpack.c.bf16 %v2082, %v2081
  %v2151 = vunpack.c.l.b16 %v2147
  %v2152 = vunpack.c.h.b16 %v2147
  %v2153 = vunpack.c.l.b16 %v2148
  %v2154 = vunpack.c.h.b16 %v2148
  %v2155 = vpack.c.b16 %v2151, %v2151
  %v2156 = vpack.c.b16 %v2152, %v2152
  %v2157 = vpack.c.b16 %v2153, %v2153
  %v2158 = vpack.c.b16 %v2154, %v2154
  %vm2163 = vcmask 257024
  %2164 = vst.msk [vmem:[#allocation2 + $0x4] sm:$0xf] %vm2163, %v2155
  %2165 = vst.msk [vmem:[#allocation2 + $0x8] sm:$0xf] %vm2163, %v2156
  %2166 = vst.msk [vmem:[#allocation2 + $0x14] sm:$0xf] %vm2163, %v2157
  %2167 = vst.msk [vmem:[#allocation2 + $0x18] sm:$0xf] %vm2163, %v2158
  %v2168 = vld [vmem:[#allocation2] sm:$0x8]
  %v2169 = vld [vmem:[#allocation2 + $0x4] sm:$0xf]
  %v2170 = vld [vmem:[#allocation2 + $0x8] sm:$0xf]
  %v2171 = vld [vmem:[#allocation2 + $0x10] sm:$0x8]
  %v2172 = vld [vmem:[#allocation2 + $0x14] sm:$0xf]
  %v2173 = vld [vmem:[#allocation2 + $0x18] sm:$0xf]
  %v2174 = vld [vmem:[#allocation2 + $0xc] sm:$0x1]
  %v2175 = vld [vmem:[#allocation2 + $0x1c] sm:$0x1]
  %v2177 = vshrl.u32 %v2168, 16
  %v2179 = vrot.slane %v2177, 7
  %v2180 = vrot.slane %v2179, 4
  %v2182 = vshrl.u32 %v2169, 16
  %v2184 = vrot.slane %v2182, 7
  %v2185 = vshll.u32 %v2169, 16
  %v2187 = vor.u32 %v2184, %v2185
  %v2188 = vsel %vm369, %v2180, %v2187
  %v2189 = vrot.slane %v2184, 4
  %v2191 = vshrl.u32 %v2170, 16
  %v2193 = vrot.slane %v2191, 7
  %v2194 = vshll.u32 %v2170, 16
  %v2196 = vor.u32 %v2193, %v2194
  %v2197 = vsel %vm369, %v2189, %v2196
  %v2199 = vshrl.u32 %v2171, 16
  %v2201 = vrot.slane %v2199, 7
  %v2202 = vrot.slane %v2201, 4
  %v2204 = vshrl.u32 %v2172, 16
  %v2206 = vrot.slane %v2204, 7
  %v2207 = vshll.u32 %v2172, 16
  %v2209 = vor.u32 %v2206, %v2207
  %v2210 = vsel %vm369, %v2202, %v2209
  %v2211 = vrot.slane %v2206, 4
  %v2213 = vshrl.u32 %v2173, 16
  %v2215 = vrot.slane %v2213, 7
  %v2216 = vshll.u32 %v2173, 16
  %v2218 = vor.u32 %v2215, %v2216
  %v2219 = vsel %vm369, %v2211, %v2218
  %v2220 = vld [vmem:[%s27] sm:$0xf]
  %v2221 = vld [vmem:[%s27 + $0x4] sm:$0xf]
  %v2222 = vld [vmem:[%s27 + $0x8] sm:$0xf]
  %v2223 = vld [vmem:[%s27 + $0xc] sm:$0xf]
  %s2224 = scalar_lea.vmem %s27, 16
  %v2225 = vld [vmem:[%s2224] sm:$0xf]
  %v2226 = vld [vmem:[%s2224 + $0x4] sm:$0xf]
  %v2227 = vld [vmem:[%s2224 + $0x8] sm:$0xf]
  %v2228 = vld [vmem:[%s2224 + $0xc] sm:$0xf]
  %v2233 = vunpack.c.l.b16 %v2169
  %v2234 = vunpack.c.l.b16 %v2170
  %v2235 = vunpack.c.l.b16 %v2172
  %v2236 = vunpack.c.l.b16 %v2173
  %v2237 = vpack.c.b16 %v2234, %v2233
  %v2238 = vpack.c.b16 %v2236, %v2235
  %v2243 = vunpack.c.l.b16 %v2225
  %v2244 = vunpack.c.l.b16 %v2226
  %v2245 = vunpack.c.l.b16 %v2227
  %v2246 = vunpack.c.l.b16 %v2228
  %v2247 = vpack.c.b16 %v2244, %v2243
  %v2248 = vpack.c.b16 %v2246, %v2245
  %vm2251 = vcmask 261120
  %v2253 = vsel %vm2251, %v2237, 0
  %v2256 = vsel %vm2251, %v2238, 0
  %2258 = vmatprep.subr.bf16.mxu0 0
  %2259 = vmatpush1.bf16.msra.mxu0 0
  %2260 = vmatprep.subr.bf16.mxu0 0
  %2261 = vmatpush1.bf16.msra.mxu0 0
  %2262 = vmatprep.subr.bf16.mxu0 0
  %2263 = vmatpush1.bf16.msra.mxu0 0
  %2264 = vmatprep.subr.bf16.mxu0 0
  %2265 = vmatpush1.bf16.msra.mxu0 0
  %2266 = vmatprep.subr.bf16.mxu0 0
  %2267 = vmatpush1.bf16.msra.mxu0 0
  %2268 = vmatprep.subr.bf16.mxu0 0
  %2269 = vmatpush1.bf16.msra.mxu0 0
  %2270 = vmatprep.subr.bf16.mxu0 0
  %2271 = vmatpush1.bf16.msra.mxu0 %v2248
  %2272 = vmatprep.subr.bf16.mxu0 0
  %2273 = vmatpush1.bf16.msra.mxu0 %v2247
  %2274 = vmatprep.subr.bf16.mxu0 0
  %2275 = vmatpush2.bf16.msra.mxu0 0
  %2276 = vmatprep.subr.bf16.mxu0 0
  %2277 = vmatpush2.bf16.msra.mxu0 0
  %2278 = vmatprep.subr.bf16.mxu0 0
  %2279 = vmatpush2.bf16.msra.mxu0 0
  %2280 = vmatprep.subr.bf16.mxu0 0
  %2281 = vmatpush2.bf16.msra.mxu0 0
  %2282 = vmatprep.subr.bf16.mxu0 0
  %2283 = vmatpush2.bf16.msra.mxu0 0
  %2284 = vmatprep.subr.bf16.mxu0 0
  %2285 = vmatpush2.bf16.msra.mxu0 0
  %2286 = vmatprep.subr.bf16.mxu0 0
  %2287 = vmatpush2.bf16.msra.mxu0 0
  %2288 = vmatprep.subr.bf16.mxu0 0
  %2289 = vmatpush2.bf16.msra.mxu0 0
  %2290 = vmatprep.mubr.bf16.mxu0 0
  %2291 = vmatmul.mubr.bf16.gmra.mxu0 %v2253
  %v2292 = vpop.f32.mrf.mxu0
  %v2293 = vadd.f32 0.0, %v2292
  %v2294 = vpop.f32.mrf.mxu0
  %v2295 = vpop.f32.mrf.mxu0
  %v2296 = vadd.f32 0.0, %v2295
  %v2297 = vpop.f32.mrf.mxu0
  %2298 = vmatprep.mubr.bf16.mxu0 0
  %2299 = vmatmul.mubr.bf16.gmra.mxu0 %v2256
  %v2300 = vpop.f32.mrf.mxu0
  %v2301 = vadd.f32 0.0, %v2300
  %v2302 = vpop.f32.mrf.mxu0
  %v2303 = vpop.f32.mrf.mxu0
  %v2304 = vadd.f32 0.0, %v2303
  %v2305 = vpop.f32.mrf.mxu0
  %2306 = vdwg.mxu0
  %v2307 = vunpack.c.l.b16 %v2188
  %v2308 = vunpack.c.l.b16 %v2197
  %v2309 = vunpack.c.l.b16 %v2210
  %v2310 = vunpack.c.l.b16 %v2219
  %v2311 = vpack.c.b16 %v2308, %v2307
  %v2312 = vpack.c.b16 %v2310, %v2309
  %v2317 = vunpack.c.l.b16 %v2220
  %v2318 = vunpack.c.l.b16 %v2221
  %v2319 = vunpack.c.l.b16 %v2222
  %v2320 = vunpack.c.l.b16 %v2223
  %v2321 = vpack.c.b16 %v2318, %v2317
  %v2322 = vpack.c.b16 %v2320, %v2319
  %v2326 = vsel %vm2251, %v2311, 0
  %v2329 = vsel %vm2251, %v2312, 0
  %2331 = vmatprep.subr.bf16.mxu0 0
  %2332 = vmatpush1.bf16.msra.mxu0 0
  %2333 = vmatprep.subr.bf16.mxu0 0
  %2334 = vmatpush1.bf16.msra.mxu0 0
  %2335 = vmatprep.subr.bf16.mxu0 0
  %2336 = vmatpush1.bf16.msra.mxu0 0
  %2337 = vmatprep.subr.bf16.mxu0 0
  %2338 = vmatpush1.bf16.msra.mxu0 0
  %2339 = vmatprep.subr.bf16.mxu0 0
  %2340 = vmatpush1.bf16.msra.mxu0 0
  %2341 = vmatprep.subr.bf16.mxu0 0
  %2342 = vmatpush1.bf16.msra.mxu0 0
  %2343 = vmatprep.subr.bf16.mxu0 0
  %2344 = vmatpush1.bf16.msra.mxu0 %v2322
  %2345 = vmatprep.subr.bf16.mxu0 0
  %2346 = vmatpush1.bf16.msra.mxu0 %v2321
  %2347 = vmatprep.subr.bf16.mxu0 0
  %2348 = vmatpush2.bf16.msra.mxu0 0
  %2349 = vmatprep.subr.bf16.mxu0 0
  %2350 = vmatpush2.bf16.msra.mxu0 0
  %2351 = vmatprep.subr.bf16.mxu0 0
  %2352 = vmatpush2.bf16.msra.mxu0 0
  %2353 = vmatprep.subr.bf16.mxu0 0
  %2354 = vmatpush2.bf16.msra.mxu0 0
  %2355 = vmatprep.subr.bf16.mxu0 0
  %2356 = vmatpush2.bf16.msra.mxu0 0
  %2357 = vmatprep.subr.bf16.mxu0 0
  %2358 = vmatpush2.bf16.msra.mxu0 0
  %2359 = vmatprep.subr.bf16.mxu0 0
  %2360 = vmatpush2.bf16.msra.mxu0 0
  %2361 = vmatprep.subr.bf16.mxu0 0
  %2362 = vmatpush2.bf16.msra.mxu0 0
  %2363 = vmatprep.mubr.bf16.mxu0 0
  %2364 = vmatmul.mubr.bf16.gmra.mxu0 %v2326
  %v2365 = vpop.f32.mrf.mxu0
  %v2366 = vadd.f32 %v2293, %v2365
  %v2367 = vpop.f32.mrf.mxu0
  %v2368 = vpop.f32.mrf.mxu0
  %v2369 = vadd.f32 %v2296, %v2368
  %v2370 = vpop.f32.mrf.mxu0
  %2371 = vmatprep.mubr.bf16.mxu0 0
  %2372 = vmatmul.mubr.bf16.gmra.mxu0 %v2329
  %v2373 = vpop.f32.mrf.mxu0
  %v2374 = vadd.f32 %v2301, %v2373
  %v2375 = vpop.f32.mrf.mxu0
  %v2376 = vpop.f32.mrf.mxu0
  %v2377 = vadd.f32 %v2304, %v2376
  %v2378 = vpop.f32.mrf.mxu0
  %2379 = vdwg.mxu0
  %v2380 = vrot.slane %v2182, 4
  %v2381 = vrot.slane %v2185, 5
  %v2382 = vor.u32 %v2380, %v2381
  %v2383 = vrot.slane %v2382, 4
  %v2384 = vrot.slane %v2194, 5
  %v2385 = vsel %vm621, %v2383, %v2384
  %v2386 = vrot.slane %v2191, 4
  %v2387 = vor.u32 %v2386, %v2384
  %v2388 = vrot.slane %v2387, 4
  %v2390 = vshll.u32 %v2174, 16
  %v2392 = vrot.slane %v2390, 5
  %v2393 = vsel %vm621, %v2388, %v2392
  %v2394 = vrot.slane %v2204, 4
  %v2395 = vrot.slane %v2207, 5
  %v2396 = vor.u32 %v2394, %v2395
  %v2397 = vrot.slane %v2396, 4
  %v2398 = vrot.slane %v2216, 5
  %v2399 = vsel %vm621, %v2397, %v2398
  %v2400 = vrot.slane %v2213, 4
  %v2401 = vor.u32 %v2400, %v2398
  %v2402 = vrot.slane %v2401, 4
  %v2404 = vshll.u32 %v2175, 16
  %v2406 = vrot.slane %v2404, 5
  %v2407 = vsel %vm621, %v2402, %v2406
  %s2408 = scalar_lea.vmem %s27, 32
  %v2409 = vld [vmem:[%s2408] sm:$0xf]
  %v2410 = vld [vmem:[%s2408 + $0x4] sm:$0xf]
  %v2411 = vld [vmem:[%s2408 + $0x8] sm:$0xf]
  %v2412 = vld [vmem:[%s2408 + $0xc] sm:$0xf]
  %v2413 = vunpack.c.l.b16 %v2385
  %v2414 = vunpack.c.l.b16 %v2393
  %v2415 = vunpack.c.l.b16 %v2399
  %v2416 = vunpack.c.l.b16 %v2407
  %v2417 = vpack.c.b16 %v2414, %v2413
  %v2418 = vpack.c.b16 %v2416, %v2415
  %v2423 = vunpack.c.l.b16 %v2409
  %v2424 = vunpack.c.l.b16 %v2410
  %v2425 = vunpack.c.l.b16 %v2411
  %v2426 = vunpack.c.l.b16 %v2412
  %v2427 = vpack.c.b16 %v2424, %v2423
  %v2428 = vpack.c.b16 %v2426, %v2425
  %v2432 = vsel %vm2251, %v2417, 0
  %v2435 = vsel %vm2251, %v2418, 0
  %2437 = vmatprep.subr.bf16.mxu0 0
  %2438 = vmatpush1.bf16.msra.mxu0 0
  %2439 = vmatprep.subr.bf16.mxu0 0
  %2440 = vmatpush1.bf16.msra.mxu0 0
  %2441 = vmatprep.subr.bf16.mxu0 0
  %2442 = vmatpush1.bf16.msra.mxu0 0
  %2443 = vmatprep.subr.bf16.mxu0 0
  %2444 = vmatpush1.bf16.msra.mxu0 0
  %2445 = vmatprep.subr.bf16.mxu0 0
  %2446 = vmatpush1.bf16.msra.mxu0 0
  %2447 = vmatprep.subr.bf16.mxu0 0
  %2448 = vmatpush1.bf16.msra.mxu0 0
  %2449 = vmatprep.subr.bf16.mxu0 0
  %2450 = vmatpush1.bf16.msra.mxu0 %v2428
  %2451 = vmatprep.subr.bf16.mxu0 0
  %2452 = vmatpush1.bf16.msra.mxu0 %v2427
  %2453 = vmatprep.subr.bf16.mxu0 0
  %2454 = vmatpush2.bf16.msra.mxu0 0
  %2455 = vmatprep.subr.bf16.mxu0 0
  %2456 = vmatpush2.bf16.msra.mxu0 0
  %2457 = vmatprep.subr.bf16.mxu0 0
  %2458 = vmatpush2.bf16.msra.mxu0 0
  %2459 = vmatprep.subr.bf16.mxu0 0
  %2460 = vmatpush2.bf16.msra.mxu0 0
  %2461 = vmatprep.subr.bf16.mxu0 0
  %2462 = vmatpush2.bf16.msra.mxu0 0
  %2463 = vmatprep.subr.bf16.mxu0 0
  %2464 = vmatpush2.bf16.msra.mxu0 0
  %2465 = vmatprep.subr.bf16.mxu0 0
  %2466 = vmatpush2.bf16.msra.mxu0 0
  %2467 = vmatprep.subr.bf16.mxu0 0
  %2468 = vmatpush2.bf16.msra.mxu0 0
  %2469 = vmatprep.mubr.bf16.mxu0 0
  %2470 = vmatmul.mubr.bf16.gmra.mxu0 %v2432
  %v2471 = vpop.f32.mrf.mxu0
  %v2472 = vadd.f32 0.0, %v2471
  %v2473 = vpop.f32.mrf.mxu0
  %v2474 = vpop.f32.mrf.mxu0
  %v2475 = vadd.f32 0.0, %v2474
  %v2476 = vpop.f32.mrf.mxu0
  %2477 = vmatprep.mubr.bf16.mxu0 0
  %2478 = vmatmul.mubr.bf16.gmra.mxu0 %v2435
  %v2479 = vpop.f32.mrf.mxu0
  %v2480 = vadd.f32 0.0, %v2479
  %v2481 = vpop.f32.mrf.mxu0
  %v2482 = vpop.f32.mrf.mxu0
  %v2483 = vadd.f32 0.0, %v2482
  %v2484 = vpop.f32.mrf.mxu0
  %2485 = vdwg.mxu0
  %v2486 = vadd.f32 %v2366, %v2472
  %v2487 = vadd.f32 %v2369, %v2475
  %v2488 = vadd.f32 %v2374, %v2480
  %v2489 = vadd.f32 %v2377, %v2483
  %v2490 = vld [vmem:[%s29] sm:$0x1]
  %v2492 = vlaneseq
  %v2493 = vshrl.u32 %v2492, 7
  %v2494 = vsub.s32 0, %v2493
  %v2495 = vrot.slane %v2490, %v2494
  %v2497 = vadd.f32 %v2486, %v2495
  %v2498 = vadd.f32 %v2487, %v2495
  %v2499 = vadd.f32 %v2488, %v2495
  %v2500 = vadd.f32 %v2489, %v2495
  %v2501 = vadd.f32 %v2497, %v2133
  %v2502 = vadd.f32 %v2498, %v2136
  %v2503 = vadd.f32 %v2499, %v2141
  %v2504 = vadd.f32 %v2500, %v2144
  %v2505 = vmax.f32 %v2501, 0.0
  %v2506 = vmax.f32 %v2502, 0.0
  %v2507 = vmax.f32 %v2503, 0.0
  %v2508 = vmax.f32 %v2504, 0.0
  %v2509 = vpack.c.bf16 %v2506, %v2505
  %v2510 = vpack.c.bf16 %v2508, %v2507
  %v2513 = vunpack.c.l.b16 %v2509
  %v2514 = vunpack.c.h.b16 %v2509
  %v2515 = vunpack.c.l.b16 %v2510
  %v2516 = vunpack.c.h.b16 %v2510
  %v2517 = vpack.c.b16 %v2513, %v2513
  %v2518 = vpack.c.b16 %v2514, %v2514
  %v2519 = vpack.c.b16 %v2515, %v2515
  %v2520 = vpack.c.b16 %v2516, %v2516
  %2525 = vst.msk [vmem:[#allocation2 + $0x4] sm:$0xf] %vm2163, %v2517
  %2526 = vst.msk [vmem:[#allocation2 + $0x8] sm:$0xf] %vm2163, %v2518
  %2527 = vst.msk [vmem:[#allocation2 + $0x14] sm:$0xf] %vm2163, %v2519
  %2528 = vst.msk [vmem:[#allocation2 + $0x18] sm:$0xf] %vm2163, %v2520
  %v2529 = vld [vmem:[#allocation2] sm:$0x8]
  %v2530 = vld [vmem:[#allocation2 + $0x4] sm:$0xf]
  %v2531 = vld [vmem:[#allocation2 + $0x8] sm:$0xf]
  %v2532 = vld [vmem:[#allocation2 + $0x10] sm:$0x8]
  %v2533 = vld [vmem:[#allocation2 + $0x14] sm:$0xf]
  %v2534 = vld [vmem:[#allocation2 + $0x18] sm:$0xf]
  %v2535 = vld [vmem:[#allocation2 + $0xc] sm:$0x1]
  %v2536 = vld [vmem:[#allocation2 + $0x1c] sm:$0x1]
  %v2538 = vshrl.u32 %v2529, 16
  %v2540 = vrot.slane %v2538, 7
  %v2541 = vrot.slane %v2540, 4
  %v2543 = vshrl.u32 %v2530, 16
  %v2545 = vrot.slane %v2543, 7
  %v2546 = vshll.u32 %v2530, 16
  %v2548 = vor.u32 %v2545, %v2546
  %v2549 = vsel %vm369, %v2541, %v2548
  %v2550 = vrot.slane %v2545, 4
  %v2552 = vshrl.u32 %v2531, 16
  %v2554 = vrot.slane %v2552, 7
  %v2555 = vshll.u32 %v2531, 16
  %v2557 = vor.u32 %v2554, %v2555
  %v2558 = vsel %vm369, %v2550, %v2557
  %v2560 = vshrl.u32 %v2532, 16
  %v2562 = vrot.slane %v2560, 7
  %v2563 = vrot.slane %v2562, 4
  %v2565 = vshrl.u32 %v2533, 16
  %v2567 = vrot.slane %v2565, 7
  %v2568 = vshll.u32 %v2533, 16
  %v2570 = vor.u32 %v2567, %v2568
  %v2571 = vsel %vm369, %v2563, %v2570
  %v2572 = vrot.slane %v2567, 4
  %v2574 = vshrl.u32 %v2534, 16
  %v2576 = vrot.slane %v2574, 7
  %v2577 = vshll.u32 %v2534, 16
  %v2579 = vor.u32 %v2576, %v2577
  %v2580 = vsel %vm369, %v2572, %v2579
  %v2581 = vld [vmem:[%s35] sm:$0xf]
  %v2582 = vld [vmem:[%s35 + $0x4] sm:$0xf]
  %v2583 = vld [vmem:[%s35 + $0x8] sm:$0xf]
  %v2584 = vld [vmem:[%s35 + $0xc] sm:$0xf]
  %s2585 = scalar_lea.vmem %s35, 16
  %v2586 = vld [vmem:[%s2585] sm:$0xf]
  %v2587 = vld [vmem:[%s2585 + $0x4] sm:$0xf]
  %v2588 = vld [vmem:[%s2585 + $0x8] sm:$0xf]
  %v2589 = vld [vmem:[%s2585 + $0xc] sm:$0xf]
  %v2594 = vunpack.c.l.b16 %v2530
  %v2595 = vunpack.c.l.b16 %v2531
  %v2596 = vunpack.c.l.b16 %v2533
  %v2597 = vunpack.c.l.b16 %v2534
  %v2598 = vpack.c.b16 %v2595, %v2594
  %v2599 = vpack.c.b16 %v2597, %v2596
  %v2604 = vunpack.c.l.b16 %v2586
  %v2605 = vunpack.c.l.b16 %v2587
  %v2606 = vunpack.c.l.b16 %v2588
  %v2607 = vunpack.c.l.b16 %v2589
  %v2608 = vpack.c.b16 %v2605, %v2604
  %v2609 = vpack.c.b16 %v2607, %v2606
  %v2613 = vsel %vm2251, %v2598, 0
  %v2616 = vsel %vm2251, %v2599, 0
  %2618 = vmatprep.subr.bf16.mxu0 0
  %2619 = vmatpush1.bf16.msra.mxu0 0
  %2620 = vmatprep.subr.bf16.mxu0 0
  %2621 = vmatpush1.bf16.msra.mxu0 0
  %2622 = vmatprep.subr.bf16.mxu0 0
  %2623 = vmatpush1.bf16.msra.mxu0 0
  %2624 = vmatprep.subr.bf16.mxu0 0
  %2625 = vmatpush1.bf16.msra.mxu0 0
  %2626 = vmatprep.subr.bf16.mxu0 0
  %2627 = vmatpush1.bf16.msra.mxu0 0
  %2628 = vmatprep.subr.bf16.mxu0 0
  %2629 = vmatpush1.bf16.msra.mxu0 0
  %2630 = vmatprep.subr.bf16.mxu0 0
  %2631 = vmatpush1.bf16.msra.mxu0 %v2609
  %2632 = vmatprep.subr.bf16.mxu0 0
  %2633 = vmatpush1.bf16.msra.mxu0 %v2608
  %2634 = vmatprep.subr.bf16.mxu0 0
  %2635 = vmatpush2.bf16.msra.mxu0 0
  %2636 = vmatprep.subr.bf16.mxu0 0
  %2637 = vmatpush2.bf16.msra.mxu0 0
  %2638 = vmatprep.subr.bf16.mxu0 0
  %2639 = vmatpush2.bf16.msra.mxu0 0
  %2640 = vmatprep.subr.bf16.mxu0 0
  %2641 = vmatpush2.bf16.msra.mxu0 0
  %2642 = vmatprep.subr.bf16.mxu0 0
  %2643 = vmatpush2.bf16.msra.mxu0 0
  %2644 = vmatprep.subr.bf16.mxu0 0
  %2645 = vmatpush2.bf16.msra.mxu0 0
  %2646 = vmatprep.subr.bf16.mxu0 0
  %2647 = vmatpush2.bf16.msra.mxu0 0
  %2648 = vmatprep.subr.bf16.mxu0 0
  %2649 = vmatpush2.bf16.msra.mxu0 0
  %2650 = vmatprep.mubr.bf16.mxu0 0
  %2651 = vmatmul.mubr.bf16.gmra.mxu0 %v2613
  %v2652 = vpop.f32.mrf.mxu0
  %v2653 = vadd.f32 0.0, %v2652
  %v2654 = vpop.f32.mrf.mxu0
  %v2655 = vpop.f32.mrf.mxu0
  %v2656 = vadd.f32 0.0, %v2655
  %v2657 = vpop.f32.mrf.mxu0
  %2658 = vmatprep.mubr.bf16.mxu0 0
  %2659 = vmatmul.mubr.bf16.gmra.mxu0 %v2616
  %v2660 = vpop.f32.mrf.mxu0
  %v2661 = vadd.f32 0.0, %v2660
  %v2662 = vpop.f32.mrf.mxu0
  %v2663 = vpop.f32.mrf.mxu0
  %v2664 = vadd.f32 0.0, %v2663
  %v2665 = vpop.f32.mrf.mxu0
  %2666 = vdwg.mxu0
  %v2667 = vunpack.c.l.b16 %v2549
  %v2668 = vunpack.c.l.b16 %v2558
  %v2669 = vunpack.c.l.b16 %v2571
  %v2670 = vunpack.c.l.b16 %v2580
  %v2671 = vpack.c.b16 %v2668, %v2667
  %v2672 = vpack.c.b16 %v2670, %v2669
  %v2677 = vunpack.c.l.b16 %v2581
  %v2678 = vunpack.c.l.b16 %v2582
  %v2679 = vunpack.c.l.b16 %v2583
  %v2680 = vunpack.c.l.b16 %v2584
  %v2681 = vpack.c.b16 %v2678, %v2677
  %v2682 = vpack.c.b16 %v2680, %v2679
  %v2686 = vsel %vm2251, %v2671, 0
  %v2689 = vsel %vm2251, %v2672, 0
  %2691 = vmatprep.subr.bf16.mxu0 0
  %2692 = vmatpush1.bf16.msra.mxu0 0
  %2693 = vmatprep.subr.bf16.mxu0 0
  %2694 = vmatpush1.bf16.msra.mxu0 0
  %2695 = vmatprep.subr.bf16.mxu0 0
  %2696 = vmatpush1.bf16.msra.mxu0 0
  %2697 = vmatprep.subr.bf16.mxu0 0
  %2698 = vmatpush1.bf16.msra.mxu0 0
  %2699 = vmatprep.subr.bf16.mxu0 0
  %2700 = vmatpush1.bf16.msra.mxu0 0
  %2701 = vmatprep.subr.bf16.mxu0 0
  %2702 = vmatpush1.bf16.msra.mxu0 0
  %2703 = vmatprep.subr.bf16.mxu0 0
  %2704 = vmatpush1.bf16.msra.mxu0 %v2682
  %2705 = vmatprep.subr.bf16.mxu0 0
  %2706 = vmatpush1.bf16.msra.mxu0 %v2681
  %2707 = vmatprep.subr.bf16.mxu0 0
  %2708 = vmatpush2.bf16.msra.mxu0 0
  %2709 = vmatprep.subr.bf16.mxu0 0
  %2710 = vmatpush2.bf16.msra.mxu0 0
  %2711 = vmatprep.subr.bf16.mxu0 0
  %2712 = vmatpush2.bf16.msra.mxu0 0
  %2713 = vmatprep.subr.bf16.mxu0 0
  %2714 = vmatpush2.bf16.msra.mxu0 0
  %2715 = vmatprep.subr.bf16.mxu0 0
  %2716 = vmatpush2.bf16.msra.mxu0 0
  %2717 = vmatprep.subr.bf16.mxu0 0
  %2718 = vmatpush2.bf16.msra.mxu0 0
  %2719 = vmatprep.subr.bf16.mxu0 0
  %2720 = vmatpush2.bf16.msra.mxu0 0
  %2721 = vmatprep.subr.bf16.mxu0 0
  %2722 = vmatpush2.bf16.msra.mxu0 0
  %2723 = vmatprep.mubr.bf16.mxu0 0
  %2724 = vmatmul.mubr.bf16.gmra.mxu0 %v2686
  %v2725 = vpop.f32.mrf.mxu0
  %v2726 = vadd.f32 %v2653, %v2725
  %v2727 = vpop.f32.mrf.mxu0
  %v2728 = vpop.f32.mrf.mxu0
  %v2729 = vadd.f32 %v2656, %v2728
  %v2730 = vpop.f32.mrf.mxu0
  %2731 = vmatprep.mubr.bf16.mxu0 0
  %2732 = vmatmul.mubr.bf16.gmra.mxu0 %v2689
  %v2733 = vpop.f32.mrf.mxu0
  %v2734 = vadd.f32 %v2661, %v2733
  %v2735 = vpop.f32.mrf.mxu0
  %v2736 = vpop.f32.mrf.mxu0
  %v2737 = vadd.f32 %v2664, %v2736
  %v2738 = vpop.f32.mrf.mxu0
  %2739 = vdwg.mxu0
  %v2740 = vrot.slane %v2543, 4
  %v2741 = vrot.slane %v2546, 5
  %v2742 = vor.u32 %v2740, %v2741
  %v2743 = vrot.slane %v2742, 4
  %v2744 = vrot.slane %v2555, 5
  %v2745 = vsel %vm621, %v2743, %v2744
  %v2746 = vrot.slane %v2552, 4
  %v2747 = vor.u32 %v2746, %v2744
  %v2748 = vrot.slane %v2747, 4
  %v2750 = vshll.u32 %v2535, 16
  %v2752 = vrot.slane %v2750, 5
  %v2753 = vsel %vm621, %v2748, %v2752
  %v2754 = vrot.slane %v2565, 4
  %v2755 = vrot.slane %v2568, 5
  %v2756 = vor.u32 %v2754, %v2755
  %v2757 = vrot.slane %v2756, 4
  %v2758 = vrot.slane %v2577, 5
  %v2759 = vsel %vm621, %v2757, %v2758
  %v2760 = vrot.slane %v2574, 4
  %v2761 = vor.u32 %v2760, %v2758
  %v2762 = vrot.slane %v2761, 4
  %v2764 = vshll.u32 %v2536, 16
  %v2766 = vrot.slane %v2764, 5
  %v2767 = vsel %vm621, %v2762, %v2766
  %s2768 = scalar_lea.vmem %s35, 32
  %v2769 = vld [vmem:[%s2768] sm:$0xf]
  %v2770 = vld [vmem:[%s2768 + $0x4] sm:$0xf]
  %v2771 = vld [vmem:[%s2768 + $0x8] sm:$0xf]
  %v2772 = vld [vmem:[%s2768 + $0xc] sm:$0xf]
  %v2773 = vunpack.c.l.b16 %v2745
  %v2774 = vunpack.c.l.b16 %v2753
  %v2775 = vunpack.c.l.b16 %v2759
  %v2776 = vunpack.c.l.b16 %v2767
  %v2777 = vpack.c.b16 %v2774, %v2773
  %v2778 = vpack.c.b16 %v2776, %v2775
  %v2783 = vunpack.c.l.b16 %v2769
  %v2784 = vunpack.c.l.b16 %v2770
  %v2785 = vunpack.c.l.b16 %v2771
  %v2786 = vunpack.c.l.b16 %v2772
  %v2787 = vpack.c.b16 %v2784, %v2783
  %v2788 = vpack.c.b16 %v2786, %v2785
  %v2792 = vsel %vm2251, %v2777, 0
  %v2795 = vsel %vm2251, %v2778, 0
  %2797 = vmatprep.subr.bf16.mxu0 0
  %2798 = vmatpush1.bf16.msra.mxu0 0
  %2799 = vmatprep.subr.bf16.mxu0 0
  %2800 = vmatpush1.bf16.msra.mxu0 0
  %2801 = vmatprep.subr.bf16.mxu0 0
  %2802 = vmatpush1.bf16.msra.mxu0 0
  %2803 = vmatprep.subr.bf16.mxu0 0
  %2804 = vmatpush1.bf16.msra.mxu0 0
  %2805 = vmatprep.subr.bf16.mxu0 0
  %2806 = vmatpush1.bf16.msra.mxu0 0
  %2807 = vmatprep.subr.bf16.mxu0 0
  %2808 = vmatpush1.bf16.msra.mxu0 0
  %2809 = vmatprep.subr.bf16.mxu0 0
  %2810 = vmatpush1.bf16.msra.mxu0 %v2788
  %2811 = vmatprep.subr.bf16.mxu0 0
  %2812 = vmatpush1.bf16.msra.mxu0 %v2787
  %2813 = vmatprep.subr.bf16.mxu0 0
  %2814 = vmatpush2.bf16.msra.mxu0 0
  %2815 = vmatprep.subr.bf16.mxu0 0
  %2816 = vmatpush2.bf16.msra.mxu0 0
  %2817 = vmatprep.subr.bf16.mxu0 0
  %2818 = vmatpush2.bf16.msra.mxu0 0
  %2819 = vmatprep.subr.bf16.mxu0 0
  %2820 = vmatpush2.bf16.msra.mxu0 0
  %2821 = vmatprep.subr.bf16.mxu0 0
  %2822 = vmatpush2.bf16.msra.mxu0 0
  %2823 = vmatprep.subr.bf16.mxu0 0
  %2824 = vmatpush2.bf16.msra.mxu0 0
  %2825 = vmatprep.subr.bf16.mxu0 0
  %2826 = vmatpush2.bf16.msra.mxu0 0
  %2827 = vmatprep.subr.bf16.mxu0 0
  %2828 = vmatpush2.bf16.msra.mxu0 0
  %2829 = vmatprep.mubr.bf16.mxu0 0
  %2830 = vmatmul.mubr.bf16.gmra.mxu0 %v2792
  %v2831 = vpop.f32.mrf.mxu0
  %v2832 = vadd.f32 0.0, %v2831
  %v2833 = vpop.f32.mrf.mxu0
  %v2834 = vpop.f32.mrf.mxu0
  %v2835 = vadd.f32 0.0, %v2834
  %v2836 = vpop.f32.mrf.mxu0
  %2837 = vmatprep.mubr.bf16.mxu0 0
  %2838 = vmatmul.mubr.bf16.gmra.mxu0 %v2795
  %v2839 = vpop.f32.mrf.mxu0
  %v2840 = vadd.f32 0.0, %v2839
  %v2841 = vpop.f32.mrf.mxu0
  %v2842 = vpop.f32.mrf.mxu0
  %v2843 = vadd.f32 0.0, %v2842
  %v2844 = vpop.f32.mrf.mxu0
  %2845 = vdwg.mxu0
  %v2846 = vadd.f32 %v2726, %v2832
  %v2847 = vadd.f32 %v2729, %v2835
  %v2848 = vadd.f32 %v2734, %v2840
  %v2849 = vadd.f32 %v2737, %v2843
  %v2850 = vld [vmem:[%s37] sm:$0x1]
  %v2852 = vlaneseq
  %v2853 = vshrl.u32 %v2852, 7
  %v2854 = vsub.s32 0, %v2853
  %v2855 = vrot.slane %v2850, %v2854
  %v2857 = vadd.f32 %v2846, %v2855
  %v2858 = vadd.f32 %v2847, %v2855
  %v2859 = vadd.f32 %v2848, %v2855
  %v2860 = vadd.f32 %v2849, %v2855
  %v2861 = vmax.f32 %v2857, 0.0
  %v2862 = vmax.f32 %v2858, 0.0
  %v2863 = vmax.f32 %v2859, 0.0
  %v2864 = vmax.f32 %v2860, 0.0
  %v2865 = vunpack.c.l.bf16 %v2530
  %v2866 = vunpack.c.l.bf16 %v2531
  %v2867 = vunpack.c.l.bf16 %v2533
  %v2868 = vunpack.c.l.bf16 %v2534
  %v2869 = vpack.c.bf16 %v2862, %v2861
  %v2870 = vpack.c.bf16 %v2864, %v2863
  %v2873 = vunpack.c.l.b16 %v2869
  %v2874 = vunpack.c.h.b16 %v2869
  %v2875 = vunpack.c.l.b16 %v2870
  %v2876 = vunpack.c.h.b16 %v2870
  %v2877 = vpack.c.b16 %v2873, %v2873
  %v2878 = vpack.c.b16 %v2874, %v2874
  %v2879 = vpack.c.b16 %v2875, %v2875
  %v2880 = vpack.c.b16 %v2876, %v2876
  %2885 = vst.msk [vmem:[#allocation2 + $0x4] sm:$0xf] %vm2163, %v2877
  %2886 = vst.msk [vmem:[#allocation2 + $0x8] sm:$0xf] %vm2163, %v2878
  %2887 = vst.msk [vmem:[#allocation2 + $0x14] sm:$0xf] %vm2163, %v2879
  %2888 = vst.msk [vmem:[#allocation2 + $0x18] sm:$0xf] %vm2163, %v2880
  %v2889 = vld [vmem:[#allocation2] sm:$0x8]
  %v2890 = vld [vmem:[#allocation2 + $0x4] sm:$0xf]
  %v2891 = vld [vmem:[#allocation2 + $0x8] sm:$0xf]
  %v2892 = vld [vmem:[#allocation2 + $0x10] sm:$0x8]
  %v2893 = vld [vmem:[#allocation2 + $0x14] sm:$0xf]
  %v2894 = vld [vmem:[#allocation2 + $0x18] sm:$0xf]
  %v2895 = vld [vmem:[#allocation2 + $0xc] sm:$0x1]
  %v2896 = vld [vmem:[#allocation2 + $0x1c] sm:$0x1]
  %v2898 = vshrl.u32 %v2889, 16
  %v2900 = vrot.slane %v2898, 7
  %v2901 = vrot.slane %v2900, 4
  %v2903 = vshrl.u32 %v2890, 16
  %v2905 = vrot.slane %v2903, 7
  %v2906 = vshll.u32 %v2890, 16
  %v2908 = vor.u32 %v2905, %v2906
  %v2909 = vsel %vm369, %v2901, %v2908
  %v2910 = vrot.slane %v2905, 4
  %v2912 = vshrl.u32 %v2891, 16
  %v2914 = vrot.slane %v2912, 7
  %v2915 = vshll.u32 %v2891, 16
  %v2917 = vor.u32 %v2914, %v2915
  %v2918 = vsel %vm369, %v2910, %v2917
  %v2920 = vshrl.u32 %v2892, 16
  %v2922 = vrot.slane %v2920, 7
  %v2923 = vrot.slane %v2922, 4
  %v2925 = vshrl.u32 %v2893, 16
  %v2927 = vrot.slane %v2925, 7
  %v2928 = vshll.u32 %v2893, 16
  %v2930 = vor.u32 %v2927, %v2928
  %v2931 = vsel %vm369, %v2923, %v2930
  %v2932 = vrot.slane %v2927, 4
  %v2934 = vshrl.u32 %v2894, 16
  %v2936 = vrot.slane %v2934, 7
  %v2937 = vshll.u32 %v2894, 16
  %v2939 = vor.u32 %v2936, %v2937
  %v2940 = vsel %vm369, %v2932, %v2939
  %v2941 = vld [vmem:[%s39] sm:$0xf]
  %v2942 = vld [vmem:[%s39 + $0x4] sm:$0xf]
  %v2943 = vld [vmem:[%s39 + $0x8] sm:$0xf]
  %v2944 = vld [vmem:[%s39 + $0xc] sm:$0xf]
  %s2945 = scalar_lea.vmem %s39, 16
  %v2946 = vld [vmem:[%s2945] sm:$0xf]
  %v2947 = vld [vmem:[%s2945 + $0x4] sm:$0xf]
  %v2948 = vld [vmem:[%s2945 + $0x8] sm:$0xf]
  %v2949 = vld [vmem:[%s2945 + $0xc] sm:$0xf]
  %v2954 = vunpack.c.l.b16 %v2890
  %v2955 = vunpack.c.l.b16 %v2891
  %v2956 = vunpack.c.l.b16 %v2893
  %v2957 = vunpack.c.l.b16 %v2894
  %v2958 = vpack.c.b16 %v2955, %v2954
  %v2959 = vpack.c.b16 %v2957, %v2956
  %v2964 = vunpack.c.l.b16 %v2946
  %v2965 = vunpack.c.l.b16 %v2947
  %v2966 = vunpack.c.l.b16 %v2948
  %v2967 = vunpack.c.l.b16 %v2949
  %v2968 = vpack.c.b16 %v2965, %v2964
  %v2969 = vpack.c.b16 %v2967, %v2966
  %v2973 = vsel %vm2251, %v2958, 0
  %v2976 = vsel %vm2251, %v2959, 0
  %2978 = vmatprep.subr.bf16.mxu0 0
  %2979 = vmatpush1.bf16.msra.mxu0 0
  %2980 = vmatprep.subr.bf16.mxu0 0
  %2981 = vmatpush1.bf16.msra.mxu0 0
  %2982 = vmatprep.subr.bf16.mxu0 0
  %2983 = vmatpush1.bf16.msra.mxu0 0
  %2984 = vmatprep.subr.bf16.mxu0 0
  %2985 = vmatpush1.bf16.msra.mxu0 0
  %2986 = vmatprep.subr.bf16.mxu0 0
  %2987 = vmatpush1.bf16.msra.mxu0 0
  %2988 = vmatprep.subr.bf16.mxu0 0
  %2989 = vmatpush1.bf16.msra.mxu0 0
  %2990 = vmatprep.subr.bf16.mxu0 0
  %2991 = vmatpush1.bf16.msra.mxu0 %v2969
  %2992 = vmatprep.subr.bf16.mxu0 0
  %2993 = vmatpush1.bf16.msra.mxu0 %v2968
  %2994 = vmatprep.subr.bf16.mxu0 0
  %2995 = vmatpush2.bf16.msra.mxu0 0
  %2996 = vmatprep.subr.bf16.mxu0 0
  %2997 = vmatpush2.bf16.msra.mxu0 0
  %2998 = vmatprep.subr.bf16.mxu0 0
  %2999 = vmatpush2.bf16.msra.mxu0 0
  %3000 = vmatprep.subr.bf16.mxu0 0
  %3001 = vmatpush2.bf16.msra.mxu0 0
  %3002 = vmatprep.subr.bf16.mxu0 0
  %3003 = vmatpush2.bf16.msra.mxu0 0
  %3004 = vmatprep.subr.bf16.mxu0 0
  %3005 = vmatpush2.bf16.msra.mxu0 0
  %3006 = vmatprep.subr.bf16.mxu0 0
  %3007 = vmatpush2.bf16.msra.mxu0 0
  %3008 = vmatprep.subr.bf16.mxu0 0
  %3009 = vmatpush2.bf16.msra.mxu0 0
  %3010 = vmatprep.mubr.bf16.mxu0 0
  %3011 = vmatmul.mubr.bf16.gmra.mxu0 %v2973
  %v3012 = vpop.f32.mrf.mxu0
  %v3013 = vadd.f32 0.0, %v3012
  %v3014 = vpop.f32.mrf.mxu0
  %v3015 = vpop.f32.mrf.mxu0
  %v3016 = vadd.f32 0.0, %v3015
  %v3017 = vpop.f32.mrf.mxu0
  %3018 = vmatprep.mubr.bf16.mxu0 0
  %3019 = vmatmul.mubr.bf16.gmra.mxu0 %v2976
  %v3020 = vpop.f32.mrf.mxu0
  %v3021 = vadd.f32 0.0, %v3020
  %v3022 = vpop.f32.mrf.mxu0
  %v3023 = vpop.f32.mrf.mxu0
  %v3024 = vadd.f32 0.0, %v3023
  %v3025 = vpop.f32.mrf.mxu0
  %3026 = vdwg.mxu0
  %v3027 = vunpack.c.l.b16 %v2909
  %v3028 = vunpack.c.l.b16 %v2918
  %v3029 = vunpack.c.l.b16 %v2931
  %v3030 = vunpack.c.l.b16 %v2940
  %v3031 = vpack.c.b16 %v3028, %v3027
  %v3032 = vpack.c.b16 %v3030, %v3029
  %v3037 = vunpack.c.l.b16 %v2941
  %v3038 = vunpack.c.l.b16 %v2942
  %v3039 = vunpack.c.l.b16 %v2943
  %v3040 = vunpack.c.l.b16 %v2944
  %v3041 = vpack.c.b16 %v3038, %v3037
  %v3042 = vpack.c.b16 %v3040, %v3039
  %v3046 = vsel %vm2251, %v3031, 0
  %v3049 = vsel %vm2251, %v3032, 0
  %3051 = vmatprep.subr.bf16.mxu0 0
  %3052 = vmatpush1.bf16.msra.mxu0 0
  %3053 = vmatprep.subr.bf16.mxu0 0
  %3054 = vmatpush1.bf16.msra.mxu0 0
  %3055 = vmatprep.subr.bf16.mxu0 0
  %3056 = vmatpush1.bf16.msra.mxu0 0
  %3057 = vmatprep.subr.bf16.mxu0 0
  %3058 = vmatpush1.bf16.msra.mxu0 0
  %3059 = vmatprep.subr.bf16.mxu0 0
  %3060 = vmatpush1.bf16.msra.mxu0 0
  %3061 = vmatprep.subr.bf16.mxu0 0
  %3062 = vmatpush1.bf16.msra.mxu0 0
  %3063 = vmatprep.subr.bf16.mxu0 0
  %3064 = vmatpush1.bf16.msra.mxu0 %v3042
  %3065 = vmatprep.subr.bf16.mxu0 0
  %3066 = vmatpush1.bf16.msra.mxu0 %v3041
  %3067 = vmatprep.subr.bf16.mxu0 0
  %3068 = vmatpush2.bf16.msra.mxu0 0
  %3069 = vmatprep.subr.bf16.mxu0 0
  %3070 = vmatpush2.bf16.msra.mxu0 0
  %3071 = vmatprep.subr.bf16.mxu0 0
  %3072 = vmatpush2.bf16.msra.mxu0 0
  %3073 = vmatprep.subr.bf16.mxu0 0
  %3074 = vmatpush2.bf16.msra.mxu0 0
  %3075 = vmatprep.subr.bf16.mxu0 0
  %3076 = vmatpush2.bf16.msra.mxu0 0
  %3077 = vmatprep.subr.bf16.mxu0 0
  %3078 = vmatpush2.bf16.msra.mxu0 0
  %3079 = vmatprep.subr.bf16.mxu0 0
  %3080 = vmatpush2.bf16.msra.mxu0 0
  %3081 = vmatprep.subr.bf16.mxu0 0
  %3082 = vmatpush2.bf16.msra.mxu0 0
  %3083 = vmatprep.mubr.bf16.mxu0 0
  %3084 = vmatmul.mubr.bf16.gmra.mxu0 %v3046
  %v3085 = vpop.f32.mrf.mxu0
  %v3086 = vadd.f32 %v3013, %v3085
  %v3087 = vpop.f32.mrf.mxu0
  %v3088 = vpop.f32.mrf.mxu0
  %v3089 = vadd.f32 %v3016, %v3088
  %v3090 = vpop.f32.mrf.mxu0
  %3091 = vmatprep.mubr.bf16.mxu0 0
  %3092 = vmatmul.mubr.bf16.gmra.mxu0 %v3049
  %v3093 = vpop.f32.mrf.mxu0
  %v3094 = vadd.f32 %v3021, %v3093
  %v3095 = vpop.f32.mrf.mxu0
  %v3096 = vpop.f32.mrf.mxu0
  %v3097 = vadd.f32 %v3024, %v3096
  %v3098 = vpop.f32.mrf.mxu0
  %3099 = vdwg.mxu0
  %v3100 = vrot.slane %v2903, 4
  %v3101 = vrot.slane %v2906, 5
  %v3102 = vor.u32 %v3100, %v3101
  %v3103 = vrot.slane %v3102, 4
  %v3104 = vrot.slane %v2915, 5
  %v3105 = vsel %vm621, %v3103, %v3104
  %v3106 = vrot.slane %v2912, 4
  %v3107 = vor.u32 %v3106, %v3104
  %v3108 = vrot.slane %v3107, 4
  %v3110 = vshll.u32 %v2895, 16
  %v3112 = vrot.slane %v3110, 5
  %v3113 = vsel %vm621, %v3108, %v3112
  %v3114 = vrot.slane %v2925, 4
  %v3115 = vrot.slane %v2928, 5
  %v3116 = vor.u32 %v3114, %v3115
  %v3117 = vrot.slane %v3116, 4
  %v3118 = vrot.slane %v2937, 5
  %v3119 = vsel %vm621, %v3117, %v3118
  %v3120 = vrot.slane %v2934, 4
  %v3121 = vor.u32 %v3120, %v3118
  %v3122 = vrot.slane %v3121, 4
  %v3124 = vshll.u32 %v2896, 16
  %v3126 = vrot.slane %v3124, 5
  %v3127 = vsel %vm621, %v3122, %v3126
  %s3128 = scalar_lea.vmem %s39, 32
  %v3129 = vld [vmem:[%s3128] sm:$0xf]
  %v3130 = vld [vmem:[%s3128 + $0x4] sm:$0xf]
  %v3131 = vld [vmem:[%s3128 + $0x8] sm:$0xf]
  %v3132 = vld [vmem:[%s3128 + $0xc] sm:$0xf]
  %v3133 = vunpack.c.l.b16 %v3105
  %v3134 = vunpack.c.l.b16 %v3113
  %v3135 = vunpack.c.l.b16 %v3119
  %v3136 = vunpack.c.l.b16 %v3127
  %v3137 = vpack.c.b16 %v3134, %v3133
  %v3138 = vpack.c.b16 %v3136, %v3135
  %v3143 = vunpack.c.l.b16 %v3129
  %v3144 = vunpack.c.l.b16 %v3130
  %v3145 = vunpack.c.l.b16 %v3131
  %v3146 = vunpack.c.l.b16 %v3132
  %v3147 = vpack.c.b16 %v3144, %v3143
  %v3148 = vpack.c.b16 %v3146, %v3145
  %v3152 = vsel %vm2251, %v3137, 0
  %v3155 = vsel %vm2251, %v3138, 0
  %3157 = vmatprep.subr.bf16.mxu0 0
  %3158 = vmatpush1.bf16.msra.mxu0 0
  %3159 = vmatprep.subr.bf16.mxu0 0
  %3160 = vmatpush1.bf16.msra.mxu0 0
  %3161 = vmatprep.subr.bf16.mxu0 0
  %3162 = vmatpush1.bf16.msra.mxu0 0
  %3163 = vmatprep.subr.bf16.mxu0 0
  %3164 = vmatpush1.bf16.msra.mxu0 0
  %3165 = vmatprep.subr.bf16.mxu0 0
  %3166 = vmatpush1.bf16.msra.mxu0 0
  %3167 = vmatprep.subr.bf16.mxu0 0
  %3168 = vmatpush1.bf16.msra.mxu0 0
  %3169 = vmatprep.subr.bf16.mxu0 0
  %3170 = vmatpush1.bf16.msra.mxu0 %v3148
  %3171 = vmatprep.subr.bf16.mxu0 0
  %3172 = vmatpush1.bf16.msra.mxu0 %v3147
  %3173 = vmatprep.subr.bf16.mxu0 0
  %3174 = vmatpush2.bf16.msra.mxu0 0
  %3175 = vmatprep.subr.bf16.mxu0 0
  %3176 = vmatpush2.bf16.msra.mxu0 0
  %3177 = vmatprep.subr.bf16.mxu0 0
  %3178 = vmatpush2.bf16.msra.mxu0 0
  %3179 = vmatprep.subr.bf16.mxu0 0
  %3180 = vmatpush2.bf16.msra.mxu0 0
  %3181 = vmatprep.subr.bf16.mxu0 0
  %3182 = vmatpush2.bf16.msra.mxu0 0
  %3183 = vmatprep.subr.bf16.mxu0 0
  %3184 = vmatpush2.bf16.msra.mxu0 0
  %3185 = vmatprep.subr.bf16.mxu0 0
  %3186 = vmatpush2.bf16.msra.mxu0 0
  %3187 = vmatprep.subr.bf16.mxu0 0
  %3188 = vmatpush2.bf16.msra.mxu0 0
  %3189 = vmatprep.mubr.bf16.mxu0 0
  %3190 = vmatmul.mubr.bf16.gmra.mxu0 %v3152
  %v3191 = vpop.f32.mrf.mxu0
  %v3192 = vadd.f32 0.0, %v3191
  %v3193 = vpop.f32.mrf.mxu0
  %v3194 = vpop.f32.mrf.mxu0
  %v3195 = vadd.f32 0.0, %v3194
  %v3196 = vpop.f32.mrf.mxu0
  %3197 = vmatprep.mubr.bf16.mxu0 0
  %3198 = vmatmul.mubr.bf16.gmra.mxu0 %v3155
  %v3199 = vpop.f32.mrf.mxu0
  %v3200 = vadd.f32 0.0, %v3199
  %v3201 = vpop.f32.mrf.mxu0
  %v3202 = vpop.f32.mrf.mxu0
  %v3203 = vadd.f32 0.0, %v3202
  %v3204 = vpop.f32.mrf.mxu0
  %3205 = vdwg.mxu0
  %v3206 = vadd.f32 %v3086, %v3192
  %v3207 = vadd.f32 %v3089, %v3195
  %v3208 = vadd.f32 %v3094, %v3200
  %v3209 = vadd.f32 %v3097, %v3203
  %v3210 = vld [vmem:[%s41] sm:$0x1]
  %v3212 = vlaneseq
  %v3213 = vshrl.u32 %v3212, 7
  %v3214 = vsub.s32 0, %v3213
  %v3215 = vrot.slane %v3210, %v3214
  %v3217 = vadd.f32 %v3206, %v3215
  %v3218 = vadd.f32 %v3207, %v3215
  %v3219 = vadd.f32 %v3208, %v3215
  %v3220 = vadd.f32 %v3209, %v3215
  %v3221 = vadd.f32 %v3217, %v2865
  %v3222 = vadd.f32 %v3218, %v2866
  %v3223 = vadd.f32 %v3219, %v2867
  %v3224 = vadd.f32 %v3220, %v2868
  %v3225 = vmax.f32 %v3221, 0.0
  %v3226 = vmax.f32 %v3222, 0.0
  %v3227 = vmax.f32 %v3223, 0.0
  %v3228 = vmax.f32 %v3224, 0.0
  %v3229 = vpack.c.bf16 %v3226, %v3225
  %v3230 = vpack.c.bf16 %v3228, %v3227
  %v3233 = vunpack.c.l.b16 %v3229
  %v3234 = vunpack.c.h.b16 %v3229
  %v3235 = vunpack.c.l.b16 %v3230
  %v3236 = vunpack.c.h.b16 %v3230
  %v3237 = vpack.c.b16 %v3233, %v3233
  %v3238 = vpack.c.b16 %v3234, %v3234
  %v3239 = vpack.c.b16 %v3235, %v3235
  %v3240 = vpack.c.b16 %v3236, %v3236
  %3245 = vst.msk [vmem:[#allocation2 + $0x4] sm:$0xf] %vm2163, %v3237
  %3246 = vst.msk [vmem:[#allocation2 + $0x8] sm:$0xf] %vm2163, %v3238
  %3247 = vst.msk [vmem:[#allocation2 + $0x14] sm:$0xf] %vm2163, %v3239
  %3248 = vst.msk [vmem:[#allocation2 + $0x18] sm:$0xf] %vm2163, %v3240
  %v3249 = vld [vmem:[#allocation2] sm:$0x8]
  %v3250 = vld [vmem:[#allocation2 + $0x4] sm:$0xf]
  %v3251 = vld [vmem:[#allocation2 + $0x8] sm:$0xf]
  %v3252 = vld [vmem:[#allocation2 + $0x10] sm:$0x8]
  %v3253 = vld [vmem:[#allocation2 + $0x14] sm:$0xf]
  %v3254 = vld [vmem:[#allocation2 + $0x18] sm:$0xf]
  %v3255 = vld [vmem:[#allocation2 + $0xc] sm:$0x1]
  %v3256 = vld [vmem:[#allocation2 + $0x1c] sm:$0x1]
  %v3258 = vshrl.u32 %v3249, 16
  %v3260 = vrot.slane %v3258, 7
  %v3261 = vrot.slane %v3260, 4
  %v3263 = vshrl.u32 %v3250, 16
  %v3265 = vrot.slane %v3263, 7
  %v3266 = vshll.u32 %v3250, 16
  %v3268 = vor.u32 %v3265, %v3266
  %v3269 = vsel %vm369, %v3261, %v3268
  %v3270 = vrot.slane %v3265, 4
  %v3272 = vshrl.u32 %v3251, 16
  %v3274 = vrot.slane %v3272, 7
  %v3275 = vshll.u32 %v3251, 16
  %v3277 = vor.u32 %v3274, %v3275
  %v3278 = vsel %vm369, %v3270, %v3277
  %v3280 = vshrl.u32 %v3252, 16
  %v3282 = vrot.slane %v3280, 7
  %v3283 = vrot.slane %v3282, 4
  %v3285 = vshrl.u32 %v3253, 16
  %v3287 = vrot.slane %v3285, 7
  %v3288 = vshll.u32 %v3253, 16
  %v3290 = vor.u32 %v3287, %v3288
  %v3291 = vsel %vm369, %v3283, %v3290
  %v3292 = vrot.slane %v3287, 4
  %v3294 = vshrl.u32 %v3254, 16
  %v3296 = vrot.slane %v3294, 7
  %v3297 = vshll.u32 %v3254, 16
  %v3299 = vor.u32 %v3296, %v3297
  %v3300 = vsel %vm369, %v3292, %v3299
  %v3301 = vld [vmem:[%s43] sm:$0xf]
  %v3302 = vld [vmem:[%s43 + $0x4] sm:$0xf]
  %v3303 = vld [vmem:[%s43 + $0x8] sm:$0xf]
  %v3304 = vld [vmem:[%s43 + $0xc] sm:$0xf]
  %s3305 = scalar_lea.vmem %s43, 16
  %v3306 = vld [vmem:[%s3305] sm:$0xf]
  %v3307 = vld [vmem:[%s3305 + $0x4] sm:$0xf]
  %v3308 = vld [vmem:[%s3305 + $0x8] sm:$0xf]
  %v3309 = vld [vmem:[%s3305 + $0xc] sm:$0xf]
  %v3314 = vunpack.c.l.b16 %v3250
  %v3315 = vunpack.c.l.b16 %v3251
  %v3316 = vunpack.c.l.b16 %v3253
  %v3317 = vunpack.c.l.b16 %v3254
  %v3318 = vpack.c.b16 %v3315, %v3314
  %v3319 = vpack.c.b16 %v3317, %v3316
  %v3324 = vunpack.c.l.b16 %v3306
  %v3325 = vunpack.c.l.b16 %v3307
  %v3326 = vunpack.c.l.b16 %v3308
  %v3327 = vunpack.c.l.b16 %v3309
  %v3328 = vpack.c.b16 %v3325, %v3324
  %v3329 = vpack.c.b16 %v3327, %v3326
  %v3333 = vsel %vm2251, %v3318, 0
  %v3336 = vsel %vm2251, %v3319, 0
  %3338 = vmatprep.subr.bf16.mxu0 0
  %3339 = vmatpush1.bf16.msra.mxu0 0
  %3340 = vmatprep.subr.bf16.mxu0 0
  %3341 = vmatpush1.bf16.msra.mxu0 0
  %3342 = vmatprep.subr.bf16.mxu0 0
  %3343 = vmatpush1.bf16.msra.mxu0 0
  %3344 = vmatprep.subr.bf16.mxu0 0
  %3345 = vmatpush1.bf16.msra.mxu0 0
  %3346 = vmatprep.subr.bf16.mxu0 0
  %3347 = vmatpush1.bf16.msra.mxu0 0
  %3348 = vmatprep.subr.bf16.mxu0 0
  %3349 = vmatpush1.bf16.msra.mxu0 0
  %3350 = vmatprep.subr.bf16.mxu0 0
  %3351 = vmatpush1.bf16.msra.mxu0 %v3329
  %3352 = vmatprep.subr.bf16.mxu0 0
  %3353 = vmatpush1.bf16.msra.mxu0 %v3328
  %3354 = vmatprep.subr.bf16.mxu0 0
  %3355 = vmatpush2.bf16.msra.mxu0 0
  %3356 = vmatprep.subr.bf16.mxu0 0
  %3357 = vmatpush2.bf16.msra.mxu0 0
  %3358 = vmatprep.subr.bf16.mxu0 0
  %3359 = vmatpush2.bf16.msra.mxu0 0
  %3360 = vmatprep.subr.bf16.mxu0 0
  %3361 = vmatpush2.bf16.msra.mxu0 0
  %3362 = vmatprep.subr.bf16.mxu0 0
  %3363 = vmatpush2.bf16.msra.mxu0 0
  %3364 = vmatprep.subr.bf16.mxu0 0
  %3365 = vmatpush2.bf16.msra.mxu0 0
  %3366 = vmatprep.subr.bf16.mxu0 0
  %3367 = vmatpush2.bf16.msra.mxu0 0
  %3368 = vmatprep.subr.bf16.mxu0 0
  %3369 = vmatpush2.bf16.msra.mxu0 0
  %3370 = vmatprep.mubr.bf16.mxu0 0
  %3371 = vmatmul.mubr.bf16.gmra.mxu0 %v3333
  %v3372 = vpop.f32.mrf.mxu0
  %v3373 = vadd.f32 0.0, %v3372
  %v3374 = vpop.f32.mrf.mxu0
  %v3375 = vpop.f32.mrf.mxu0
  %v3376 = vadd.f32 0.0, %v3375
  %v3377 = vpop.f32.mrf.mxu0
  %3378 = vmatprep.mubr.bf16.mxu0 0
  %3379 = vmatmul.mubr.bf16.gmra.mxu0 %v3336
  %v3380 = vpop.f32.mrf.mxu0
  %v3381 = vadd.f32 0.0, %v3380
  %v3382 = vpop.f32.mrf.mxu0
  %v3383 = vpop.f32.mrf.mxu0
  %v3384 = vadd.f32 0.0, %v3383
  %v3385 = vpop.f32.mrf.mxu0
  %3386 = vdwg.mxu0
  %v3387 = vunpack.c.l.b16 %v3269
  %v3388 = vunpack.c.l.b16 %v3278
  %v3389 = vunpack.c.l.b16 %v3291
  %v3390 = vunpack.c.l.b16 %v3300
  %v3391 = vpack.c.b16 %v3388, %v3387
  %v3392 = vpack.c.b16 %v3390, %v3389
  %v3397 = vunpack.c.l.b16 %v3301
  %v3398 = vunpack.c.l.b16 %v3302
  %v3399 = vunpack.c.l.b16 %v3303
  %v3400 = vunpack.c.l.b16 %v3304
  %v3401 = vpack.c.b16 %v3398, %v3397
  %v3402 = vpack.c.b16 %v3400, %v3399
  %v3406 = vsel %vm2251, %v3391, 0
  %v3409 = vsel %vm2251, %v3392, 0
  %3411 = vmatprep.subr.bf16.mxu0 0
  %3412 = vmatpush1.bf16.msra.mxu0 0
  %3413 = vmatprep.subr.bf16.mxu0 0
  %3414 = vmatpush1.bf16.msra.mxu0 0
  %3415 = vmatprep.subr.bf16.mxu0 0
  %3416 = vmatpush1.bf16.msra.mxu0 0
  %3417 = vmatprep.subr.bf16.mxu0 0
  %3418 = vmatpush1.bf16.msra.mxu0 0
  %3419 = vmatprep.subr.bf16.mxu0 0
  %3420 = vmatpush1.bf16.msra.mxu0 0
  %3421 = vmatprep.subr.bf16.mxu0 0
  %3422 = vmatpush1.bf16.msra.mxu0 0
  %3423 = vmatprep.subr.bf16.mxu0 0
  %3424 = vmatpush1.bf16.msra.mxu0 %v3402
  %3425 = vmatprep.subr.bf16.mxu0 0
  %3426 = vmatpush1.bf16.msra.mxu0 %v3401
  %3427 = vmatprep.subr.bf16.mxu0 0
  %3428 = vmatpush2.bf16.msra.mxu0 0
  %3429 = vmatprep.subr.bf16.mxu0 0
  %3430 = vmatpush2.bf16.msra.mxu0 0
  %3431 = vmatprep.subr.bf16.mxu0 0
  %3432 = vmatpush2.bf16.msra.mxu0 0
  %3433 = vmatprep.subr.bf16.mxu0 0
  %3434 = vmatpush2.bf16.msra.mxu0 0
  %3435 = vmatprep.subr.bf16.mxu0 0
  %3436 = vmatpush2.bf16.msra.mxu0 0
  %3437 = vmatprep.subr.bf16.mxu0 0
  %3438 = vmatpush2.bf16.msra.mxu0 0
  %3439 = vmatprep.subr.bf16.mxu0 0
  %3440 = vmatpush2.bf16.msra.mxu0 0
  %3441 = vmatprep.subr.bf16.mxu0 0
  %3442 = vmatpush2.bf16.msra.mxu0 0
  %3443 = vmatprep.mubr.bf16.mxu0 0
  %3444 = vmatmul.mubr.bf16.gmra.mxu0 %v3406
  %v3445 = vpop.f32.mrf.mxu0
  %v3446 = vadd.f32 %v3373, %v3445
  %v3447 = vpop.f32.mrf.mxu0
  %v3448 = vpop.f32.mrf.mxu0
  %v3449 = vadd.f32 %v3376, %v3448
  %v3450 = vpop.f32.mrf.mxu0
  %3451 = vmatprep.mubr.bf16.mxu0 0
  %3452 = vmatmul.mubr.bf16.gmra.mxu0 %v3409
  %v3453 = vpop.f32.mrf.mxu0
  %v3454 = vadd.f32 %v3381, %v3453
  %v3455 = vpop.f32.mrf.mxu0
  %v3456 = vpop.f32.mrf.mxu0
  %v3457 = vadd.f32 %v3384, %v3456
  %v3458 = vpop.f32.mrf.mxu0
  %3459 = vdwg.mxu0
  %v3460 = vrot.slane %v3263, 4
  %v3461 = vrot.slane %v3266, 5
  %v3462 = vor.u32 %v3460, %v3461
  %v3463 = vrot.slane %v3462, 4
  %v3464 = vrot.slane %v3275, 5
  %v3465 = vsel %vm621, %v3463, %v3464
  %v3466 = vrot.slane %v3272, 4
  %v3467 = vor.u32 %v3466, %v3464
  %v3468 = vrot.slane %v3467, 4
  %v3470 = vshll.u32 %v3255, 16
  %v3472 = vrot.slane %v3470, 5
  %v3473 = vsel %vm621, %v3468, %v3472
  %v3474 = vrot.slane %v3285, 4
  %v3475 = vrot.slane %v3288, 5
  %v3476 = vor.u32 %v3474, %v3475
  %v3477 = vrot.slane %v3476, 4
  %v3478 = vrot.slane %v3297, 5
  %v3479 = vsel %vm621, %v3477, %v3478
  %v3480 = vrot.slane %v3294, 4
  %v3481 = vor.u32 %v3480, %v3478
  %v3482 = vrot.slane %v3481, 4
  %v3484 = vshll.u32 %v3256, 16
  %v3486 = vrot.slane %v3484, 5
  %v3487 = vsel %vm621, %v3482, %v3486
  %s3488 = scalar_lea.vmem %s43, 32
  %v3489 = vld [vmem:[%s3488] sm:$0xf]
  %v3490 = vld [vmem:[%s3488 + $0x4] sm:$0xf]
  %v3491 = vld [vmem:[%s3488 + $0x8] sm:$0xf]
  %v3492 = vld [vmem:[%s3488 + $0xc] sm:$0xf]
  %v3493 = vunpack.c.l.b16 %v3465
  %v3494 = vunpack.c.l.b16 %v3473
  %v3495 = vunpack.c.l.b16 %v3479
  %v3496 = vunpack.c.l.b16 %v3487
  %v3497 = vpack.c.b16 %v3494, %v3493
  %v3498 = vpack.c.b16 %v3496, %v3495
  %v3503 = vunpack.c.l.b16 %v3489
  %v3504 = vunpack.c.l.b16 %v3490
  %v3505 = vunpack.c.l.b16 %v3491
  %v3506 = vunpack.c.l.b16 %v3492
  %v3507 = vpack.c.b16 %v3504, %v3503
  %v3508 = vpack.c.b16 %v3506, %v3505
  %v3512 = vsel %vm2251, %v3497, 0
  %v3515 = vsel %vm2251, %v3498, 0
  %3517 = vmatprep.subr.bf16.mxu0 0
  %3518 = vmatpush1.bf16.msra.mxu0 0
  %3519 = vmatprep.subr.bf16.mxu0 0
  %3520 = vmatpush1.bf16.msra.mxu0 0
  %3521 = vmatprep.subr.bf16.mxu0 0
  %3522 = vmatpush1.bf16.msra.mxu0 0
  %3523 = vmatprep.subr.bf16.mxu0 0
  %3524 = vmatpush1.bf16.msra.mxu0 0
  %3525 = vmatprep.subr.bf16.mxu0 0
  %3526 = vmatpush1.bf16.msra.mxu0 0
  %3527 = vmatprep.subr.bf16.mxu0 0
  %3528 = vmatpush1.bf16.msra.mxu0 0
  %3529 = vmatprep.subr.bf16.mxu0 0
  %3530 = vmatpush1.bf16.msra.mxu0 %v3508
  %3531 = vmatprep.subr.bf16.mxu0 0
  %3532 = vmatpush1.bf16.msra.mxu0 %v3507
  %3533 = vmatprep.subr.bf16.mxu0 0
  %3534 = vmatpush2.bf16.msra.mxu0 0
  %3535 = vmatprep.subr.bf16.mxu0 0
  %3536 = vmatpush2.bf16.msra.mxu0 0
  %3537 = vmatprep.subr.bf16.mxu0 0
  %3538 = vmatpush2.bf16.msra.mxu0 0
  %3539 = vmatprep.subr.bf16.mxu0 0
  %3540 = vmatpush2.bf16.msra.mxu0 0
  %3541 = vmatprep.subr.bf16.mxu0 0
  %3542 = vmatpush2.bf16.msra.mxu0 0
  %3543 = vmatprep.subr.bf16.mxu0 0
  %3544 = vmatpush2.bf16.msra.mxu0 0
  %3545 = vmatprep.subr.bf16.mxu0 0
  %3546 = vmatpush2.bf16.msra.mxu0 0
  %3547 = vmatprep.subr.bf16.mxu0 0
  %3548 = vmatpush2.bf16.msra.mxu0 0
  %3549 = vmatprep.mubr.bf16.mxu0 0
  %3550 = vmatmul.mubr.bf16.gmra.mxu0 %v3512
  %v3551 = vpop.f32.mrf.mxu0
  %v3552 = vadd.f32 0.0, %v3551
  %v3553 = vpop.f32.mrf.mxu0
  %v3554 = vpop.f32.mrf.mxu0
  %v3555 = vadd.f32 0.0, %v3554
  %v3556 = vpop.f32.mrf.mxu0
  %3557 = vmatprep.mubr.bf16.mxu0 0
  %3558 = vmatmul.mubr.bf16.gmra.mxu0 %v3515
  %v3559 = vpop.f32.mrf.mxu0
  %v3560 = vadd.f32 0.0, %v3559
  %v3561 = vpop.f32.mrf.mxu0
  %v3562 = vpop.f32.mrf.mxu0
  %v3563 = vadd.f32 0.0, %v3562
  %v3564 = vpop.f32.mrf.mxu0
  %3565 = vdwg.mxu0
  %v3566 = vadd.f32 %v3446, %v3552
  %v3567 = vadd.f32 %v3449, %v3555
  %v3568 = vadd.f32 %v3454, %v3560
  %v3569 = vadd.f32 %v3457, %v3563
  %v3570 = vld [vmem:[%s45] sm:$0x1]
  %v3572 = vlaneseq
  %v3573 = vshrl.u32 %v3572, 7
  %v3574 = vsub.s32 0, %v3573
  %v3575 = vrot.slane %v3570, %v3574
  %v3577 = vadd.f32 %v3566, %v3575
  %v3578 = vadd.f32 %v3567, %v3575
  %v3579 = vadd.f32 %v3568, %v3575
  %v3580 = vadd.f32 %v3569, %v3575
  %v3581 = vmax.f32 %v3577, 0.0
  %v3582 = vmax.f32 %v3578, 0.0
  %v3583 = vmax.f32 %v3579, 0.0
  %v3584 = vmax.f32 %v3580, 0.0
  %v3585 = vld [vmem:[%s51] sm:$0xf]
  %v3586 = vld [vmem:[%s51 + $0x4] sm:$0xf]
  %v3587 = vld [vmem:[%s51 + $0x8] sm:$0xf]
  %v3588 = vld [vmem:[%s51 + $0xc] sm:$0xf]
  %v3589 = vld [vmem:[%s53] sm:$0x1]
  %v3591 = vlaneseq
  %v3592 = vshrl.u32 %v3591, 7
  %v3593 = vsub.s32 0, %v3592
  %v3594 = vrot.slane %v3589, %v3593
  %v3600 = vunpack.c.l.b16 %v3585
  %v3601 = vunpack.c.l.b16 %v3586
  %v3602 = vunpack.c.l.b16 %v3587
  %v3603 = vunpack.c.l.b16 %v3588
  %v3604 = vpack.c.b16 %v3601, %v3600
  %v3605 = vpack.c.b16 %v3603, %v3602
  %3608 = vmatprep.subr.bf16.mxu0 0
  %3609 = vmatpush1.bf16.msra.mxu0 0
  %3610 = vmatprep.subr.bf16.mxu0 0
  %3611 = vmatpush1.bf16.msra.mxu0 0
  %3612 = vmatprep.subr.bf16.mxu0 0
  %3613 = vmatpush1.bf16.msra.mxu0 0
  %3614 = vmatprep.subr.bf16.mxu0 0
  %3615 = vmatpush1.bf16.msra.mxu0 0
  %3616 = vmatprep.subr.bf16.mxu0 0
  %3617 = vmatpush1.bf16.msra.mxu0 0
  %3618 = vmatprep.subr.bf16.mxu0 0
  %3619 = vmatpush1.bf16.msra.mxu0 0
  %3620 = vmatprep.subr.bf16.mxu0 0
  %3621 = vmatpush1.bf16.msra.mxu0 %v3605
  %3622 = vmatprep.subr.bf16.mxu0 0
  %3623 = vmatpush1.bf16.msra.mxu0 %v3604
  %3624 = vmatprep.subr.bf16.mxu0 0
  %3625 = vmatpush2.bf16.msra.mxu0 0
  %3626 = vmatprep.subr.bf16.mxu0 0
  %3627 = vmatpush2.bf16.msra.mxu0 0
  %3628 = vmatprep.subr.bf16.mxu0 0
  %3629 = vmatpush2.bf16.msra.mxu0 0
  %3630 = vmatprep.subr.bf16.mxu0 0
  %3631 = vmatpush2.bf16.msra.mxu0 0
  %3632 = vmatprep.subr.bf16.mxu0 0
  %3633 = vmatpush2.bf16.msra.mxu0 0
  %3634 = vmatprep.subr.bf16.mxu0 0
  %3635 = vmatpush2.bf16.msra.mxu0 0
  %3636 = vmatprep.subr.bf16.mxu0 0
  %3637 = vmatpush2.bf16.msra.mxu0 0
  %3638 = vmatprep.subr.bf16.mxu0 0
  %3639 = vmatpush2.bf16.msra.mxu0 0
  %3640 = vmatprep.mubr.bf16.mxu0 0
  %3641 = vmatmul.mubr.bf16.gmra.mxu0 %v3333
  %v3642 = vpop.f32.mrf.mxu0
  %v3643 = vadd.f32 %v3594, %v3642
  %v3644 = vpop.f32.mrf.mxu0
  %v3645 = vpop.f32.mrf.mxu0
  %v3646 = vadd.f32 %v3594, %v3645
  %v3647 = vpop.f32.mrf.mxu0
  %3648 = vmatprep.mubr.bf16.mxu0 0
  %3649 = vmatmul.mubr.bf16.gmra.mxu0 %v3336
  %v3650 = vpop.f32.mrf.mxu0
  %v3651 = vadd.f32 %v3594, %v3650
  %v3652 = vpop.f32.mrf.mxu0
  %v3653 = vpop.f32.mrf.mxu0
  %v3654 = vadd.f32 %v3594, %v3653
  %v3655 = vpop.f32.mrf.mxu0
  %3656 = vdwg.mxu0
  %v3657 = vpack.c.bf16 %v3582, %v3581
  %v3658 = vpack.c.bf16 %v3584, %v3583
  %v3661 = vunpack.c.l.b16 %v3657
  %v3662 = vunpack.c.h.b16 %v3657
  %v3663 = vunpack.c.l.b16 %v3658
  %v3664 = vunpack.c.h.b16 %v3658
  %v3665 = vpack.c.b16 %v3661, %v3661
  %v3666 = vpack.c.b16 %v3662, %v3662
  %v3667 = vpack.c.b16 %v3663, %v3663
  %v3668 = vpack.c.b16 %v3664, %v3664
  %3673 = vst.msk [vmem:[#allocation2 + $0x4] sm:$0xf] %vm141, %v3665
  %3674 = vst.msk [vmem:[#allocation2 + $0x8] sm:$0xf] %vm141, %v3666
  %3675 = vst.msk [vmem:[#allocation2 + $0x14] sm:$0xf] %vm141, %v3667
  %3676 = vst.msk [vmem:[#allocation2 + $0x18] sm:$0xf] %vm141, %v3668
  %v3677 = vld [vmem:[#allocation2] sm:$0x8]
  %v3678 = vld [vmem:[#allocation2 + $0x4] sm:$0xf]
  %v3679 = vld [vmem:[#allocation2 + $0x8] sm:$0xf]
  %v3680 = vld [vmem:[#allocation2 + $0x10] sm:$0x8]
  %v3681 = vld [vmem:[#allocation2 + $0x14] sm:$0xf]
  %v3682 = vld [vmem:[#allocation2 + $0x18] sm:$0xf]
  %v3683 = vld [vmem:[#allocation2 + $0xc] sm:$0x1]
  %v3684 = vld [vmem:[#allocation2 + $0x1c] sm:$0x1]
  %v3686 = vshrl.u32 %v3677, 16
  %v3688 = vrot.slane %v3686, 7
  %v3689 = vrot.slane %v3688, 4
  %v3691 = vshrl.u32 %v3678, 16
  %v3693 = vrot.slane %v3691, 7
  %v3694 = vshll.u32 %v3678, 16
  %v3696 = vor.u32 %v3693, %v3694
  %v3697 = vsel %vm369, %v3689, %v3696
  %v3698 = vrot.slane %v3693, 4
  %v3700 = vshrl.u32 %v3679, 16
  %v3702 = vrot.slane %v3700, 7
  %v3703 = vshll.u32 %v3679, 16
  %v3705 = vor.u32 %v3702, %v3703
  %v3706 = vsel %vm369, %v3698, %v3705
  %v3708 = vshrl.u32 %v3680, 16
  %v3710 = vrot.slane %v3708, 7
  %v3711 = vrot.slane %v3710, 4
  %v3713 = vshrl.u32 %v3681, 16
  %v3715 = vrot.slane %v3713, 7
  %v3716 = vshll.u32 %v3681, 16
  %v3718 = vor.u32 %v3715, %v3716
  %v3719 = vsel %vm369, %v3711, %v3718
  %v3720 = vrot.slane %v3715, 4
  %v3722 = vshrl.u32 %v3682, 16
  %v3724 = vrot.slane %v3722, 7
  %v3725 = vshll.u32 %v3682, 16
  %v3727 = vor.u32 %v3724, %v3725
  %v3728 = vsel %vm369, %v3720, %v3727
  %v3729 = vld [vmem:[%s47] sm:$0xf]
  %v3730 = vld [vmem:[%s47 + $0x4] sm:$0xf]
  %v3731 = vld [vmem:[%s47 + $0x8] sm:$0xf]
  %v3732 = vld [vmem:[%s47 + $0xc] sm:$0xf]
  %v3733 = vld [vmem:[%s47 + $0x10] sm:$0xf]
  %v3734 = vld [vmem:[%s47 + $0x14] sm:$0xf]
  %v3735 = vld [vmem:[%s47 + $0x18] sm:$0xf]
  %v3736 = vld [vmem:[%s47 + $0x1c] sm:$0xf]
  %s3737 = scalar_lea.vmem %s47, 32
  %v3738 = vld [vmem:[%s3737] sm:$0xf]
  %v3739 = vld [vmem:[%s3737 + $0x4] sm:$0xf]
  %v3740 = vld [vmem:[%s3737 + $0x8] sm:$0xf]
  %v3741 = vld [vmem:[%s3737 + $0xc] sm:$0xf]
  %v3742 = vld [vmem:[%s3737 + $0x10] sm:$0xf]
  %v3743 = vld [vmem:[%s3737 + $0x14] sm:$0xf]
  %v3744 = vld [vmem:[%s3737 + $0x18] sm:$0xf]
  %v3745 = vld [vmem:[%s3737 + $0x1c] sm:$0xf]
  %v3750 = vunpack.c.l.b16 %v3678
  %v3751 = vunpack.c.l.b16 %v3679
  %v3752 = vunpack.c.l.b16 %v3681
  %v3753 = vunpack.c.l.b16 %v3682
  %v3754 = vpack.c.b16 %v3751, %v3750
  %v3755 = vpack.c.b16 %v3753, %v3752
  %v3764 = vunpack.c.l.b16 %v3738
  %v3765 = vunpack.c.l.b16 %v3739
  %v3766 = vunpack.c.l.b16 %v3740
  %v3767 = vunpack.c.l.b16 %v3741
  %v3768 = vunpack.c.l.b16 %v3742
  %v3769 = vunpack.c.l.b16 %v3743
  %v3770 = vunpack.c.l.b16 %v3744
  %v3771 = vunpack.c.l.b16 %v3745
  %v3772 = vpack.c.b16 %v3765, %v3764
  %v3773 = vpack.c.b16 %v3767, %v3766
  %v3774 = vpack.c.b16 %v3769, %v3768
  %v3775 = vpack.c.b16 %v3771, %v3770
  %vm3780 = vcmask 523264
  %v3782 = vsel %vm3780, %v3754, 0
  %v3785 = vsel %vm3780, %v3755, 0
  %3787 = vmatprep.subr.bf16.mxu0 0
  %3788 = vmatpush1.bf16.msra.mxu0 0
  %3789 = vmatprep.subr.bf16.mxu0 0
  %3790 = vmatpush1.bf16.msra.mxu0 0
  %3791 = vmatprep.subr.bf16.mxu0 0
  %3792 = vmatpush1.bf16.msra.mxu0 0
  %3793 = vmatprep.subr.bf16.mxu0 0
  %3794 = vmatpush1.bf16.msra.mxu0 0
  %3795 = vmatprep.subr.bf16.mxu0 0
  %3796 = vmatpush1.bf16.msra.mxu0 %v3775
  %3797 = vmatprep.subr.bf16.mxu0 0
  %3798 = vmatpush1.bf16.msra.mxu0 %v3774
  %3799 = vmatprep.subr.bf16.mxu0 0
  %3800 = vmatpush1.bf16.msra.mxu0 %v3773
  %3801 = vmatprep.subr.bf16.mxu0 0
  %3802 = vmatpush1.bf16.msra.mxu0 %v3772
  %3803 = vmatprep.subr.bf16.mxu0 0
  %3804 = vmatpush2.bf16.msra.mxu0 0
  %3805 = vmatprep.subr.bf16.mxu0 0
  %3806 = vmatpush2.bf16.msra.mxu0 0
  %3807 = vmatprep.subr.bf16.mxu0 0
  %3808 = vmatpush2.bf16.msra.mxu0 0
  %3809 = vmatprep.subr.bf16.mxu0 0
  %3810 = vmatpush2.bf16.msra.mxu0 0
  %3811 = vmatprep.subr.bf16.mxu0 0
  %3812 = vmatpush2.bf16.msra.mxu0 0
  %3813 = vmatprep.subr.bf16.mxu0 0
  %3814 = vmatpush2.bf16.msra.mxu0 0
  %3815 = vmatprep.subr.bf16.mxu0 0
  %3816 = vmatpush2.bf16.msra.mxu0 0
  %3817 = vmatprep.subr.bf16.mxu0 0
  %3818 = vmatpush2.bf16.msra.mxu0 0
  %3819 = vmatprep.mubr.bf16.mxu0 0
  %3820 = vmatmul.mubr.bf16.gmra.mxu0 %v3782
  %v3821 = vpop.f32.mrf.mxu0
  %v3822 = vadd.f32 0.0, %v3821
  %v3823 = vpop.f32.mrf.mxu0
  %v3824 = vpop.f32.mrf.mxu0
  %v3825 = vadd.f32 0.0, %v3824
  %v3826 = vpop.f32.mrf.mxu0
  %3827 = vmatprep.mubr.bf16.mxu0 0
  %3828 = vmatmul.mubr.bf16.gmra.mxu0 %v3785
  %v3829 = vpop.f32.mrf.mxu0
  %v3830 = vadd.f32 0.0, %v3829
  %v3831 = vpop.f32.mrf.mxu0
  %v3832 = vpop.f32.mrf.mxu0
  %v3833 = vadd.f32 0.0, %v3832
  %v3834 = vpop.f32.mrf.mxu0
  %3835 = vdwg.mxu0
  %v3836 = vunpack.c.l.b16 %v3697
  %v3837 = vunpack.c.l.b16 %v3706
  %v3838 = vunpack.c.l.b16 %v3719
  %v3839 = vunpack.c.l.b16 %v3728
  %v3840 = vpack.c.b16 %v3837, %v3836
  %v3841 = vpack.c.b16 %v3839, %v3838
  %v3850 = vunpack.c.l.b16 %v3729
  %v3851 = vunpack.c.l.b16 %v3730
  %v3852 = vunpack.c.l.b16 %v3731
  %v3853 = vunpack.c.l.b16 %v3732
  %v3854 = vunpack.c.l.b16 %v3733
  %v3855 = vunpack.c.l.b16 %v3734
  %v3856 = vunpack.c.l.b16 %v3735
  %v3857 = vunpack.c.l.b16 %v3736
  %v3858 = vpack.c.b16 %v3851, %v3850
  %v3859 = vpack.c.b16 %v3853, %v3852
  %v3860 = vpack.c.b16 %v3855, %v3854
  %v3861 = vpack.c.b16 %v3857, %v3856
  %v3867 = vsel %vm3780, %v3840, 0
  %v3870 = vsel %vm3780, %v3841, 0
  %3872 = vmatprep.subr.bf16.mxu0 0
  %3873 = vmatpush1.bf16.msra.mxu0 0
  %3874 = vmatprep.subr.bf16.mxu0 0
  %3875 = vmatpush1.bf16.msra.mxu0 0
  %3876 = vmatprep.subr.bf16.mxu0 0
  %3877 = vmatpush1.bf16.msra.mxu0 0
  %3878 = vmatprep.subr.bf16.mxu0 0
  %3879 = vmatpush1.bf16.msra.mxu0 0
  %3880 = vmatprep.subr.bf16.mxu0 0
  %3881 = vmatpush1.bf16.msra.mxu0 %v3861
  %3882 = vmatprep.subr.bf16.mxu0 0
  %3883 = vmatpush1.bf16.msra.mxu0 %v3860
  %3884 = vmatprep.subr.bf16.mxu0 0
  %3885 = vmatpush1.bf16.msra.mxu0 %v3859
  %3886 = vmatprep.subr.bf16.mxu0 0
  %3887 = vmatpush1.bf16.msra.mxu0 %v3858
  %3888 = vmatprep.subr.bf16.mxu0 0
  %3889 = vmatpush2.bf16.msra.mxu0 0
  %3890 = vmatprep.subr.bf16.mxu0 0
  %3891 = vmatpush2.bf16.msra.mxu0 0
  %3892 = vmatprep.subr.bf16.mxu0 0
  %3893 = vmatpush2.bf16.msra.mxu0 0
  %3894 = vmatprep.subr.bf16.mxu0 0
  %3895 = vmatpush2.bf16.msra.mxu0 0
  %3896 = vmatprep.subr.bf16.mxu0 0
  %3897 = vmatpush2.bf16.msra.mxu0 0
  %3898 = vmatprep.subr.bf16.mxu0 0
  %3899 = vmatpush2.bf16.msra.mxu0 0
  %3900 = vmatprep.subr.bf16.mxu0 0
  %3901 = vmatpush2.bf16.msra.mxu0 0
  %3902 = vmatprep.subr.bf16.mxu0 0
  %3903 = vmatpush2.bf16.msra.mxu0 0
  %3904 = vmatprep.mubr.bf16.mxu0 0
  %3905 = vmatmul.mubr.bf16.gmra.mxu0 %v3867
  %v3906 = vpop.f32.mrf.mxu0
  %v3907 = vadd.f32 %v3822, %v3906
  %v3908 = vpop.f32.mrf.mxu0
  %v3909 = vpop.f32.mrf.mxu0
  %v3910 = vadd.f32 %v3825, %v3909
  %v3911 = vpop.f32.mrf.mxu0
  %3912 = vmatprep.mubr.bf16.mxu0 0
  %3913 = vmatmul.mubr.bf16.gmra.mxu0 %v3870
  %v3914 = vpop.f32.mrf.mxu0
  %v3915 = vadd.f32 %v3830, %v3914
  %v3916 = vpop.f32.mrf.mxu0
  %v3917 = vpop.f32.mrf.mxu0
  %v3918 = vadd.f32 %v3833, %v3917
  %v3919 = vpop.f32.mrf.mxu0
  %3920 = vdwg.mxu0
  %v3921 = vrot.slane %v3691, 4
  %v3922 = vrot.slane %v3694, 5
  %v3923 = vor.u32 %v3921, %v3922
  %v3924 = vrot.slane %v3923, 4
  %v3925 = vrot.slane %v3703, 5
  %v3926 = vsel %vm621, %v3924, %v3925
  %v3927 = vrot.slane %v3700, 4
  %v3928 = vor.u32 %v3927, %v3925
  %v3929 = vrot.slane %v3928, 4
  %v3931 = vshll.u32 %v3683, 16
  %v3933 = vrot.slane %v3931, 5
  %v3934 = vsel %vm621, %v3929, %v3933
  %v3935 = vrot.slane %v3713, 4
  %v3936 = vrot.slane %v3716, 5
  %v3937 = vor.u32 %v3935, %v3936
  %v3938 = vrot.slane %v3937, 4
  %v3939 = vrot.slane %v3725, 5
  %v3940 = vsel %vm621, %v3938, %v3939
  %v3941 = vrot.slane %v3722, 4
  %v3942 = vor.u32 %v3941, %v3939
  %v3943 = vrot.slane %v3942, 4
  %v3945 = vshll.u32 %v3684, 16
  %v3947 = vrot.slane %v3945, 5
  %v3948 = vsel %vm621, %v3943, %v3947
  %s3949 = scalar_lea.vmem %s47, 64
  %v3950 = vld [vmem:[%s3949] sm:$0xf]
  %v3951 = vld [vmem:[%s3949 + $0x4] sm:$0xf]
  %v3952 = vld [vmem:[%s3949 + $0x8] sm:$0xf]
  %v3953 = vld [vmem:[%s3949 + $0xc] sm:$0xf]
  %v3954 = vld [vmem:[%s3949 + $0x10] sm:$0xf]
  %v3955 = vld [vmem:[%s3949 + $0x14] sm:$0xf]
  %v3956 = vld [vmem:[%s3949 + $0x18] sm:$0xf]
  %v3957 = vld [vmem:[%s3949 + $0x1c] sm:$0xf]
  %v3958 = vunpack.c.l.b16 %v3926
  %v3959 = vunpack.c.l.b16 %v3934
  %v3960 = vunpack.c.l.b16 %v3940
  %v3961 = vunpack.c.l.b16 %v3948
  %v3962 = vpack.c.b16 %v3959, %v3958
  %v3963 = vpack.c.b16 %v3961, %v3960
  %v3972 = vunpack.c.l.b16 %v3950
  %v3973 = vunpack.c.l.b16 %v3951
  %v3974 = vunpack.c.l.b16 %v3952
  %v3975 = vunpack.c.l.b16 %v3953
  %v3976 = vunpack.c.l.b16 %v3954
  %v3977 = vunpack.c.l.b16 %v3955
  %v3978 = vunpack.c.l.b16 %v3956
  %v3979 = vunpack.c.l.b16 %v3957
  %v3980 = vpack.c.b16 %v3973, %v3972
  %v3981 = vpack.c.b16 %v3975, %v3974
  %v3982 = vpack.c.b16 %v3977, %v3976
  %v3983 = vpack.c.b16 %v3979, %v3978
  %v3989 = vsel %vm3780, %v3962, 0
  %v3992 = vsel %vm3780, %v3963, 0
  %3994 = vmatprep.subr.bf16.mxu0 0
  %3995 = vmatpush1.bf16.msra.mxu0 0
  %3996 = vmatprep.subr.bf16.mxu0 0
  %3997 = vmatpush1.bf16.msra.mxu0 0
  %3998 = vmatprep.subr.bf16.mxu0 0
  %3999 = vmatpush1.bf16.msra.mxu0 0
  %4000 = vmatprep.subr.bf16.mxu0 0
  %4001 = vmatpush1.bf16.msra.mxu0 0
  %4002 = vmatprep.subr.bf16.mxu0 0
  %4003 = vmatpush1.bf16.msra.mxu0 %v3983
  %4004 = vmatprep.subr.bf16.mxu0 0
  %4005 = vmatpush1.bf16.msra.mxu0 %v3982
  %4006 = vmatprep.subr.bf16.mxu0 0
  %4007 = vmatpush1.bf16.msra.mxu0 %v3981
  %4008 = vmatprep.subr.bf16.mxu0 0
  %4009 = vmatpush1.bf16.msra.mxu0 %v3980
  %4010 = vmatprep.subr.bf16.mxu0 0
  %4011 = vmatpush2.bf16.msra.mxu0 0
  %4012 = vmatprep.subr.bf16.mxu0 0
  %4013 = vmatpush2.bf16.msra.mxu0 0
  %4014 = vmatprep.subr.bf16.mxu0 0
  %4015 = vmatpush2.bf16.msra.mxu0 0
  %4016 = vmatprep.subr.bf16.mxu0 0
  %4017 = vmatpush2.bf16.msra.mxu0 0
  %4018 = vmatprep.subr.bf16.mxu0 0
  %4019 = vmatpush2.bf16.msra.mxu0 0
  %4020 = vmatprep.subr.bf16.mxu0 0
  %4021 = vmatpush2.bf16.msra.mxu0 0
  %4022 = vmatprep.subr.bf16.mxu0 0
  %4023 = vmatpush2.bf16.msra.mxu0 0
  %4024 = vmatprep.subr.bf16.mxu0 0
  %4025 = vmatpush2.bf16.msra.mxu0 0
  %4026 = vmatprep.mubr.bf16.mxu0 0
  %4027 = vmatmul.mubr.bf16.gmra.mxu0 %v3989
  %v4028 = vpop.f32.mrf.mxu0
  %v4029 = vadd.f32 0.0, %v4028
  %v4030 = vpop.f32.mrf.mxu0
  %v4031 = vpop.f32.mrf.mxu0
  %v4032 = vadd.f32 0.0, %v4031
  %v4033 = vpop.f32.mrf.mxu0
  %4034 = vmatprep.mubr.bf16.mxu0 0
  %4035 = vmatmul.mubr.bf16.gmra.mxu0 %v3992
  %v4036 = vpop.f32.mrf.mxu0
  %v4037 = vadd.f32 0.0, %v4036
  %v4038 = vpop.f32.mrf.mxu0
  %v4039 = vpop.f32.mrf.mxu0
  %v4040 = vadd.f32 0.0, %v4039
  %v4041 = vpop.f32.mrf.mxu0
  %4042 = vdwg.mxu0
  %v4043 = vadd.f32 %v3907, %v4029
  %v4044 = vadd.f32 %v3910, %v4032
  %v4045 = vadd.f32 %v3915, %v4037
  %v4046 = vadd.f32 %v3918, %v4040
  %v4047 = vld [vmem:[%s49] sm:$0x1]
  %v4049 = vlaneseq
  %v4050 = vshrl.u32 %v4049, 7
  %v4051 = vsub.s32 0, %v4050
  %v4052 = vrot.slane %v4047, %v4051
  %v4054 = vadd.f32 %v4043, %v4052
  %v4055 = vadd.f32 %v4044, %v4052
  %v4056 = vadd.f32 %v4045, %v4052
  %v4057 = vadd.f32 %v4046, %v4052
  %v4058 = vadd.f32 %v4054, %v3643
  %v4059 = vadd.f32 %v4055, %v3646
  %v4060 = vadd.f32 %v4056, %v3651
  %v4061 = vadd.f32 %v4057, %v3654
  %v4062 = vmax.f32 %v4058, 0.0
  %v4063 = vmax.f32 %v4059, 0.0
  %v4064 = vmax.f32 %v4060, 0.0
  %v4065 = vmax.f32 %v4061, 0.0
  %v4066 = vpack.c.bf16 %v4063, %v4062
  %v4067 = vpack.c.bf16 %v4065, %v4064
  %v4070 = vunpack.c.l.b16 %v4066
  %v4071 = vunpack.c.h.b16 %v4066
  %v4072 = vunpack.c.l.b16 %v4067
  %v4073 = vunpack.c.h.b16 %v4067
  %v4074 = vpack.c.b16 %v4070, %v4070
  %v4075 = vpack.c.b16 %v4071, %v4071
  %v4076 = vpack.c.b16 %v4072, %v4072
  %v4077 = vpack.c.b16 %v4073, %v4073
  %4082 = vst.msk [vmem:[#allocation2 + $0x4] sm:$0xf] %vm141, %v4074
  %4083 = vst.msk [vmem:[#allocation2 + $0x8] sm:$0xf] %vm141, %v4075
  %4084 = vst.msk [vmem:[#allocation2 + $0x14] sm:$0xf] %vm141, %v4076
  %4085 = vst.msk [vmem:[#allocation2 + $0x18] sm:$0xf] %vm141, %v4077
  %v4086 = vld [vmem:[#allocation2] sm:$0x8]
  %v4087 = vld [vmem:[#allocation2 + $0x4] sm:$0xf]
  %v4088 = vld [vmem:[#allocation2 + $0x8] sm:$0xf]
  %v4089 = vld [vmem:[#allocation2 + $0x10] sm:$0x8]
  %v4090 = vld [vmem:[#allocation2 + $0x14] sm:$0xf]
  %v4091 = vld [vmem:[#allocation2 + $0x18] sm:$0xf]
  %v4092 = vld [vmem:[#allocation2 + $0xc] sm:$0x1]
  %v4093 = vld [vmem:[#allocation2 + $0x1c] sm:$0x1]
  %v4095 = vshrl.u32 %v4086, 16
  %v4097 = vrot.slane %v4095, 7
  %v4098 = vrot.slane %v4097, 4
  %v4100 = vshrl.u32 %v4087, 16
  %v4102 = vrot.slane %v4100, 7
  %v4103 = vshll.u32 %v4087, 16
  %v4105 = vor.u32 %v4102, %v4103
  %v4106 = vsel %vm369, %v4098, %v4105
  %v4107 = vrot.slane %v4102, 4
  %v4109 = vshrl.u32 %v4088, 16
  %v4111 = vrot.slane %v4109, 7
  %v4112 = vshll.u32 %v4088, 16
  %v4114 = vor.u32 %v4111, %v4112
  %v4115 = vsel %vm369, %v4107, %v4114
  %v4117 = vshrl.u32 %v4089, 16
  %v4119 = vrot.slane %v4117, 7
  %v4120 = vrot.slane %v4119, 4
  %v4122 = vshrl.u32 %v4090, 16
  %v4124 = vrot.slane %v4122, 7
  %v4125 = vshll.u32 %v4090, 16
  %v4127 = vor.u32 %v4124, %v4125
  %v4128 = vsel %vm369, %v4120, %v4127
  %v4129 = vrot.slane %v4124, 4
  %v4131 = vshrl.u32 %v4091, 16
  %v4133 = vrot.slane %v4131, 7
  %v4134 = vshll.u32 %v4091, 16
  %v4136 = vor.u32 %v4133, %v4134
  %v4137 = vsel %vm369, %v4129, %v4136
  %v4138 = vld [vmem:[%s55] sm:$0xf]
  %v4139 = vld [vmem:[%s55 + $0x4] sm:$0xf]
  %v4140 = vld [vmem:[%s55 + $0x8] sm:$0xf]
  %v4141 = vld [vmem:[%s55 + $0xc] sm:$0xf]
  %v4142 = vld [vmem:[%s55 + $0x10] sm:$0xf]
  %v4143 = vld [vmem:[%s55 + $0x14] sm:$0xf]
  %v4144 = vld [vmem:[%s55 + $0x18] sm:$0xf]
  %v4145 = vld [vmem:[%s55 + $0x1c] sm:$0xf]
  %s4146 = scalar_lea.vmem %s55, 32
  %v4147 = vld [vmem:[%s4146] sm:$0xf]
  %v4148 = vld [vmem:[%s4146 + $0x4] sm:$0xf]
  %v4149 = vld [vmem:[%s4146 + $0x8] sm:$0xf]
  %v4150 = vld [vmem:[%s4146 + $0xc] sm:$0xf]
  %v4151 = vld [vmem:[%s4146 + $0x10] sm:$0xf]
  %v4152 = vld [vmem:[%s4146 + $0x14] sm:$0xf]
  %v4153 = vld [vmem:[%s4146 + $0x18] sm:$0xf]
  %v4154 = vld [vmem:[%s4146 + $0x1c] sm:$0xf]
  %v4159 = vunpack.c.l.b16 %v4087
  %v4160 = vunpack.c.l.b16 %v4088
  %v4161 = vunpack.c.l.b16 %v4090
  %v4162 = vunpack.c.l.b16 %v4091
  %v4163 = vpack.c.b16 %v4160, %v4159
  %v4164 = vpack.c.b16 %v4162, %v4161
  %v4173 = vunpack.c.l.b16 %v4147
  %v4174 = vunpack.c.l.b16 %v4148
  %v4175 = vunpack.c.l.b16 %v4149
  %v4176 = vunpack.c.l.b16 %v4150
  %v4177 = vunpack.c.l.b16 %v4151
  %v4178 = vunpack.c.l.b16 %v4152
  %v4179 = vunpack.c.l.b16 %v4153
  %v4180 = vunpack.c.l.b16 %v4154
  %v4181 = vpack.c.b16 %v4174, %v4173
  %v4182 = vpack.c.b16 %v4176, %v4175
  %v4183 = vpack.c.b16 %v4178, %v4177
  %v4184 = vpack.c.b16 %v4180, %v4179
  %v4190 = vsel %vm3780, %v4163, 0
  %v4193 = vsel %vm3780, %v4164, 0
  %4195 = vmatprep.subr.bf16.mxu0 0
  %4196 = vmatpush1.bf16.msra.mxu0 0
  %4197 = vmatprep.subr.bf16.mxu0 0
  %4198 = vmatpush1.bf16.msra.mxu0 0
  %4199 = vmatprep.subr.bf16.mxu0 0
  %4200 = vmatpush1.bf16.msra.mxu0 0
  %4201 = vmatprep.subr.bf16.mxu0 0
  %4202 = vmatpush1.bf16.msra.mxu0 0
  %4203 = vmatprep.subr.bf16.mxu0 0
  %4204 = vmatpush1.bf16.msra.mxu0 %v4184
  %4205 = vmatprep.subr.bf16.mxu0 0
  %4206 = vmatpush1.bf16.msra.mxu0 %v4183
  %4207 = vmatprep.subr.bf16.mxu0 0
  %4208 = vmatpush1.bf16.msra.mxu0 %v4182
  %4209 = vmatprep.subr.bf16.mxu0 0
  %4210 = vmatpush1.bf16.msra.mxu0 %v4181
  %4211 = vmatprep.subr.bf16.mxu0 0
  %4212 = vmatpush2.bf16.msra.mxu0 0
  %4213 = vmatprep.subr.bf16.mxu0 0
  %4214 = vmatpush2.bf16.msra.mxu0 0
  %4215 = vmatprep.subr.bf16.mxu0 0
  %4216 = vmatpush2.bf16.msra.mxu0 0
  %4217 = vmatprep.subr.bf16.mxu0 0
  %4218 = vmatpush2.bf16.msra.mxu0 0
  %4219 = vmatprep.subr.bf16.mxu0 0
  %4220 = vmatpush2.bf16.msra.mxu0 0
  %4221 = vmatprep.subr.bf16.mxu0 0
  %4222 = vmatpush2.bf16.msra.mxu0 0
  %4223 = vmatprep.subr.bf16.mxu0 0
  %4224 = vmatpush2.bf16.msra.mxu0 0
  %4225 = vmatprep.subr.bf16.mxu0 0
  %4226 = vmatpush2.bf16.msra.mxu0 0
  %4227 = vmatprep.mubr.bf16.mxu0 0
  %4228 = vmatmul.mubr.bf16.gmra.mxu0 %v4190
  %v4229 = vpop.f32.mrf.mxu0
  %v4230 = vadd.f32 0.0, %v4229
  %v4231 = vpop.f32.mrf.mxu0
  %v4232 = vpop.f32.mrf.mxu0
  %v4233 = vadd.f32 0.0, %v4232
  %v4234 = vpop.f32.mrf.mxu0
  %4235 = vmatprep.mubr.bf16.mxu0 0
  %4236 = vmatmul.mubr.bf16.gmra.mxu0 %v4193
  %v4237 = vpop.f32.mrf.mxu0
  %v4238 = vadd.f32 0.0, %v4237
  %v4239 = vpop.f32.mrf.mxu0
  %v4240 = vpop.f32.mrf.mxu0
  %v4241 = vadd.f32 0.0, %v4240
  %v4242 = vpop.f32.mrf.mxu0
  %4243 = vdwg.mxu0
  %v4244 = vunpack.c.l.b16 %v4106
  %v4245 = vunpack.c.l.b16 %v4115
  %v4246 = vunpack.c.l.b16 %v4128
  %v4247 = vunpack.c.l.b16 %v4137
  %v4248 = vpack.c.b16 %v4245, %v4244
  %v4249 = vpack.c.b16 %v4247, %v4246
  %v4258 = vunpack.c.l.b16 %v4138
  %v4259 = vunpack.c.l.b16 %v4139
  %v4260 = vunpack.c.l.b16 %v4140
  %v4261 = vunpack.c.l.b16 %v4141
  %v4262 = vunpack.c.l.b16 %v4142
  %v4263 = vunpack.c.l.b16 %v4143
  %v4264 = vunpack.c.l.b16 %v4144
  %v4265 = vunpack.c.l.b16 %v4145
  %v4266 = vpack.c.b16 %v4259, %v4258
  %v4267 = vpack.c.b16 %v4261, %v4260
  %v4268 = vpack.c.b16 %v4263, %v4262
  %v4269 = vpack.c.b16 %v4265, %v4264
  %v4275 = vsel %vm3780, %v4248, 0
  %v4278 = vsel %vm3780, %v4249, 0
  %4280 = vmatprep.subr.bf16.mxu0 0
  %4281 = vmatpush1.bf16.msra.mxu0 0
  %4282 = vmatprep.subr.bf16.mxu0 0
  %4283 = vmatpush1.bf16.msra.mxu0 0
  %4284 = vmatprep.subr.bf16.mxu0 0
  %4285 = vmatpush1.bf16.msra.mxu0 0
  %4286 = vmatprep.subr.bf16.mxu0 0
  %4287 = vmatpush1.bf16.msra.mxu0 0
  %4288 = vmatprep.subr.bf16.mxu0 0
  %4289 = vmatpush1.bf16.msra.mxu0 %v4269
  %4290 = vmatprep.subr.bf16.mxu0 0
  %4291 = vmatpush1.bf16.msra.mxu0 %v4268
  %4292 = vmatprep.subr.bf16.mxu0 0
  %4293 = vmatpush1.bf16.msra.mxu0 %v4267
  %4294 = vmatprep.subr.bf16.mxu0 0
  %4295 = vmatpush1.bf16.msra.mxu0 %v4266
  %4296 = vmatprep.subr.bf16.mxu0 0
  %4297 = vmatpush2.bf16.msra.mxu0 0
  %4298 = vmatprep.subr.bf16.mxu0 0
  %4299 = vmatpush2.bf16.msra.mxu0 0
  %4300 = vmatprep.subr.bf16.mxu0 0
  %4301 = vmatpush2.bf16.msra.mxu0 0
  %4302 = vmatprep.subr.bf16.mxu0 0
  %4303 = vmatpush2.bf16.msra.mxu0 0
  %4304 = vmatprep.subr.bf16.mxu0 0
  %4305 = vmatpush2.bf16.msra.mxu0 0
  %4306 = vmatprep.subr.bf16.mxu0 0
  %4307 = vmatpush2.bf16.msra.mxu0 0
  %4308 = vmatprep.subr.bf16.mxu0 0
  %4309 = vmatpush2.bf16.msra.mxu0 0
  %4310 = vmatprep.subr.bf16.mxu0 0
  %4311 = vmatpush2.bf16.msra.mxu0 0
  %4312 = vmatprep.mubr.bf16.mxu0 0
  %4313 = vmatmul.mubr.bf16.gmra.mxu0 %v4275
  %v4314 = vpop.f32.mrf.mxu0
  %v4315 = vadd.f32 %v4230, %v4314
  %v4316 = vpop.f32.mrf.mxu0
  %v4317 = vpop.f32.mrf.mxu0
  %v4318 = vadd.f32 %v4233, %v4317
  %v4319 = vpop.f32.mrf.mxu0
  %4320 = vmatprep.mubr.bf16.mxu0 0
  %4321 = vmatmul.mubr.bf16.gmra.mxu0 %v4278
  %v4322 = vpop.f32.mrf.mxu0
  %v4323 = vadd.f32 %v4238, %v4322
  %v4324 = vpop.f32.mrf.mxu0
  %v4325 = vpop.f32.mrf.mxu0
  %v4326 = vadd.f32 %v4241, %v4325
  %v4327 = vpop.f32.mrf.mxu0
  %4328 = vdwg.mxu0
  %v4329 = vrot.slane %v4100, 4
  %v4330 = vrot.slane %v4103, 5
  %v4331 = vor.u32 %v4329, %v4330
  %v4332 = vrot.slane %v4331, 4
  %v4333 = vrot.slane %v4112, 5
  %v4334 = vsel %vm621, %v4332, %v4333
  %v4335 = vrot.slane %v4109, 4
  %v4336 = vor.u32 %v4335, %v4333
  %v4337 = vrot.slane %v4336, 4
  %v4339 = vshll.u32 %v4092, 16
  %v4341 = vrot.slane %v4339, 5
  %v4342 = vsel %vm621, %v4337, %v4341
  %v4343 = vrot.slane %v4122, 4
  %v4344 = vrot.slane %v4125, 5
  %v4345 = vor.u32 %v4343, %v4344
  %v4346 = vrot.slane %v4345, 4
  %v4347 = vrot.slane %v4134, 5
  %v4348 = vsel %vm621, %v4346, %v4347
  %v4349 = vrot.slane %v4131, 4
  %v4350 = vor.u32 %v4349, %v4347
  %v4351 = vrot.slane %v4350, 4
  %v4353 = vshll.u32 %v4093, 16
  %v4355 = vrot.slane %v4353, 5
  %v4356 = vsel %vm621, %v4351, %v4355
  %s4357 = scalar_lea.vmem %s55, 64
  %v4358 = vld [vmem:[%s4357] sm:$0xf]
  %v4359 = vld [vmem:[%s4357 + $0x4] sm:$0xf]
  %v4360 = vld [vmem:[%s4357 + $0x8] sm:$0xf]
  %v4361 = vld [vmem:[%s4357 + $0xc] sm:$0xf]
  %v4362 = vld [vmem:[%s4357 + $0x10] sm:$0xf]
  %v4363 = vld [vmem:[%s4357 + $0x14] sm:$0xf]
  %v4364 = vld [vmem:[%s4357 + $0x18] sm:$0xf]
  %v4365 = vld [vmem:[%s4357 + $0x1c] sm:$0xf]
  %v4366 = vunpack.c.l.b16 %v4334
  %v4367 = vunpack.c.l.b16 %v4342
  %v4368 = vunpack.c.l.b16 %v4348
  %v4369 = vunpack.c.l.b16 %v4356
  %v4370 = vpack.c.b16 %v4367, %v4366
  %v4371 = vpack.c.b16 %v4369, %v4368
  %v4380 = vunpack.c.l.b16 %v4358
  %v4381 = vunpack.c.l.b16 %v4359
  %v4382 = vunpack.c.l.b16 %v4360
  %v4383 = vunpack.c.l.b16 %v4361
  %v4384 = vunpack.c.l.b16 %v4362
  %v4385 = vunpack.c.l.b16 %v4363
  %v4386 = vunpack.c.l.b16 %v4364
  %v4387 = vunpack.c.l.b16 %v4365
  %v4388 = vpack.c.b16 %v4381, %v4380
  %v4389 = vpack.c.b16 %v4383, %v4382
  %v4390 = vpack.c.b16 %v4385, %v4384
  %v4391 = vpack.c.b16 %v4387, %v4386
  %v4397 = vsel %vm3780, %v4370, 0
  %v4400 = vsel %vm3780, %v4371, 0
  %4402 = vmatprep.subr.bf16.mxu0 0
  %4403 = vmatpush1.bf16.msra.mxu0 0
  %4404 = vmatprep.subr.bf16.mxu0 0
  %4405 = vmatpush1.bf16.msra.mxu0 0
  %4406 = vmatprep.subr.bf16.mxu0 0
  %4407 = vmatpush1.bf16.msra.mxu0 0
  %4408 = vmatprep.subr.bf16.mxu0 0
  %4409 = vmatpush1.bf16.msra.mxu0 0
  %4410 = vmatprep.subr.bf16.mxu0 0
  %4411 = vmatpush1.bf16.msra.mxu0 %v4391
  %4412 = vmatprep.subr.bf16.mxu0 0
  %4413 = vmatpush1.bf16.msra.mxu0 %v4390
  %4414 = vmatprep.subr.bf16.mxu0 0
  %4415 = vmatpush1.bf16.msra.mxu0 %v4389
  %4416 = vmatprep.subr.bf16.mxu0 0
  %4417 = vmatpush1.bf16.msra.mxu0 %v4388
  %4418 = vmatprep.subr.bf16.mxu0 0
  %4419 = vmatpush2.bf16.msra.mxu0 0
  %4420 = vmatprep.subr.bf16.mxu0 0
  %4421 = vmatpush2.bf16.msra.mxu0 0
  %4422 = vmatprep.subr.bf16.mxu0 0
  %4423 = vmatpush2.bf16.msra.mxu0 0
  %4424 = vmatprep.subr.bf16.mxu0 0
  %4425 = vmatpush2.bf16.msra.mxu0 0
  %4426 = vmatprep.subr.bf16.mxu0 0
  %4427 = vmatpush2.bf16.msra.mxu0 0
  %4428 = vmatprep.subr.bf16.mxu0 0
  %4429 = vmatpush2.bf16.msra.mxu0 0
  %4430 = vmatprep.subr.bf16.mxu0 0
  %4431 = vmatpush2.bf16.msra.mxu0 0
  %4432 = vmatprep.subr.bf16.mxu0 0
  %4433 = vmatpush2.bf16.msra.mxu0 0
  %4434 = vmatprep.mubr.bf16.mxu0 0
  %4435 = vmatmul.mubr.bf16.gmra.mxu0 %v4397
  %v4436 = vpop.f32.mrf.mxu0
  %v4437 = vadd.f32 0.0, %v4436
  %v4438 = vpop.f32.mrf.mxu0
  %v4439 = vpop.f32.mrf.mxu0
  %v4440 = vadd.f32 0.0, %v4439
  %v4441 = vpop.f32.mrf.mxu0
  %4442 = vmatprep.mubr.bf16.mxu0 0
  %4443 = vmatmul.mubr.bf16.gmra.mxu0 %v4400
  %v4444 = vpop.f32.mrf.mxu0
  %v4445 = vadd.f32 0.0, %v4444
  %v4446 = vpop.f32.mrf.mxu0
  %v4447 = vpop.f32.mrf.mxu0
  %v4448 = vadd.f32 0.0, %v4447
  %v4449 = vpop.f32.mrf.mxu0
  %4450 = vdwg.mxu0
  %v4451 = vadd.f32 %v4315, %v4437
  %v4452 = vadd.f32 %v4318, %v4440
  %v4453 = vadd.f32 %v4323, %v4445
  %v4454 = vadd.f32 %v4326, %v4448
  %v4455 = vld [vmem:[%s57] sm:$0x1]
  %v4457 = vlaneseq
  %v4458 = vshrl.u32 %v4457, 7
  %v4459 = vsub.s32 0, %v4458
  %v4460 = vrot.slane %v4455, %v4459
  %v4462 = vadd.f32 %v4451, %v4460
  %v4463 = vadd.f32 %v4452, %v4460
  %v4464 = vadd.f32 %v4453, %v4460
  %v4465 = vadd.f32 %v4454, %v4460
  %v4466 = vmax.f32 %v4462, 0.0
  %v4467 = vmax.f32 %v4463, 0.0
  %v4468 = vmax.f32 %v4464, 0.0
  %v4469 = vmax.f32 %v4465, 0.0
  %v4470 = vunpack.c.l.bf16 %v4087
  %v4471 = vunpack.c.l.bf16 %v4088
  %v4472 = vunpack.c.l.bf16 %v4090
  %v4473 = vunpack.c.l.bf16 %v4091
  %v4474 = vpack.c.bf16 %v4467, %v4466
  %v4475 = vpack.c.bf16 %v4469, %v4468
  %v4478 = vunpack.c.l.b16 %v4474
  %v4479 = vunpack.c.h.b16 %v4474
  %v4480 = vunpack.c.l.b16 %v4475
  %v4481 = vunpack.c.h.b16 %v4475
  %v4482 = vpack.c.b16 %v4478, %v4478
  %v4483 = vpack.c.b16 %v4479, %v4479
  %v4484 = vpack.c.b16 %v4480, %v4480
  %v4485 = vpack.c.b16 %v4481, %v4481
  %4490 = vst.msk [vmem:[#allocation2 + $0x4] sm:$0xf] %vm141, %v4482
  %4491 = vst.msk [vmem:[#allocation2 + $0x8] sm:$0xf] %vm141, %v4483
  %4492 = vst.msk [vmem:[#allocation2 + $0x14] sm:$0xf] %vm141, %v4484
  %4493 = vst.msk [vmem:[#allocation2 + $0x18] sm:$0xf] %vm141, %v4485
  %v4494 = vld [vmem:[#allocation2] sm:$0x8]
  %v4495 = vld [vmem:[#allocation2 + $0x4] sm:$0xf]
  %v4496 = vld [vmem:[#allocation2 + $0x8] sm:$0xf]
  %v4497 = vld [vmem:[#allocation2 + $0x10] sm:$0x8]
  %v4498 = vld [vmem:[#allocation2 + $0x14] sm:$0xf]
  %v4499 = vld [vmem:[#allocation2 + $0x18] sm:$0xf]
  %v4500 = vld [vmem:[#allocation2 + $0xc] sm:$0x1]
  %v4501 = vld [vmem:[#allocation2 + $0x1c] sm:$0x1]
  %v4503 = vshrl.u32 %v4494, 16
  %v4505 = vrot.slane %v4503, 7
  %v4506 = vrot.slane %v4505, 4
  %v4508 = vshrl.u32 %v4495, 16
  %v4510 = vrot.slane %v4508, 7
  %v4511 = vshll.u32 %v4495, 16
  %v4513 = vor.u32 %v4510, %v4511
  %v4514 = vsel %vm369, %v4506, %v4513
  %v4515 = vrot.slane %v4510, 4
  %v4517 = vshrl.u32 %v4496, 16
  %v4519 = vrot.slane %v4517, 7
  %v4520 = vshll.u32 %v4496, 16
  %v4522 = vor.u32 %v4519, %v4520
  %v4523 = vsel %vm369, %v4515, %v4522
  %v4525 = vshrl.u32 %v4497, 16
  %v4527 = vrot.slane %v4525, 7
  %v4528 = vrot.slane %v4527, 4
  %v4530 = vshrl.u32 %v4498, 16
  %v4532 = vrot.slane %v4530, 7
  %v4533 = vshll.u32 %v4498, 16
  %v4535 = vor.u32 %v4532, %v4533
  %v4536 = vsel %vm369, %v4528, %v4535
  %v4537 = vrot.slane %v4532, 4
  %v4539 = vshrl.u32 %v4499, 16
  %v4541 = vrot.slane %v4539, 7
  %v4542 = vshll.u32 %v4499, 16
  %v4544 = vor.u32 %v4541, %v4542
  %v4545 = vsel %vm369, %v4537, %v4544
  %v4546 = vld [vmem:[%s59] sm:$0xf]
  %v4547 = vld [vmem:[%s59 + $0x4] sm:$0xf]
  %v4548 = vld [vmem:[%s59 + $0x8] sm:$0xf]
  %v4549 = vld [vmem:[%s59 + $0xc] sm:$0xf]
  %v4550 = vld [vmem:[%s59 + $0x10] sm:$0xf]
  %v4551 = vld [vmem:[%s59 + $0x14] sm:$0xf]
  %v4552 = vld [vmem:[%s59 + $0x18] sm:$0xf]
  %v4553 = vld [vmem:[%s59 + $0x1c] sm:$0xf]
  %s4554 = scalar_lea.vmem %s59, 32
  %v4555 = vld [vmem:[%s4554] sm:$0xf]
  %v4556 = vld [vmem:[%s4554 + $0x4] sm:$0xf]
  %v4557 = vld [vmem:[%s4554 + $0x8] sm:$0xf]
  %v4558 = vld [vmem:[%s4554 + $0xc] sm:$0xf]
  %v4559 = vld [vmem:[%s4554 + $0x10] sm:$0xf]
  %v4560 = vld [vmem:[%s4554 + $0x14] sm:$0xf]
  %v4561 = vld [vmem:[%s4554 + $0x18] sm:$0xf]
  %v4562 = vld [vmem:[%s4554 + $0x1c] sm:$0xf]
  %v4567 = vunpack.c.l.b16 %v4495
  %v4568 = vunpack.c.l.b16 %v4496
  %v4569 = vunpack.c.l.b16 %v4498
  %v4570 = vunpack.c.l.b16 %v4499
  %v4571 = vpack.c.b16 %v4568, %v4567
  %v4572 = vpack.c.b16 %v4570, %v4569
  %v4581 = vunpack.c.l.b16 %v4555
  %v4582 = vunpack.c.l.b16 %v4556
  %v4583 = vunpack.c.l.b16 %v4557
  %v4584 = vunpack.c.l.b16 %v4558
  %v4585 = vunpack.c.l.b16 %v4559
  %v4586 = vunpack.c.l.b16 %v4560
  %v4587 = vunpack.c.l.b16 %v4561
  %v4588 = vunpack.c.l.b16 %v4562
  %v4589 = vpack.c.b16 %v4582, %v4581
  %v4590 = vpack.c.b16 %v4584, %v4583
  %v4591 = vpack.c.b16 %v4586, %v4585
  %v4592 = vpack.c.b16 %v4588, %v4587
  %v4598 = vsel %vm3780, %v4571, 0
  %v4601 = vsel %vm3780, %v4572, 0
  %4603 = vmatprep.subr.bf16.mxu0 0
  %4604 = vmatpush1.bf16.msra.mxu0 0
  %4605 = vmatprep.subr.bf16.mxu0 0
  %4606 = vmatpush1.bf16.msra.mxu0 0
  %4607 = vmatprep.subr.bf16.mxu0 0
  %4608 = vmatpush1.bf16.msra.mxu0 0
  %4609 = vmatprep.subr.bf16.mxu0 0
  %4610 = vmatpush1.bf16.msra.mxu0 0
  %4611 = vmatprep.subr.bf16.mxu0 0
  %4612 = vmatpush1.bf16.msra.mxu0 %v4592
  %4613 = vmatprep.subr.bf16.mxu0 0
  %4614 = vmatpush1.bf16.msra.mxu0 %v4591
  %4615 = vmatprep.subr.bf16.mxu0 0
  %4616 = vmatpush1.bf16.msra.mxu0 %v4590
  %4617 = vmatprep.subr.bf16.mxu0 0
  %4618 = vmatpush1.bf16.msra.mxu0 %v4589
  %4619 = vmatprep.subr.bf16.mxu0 0
  %4620 = vmatpush2.bf16.msra.mxu0 0
  %4621 = vmatprep.subr.bf16.mxu0 0
  %4622 = vmatpush2.bf16.msra.mxu0 0
  %4623 = vmatprep.subr.bf16.mxu0 0
  %4624 = vmatpush2.bf16.msra.mxu0 0
  %4625 = vmatprep.subr.bf16.mxu0 0
  %4626 = vmatpush2.bf16.msra.mxu0 0
  %4627 = vmatprep.subr.bf16.mxu0 0
  %4628 = vmatpush2.bf16.msra.mxu0 0
  %4629 = vmatprep.subr.bf16.mxu0 0
  %4630 = vmatpush2.bf16.msra.mxu0 0
  %4631 = vmatprep.subr.bf16.mxu0 0
  %4632 = vmatpush2.bf16.msra.mxu0 0
  %4633 = vmatprep.subr.bf16.mxu0 0
  %4634 = vmatpush2.bf16.msra.mxu0 0
  %4635 = vmatprep.mubr.bf16.mxu0 0
  %4636 = vmatmul.mubr.bf16.gmra.mxu0 %v4598
  %v4637 = vpop.f32.mrf.mxu0
  %v4638 = vadd.f32 0.0, %v4637
  %v4639 = vpop.f32.mrf.mxu0
  %v4640 = vpop.f32.mrf.mxu0
  %v4641 = vadd.f32 0.0, %v4640
  %v4642 = vpop.f32.mrf.mxu0
  %4643 = vmatprep.mubr.bf16.mxu0 0
  %4644 = vmatmul.mubr.bf16.gmra.mxu0 %v4601
  %v4645 = vpop.f32.mrf.mxu0
  %v4646 = vadd.f32 0.0, %v4645
  %v4647 = vpop.f32.mrf.mxu0
  %v4648 = vpop.f32.mrf.mxu0
  %v4649 = vadd.f32 0.0, %v4648
  %v4650 = vpop.f32.mrf.mxu0
  %4651 = vdwg.mxu0
  %v4652 = vunpack.c.l.b16 %v4514
  %v4653 = vunpack.c.l.b16 %v4523
  %v4654 = vunpack.c.l.b16 %v4536
  %v4655 = vunpack.c.l.b16 %v4545
  %v4656 = vpack.c.b16 %v4653, %v4652
  %v4657 = vpack.c.b16 %v4655, %v4654
  %v4666 = vunpack.c.l.b16 %v4546
  %v4667 = vunpack.c.l.b16 %v4547
  %v4668 = vunpack.c.l.b16 %v4548
  %v4669 = vunpack.c.l.b16 %v4549
  %v4670 = vunpack.c.l.b16 %v4550
  %v4671 = vunpack.c.l.b16 %v4551
  %v4672 = vunpack.c.l.b16 %v4552
  %v4673 = vunpack.c.l.b16 %v4553
  %v4674 = vpack.c.b16 %v4667, %v4666
  %v4675 = vpack.c.b16 %v4669, %v4668
  %v4676 = vpack.c.b16 %v4671, %v4670
  %v4677 = vpack.c.b16 %v4673, %v4672
  %v4683 = vsel %vm3780, %v4656, 0
  %v4686 = vsel %vm3780, %v4657, 0
  %4688 = vmatprep.subr.bf16.mxu0 0
  %4689 = vmatpush1.bf16.msra.mxu0 0
  %4690 = vmatprep.subr.bf16.mxu0 0
  %4691 = vmatpush1.bf16.msra.mxu0 0
  %4692 = vmatprep.subr.bf16.mxu0 0
  %4693 = vmatpush1.bf16.msra.mxu0 0
  %4694 = vmatprep.subr.bf16.mxu0 0
  %4695 = vmatpush1.bf16.msra.mxu0 0
  %4696 = vmatprep.subr.bf16.mxu0 0
  %4697 = vmatpush1.bf16.msra.mxu0 %v4677
  %4698 = vmatprep.subr.bf16.mxu0 0
  %4699 = vmatpush1.bf16.msra.mxu0 %v4676
  %4700 = vmatprep.subr.bf16.mxu0 0
  %4701 = vmatpush1.bf16.msra.mxu0 %v4675
  %4702 = vmatprep.subr.bf16.mxu0 0
  %4703 = vmatpush1.bf16.msra.mxu0 %v4674
  %4704 = vmatprep.subr.bf16.mxu0 0
  %4705 = vmatpush2.bf16.msra.mxu0 0
  %4706 = vmatprep.subr.bf16.mxu0 0
  %4707 = vmatpush2.bf16.msra.mxu0 0
  %4708 = vmatprep.subr.bf16.mxu0 0
  %4709 = vmatpush2.bf16.msra.mxu0 0
  %4710 = vmatprep.subr.bf16.mxu0 0
  %4711 = vmatpush2.bf16.msra.mxu0 0
  %4712 = vmatprep.subr.bf16.mxu0 0
  %4713 = vmatpush2.bf16.msra.mxu0 0
  %4714 = vmatprep.subr.bf16.mxu0 0
  %4715 = vmatpush2.bf16.msra.mxu0 0
  %4716 = vmatprep.subr.bf16.mxu0 0
  %4717 = vmatpush2.bf16.msra.mxu0 0
  %4718 = vmatprep.subr.bf16.mxu0 0
  %4719 = vmatpush2.bf16.msra.mxu0 0
  %4720 = vmatprep.mubr.bf16.mxu0 0
  %4721 = vmatmul.mubr.bf16.gmra.mxu0 %v4683
  %v4722 = vpop.f32.mrf.mxu0
  %v4723 = vadd.f32 %v4638, %v4722
  %v4724 = vpop.f32.mrf.mxu0
  %v4725 = vpop.f32.mrf.mxu0
  %v4726 = vadd.f32 %v4641, %v4725
  %v4727 = vpop.f32.mrf.mxu0
  %4728 = vmatprep.mubr.bf16.mxu0 0
  %4729 = vmatmul.mubr.bf16.gmra.mxu0 %v4686
  %v4730 = vpop.f32.mrf.mxu0
  %v4731 = vadd.f32 %v4646, %v4730
  %v4732 = vpop.f32.mrf.mxu0
  %v4733 = vpop.f32.mrf.mxu0
  %v4734 = vadd.f32 %v4649, %v4733
  %v4735 = vpop.f32.mrf.mxu0
  %4736 = vdwg.mxu0
  %v4737 = vrot.slane %v4508, 4
  %v4738 = vrot.slane %v4511, 5
  %v4739 = vor.u32 %v4737, %v4738
  %v4740 = vrot.slane %v4739, 4
  %v4741 = vrot.slane %v4520, 5
  %v4742 = vsel %vm621, %v4740, %v4741
  %v4743 = vrot.slane %v4517, 4
  %v4744 = vor.u32 %v4743, %v4741
  %v4745 = vrot.slane %v4744, 4
  %v4747 = vshll.u32 %v4500, 16
  %v4749 = vrot.slane %v4747, 5
  %v4750 = vsel %vm621, %v4745, %v4749
  %v4751 = vrot.slane %v4530, 4
  %v4752 = vrot.slane %v4533, 5
  %v4753 = vor.u32 %v4751, %v4752
  %v4754 = vrot.slane %v4753, 4
  %v4755 = vrot.slane %v4542, 5
  %v4756 = vsel %vm621, %v4754, %v4755
  %v4757 = vrot.slane %v4539, 4
  %v4758 = vor.u32 %v4757, %v4755
  %v4759 = vrot.slane %v4758, 4
  %v4761 = vshll.u32 %v4501, 16
  %v4763 = vrot.slane %v4761, 5
  %v4764 = vsel %vm621, %v4759, %v4763
  %s4765 = scalar_lea.vmem %s59, 64
  %v4766 = vld [vmem:[%s4765] sm:$0xf]
  %v4767 = vld [vmem:[%s4765 + $0x4] sm:$0xf]
  %v4768 = vld [vmem:[%s4765 + $0x8] sm:$0xf]
  %v4769 = vld [vmem:[%s4765 + $0xc] sm:$0xf]
  %v4770 = vld [vmem:[%s4765 + $0x10] sm:$0xf]
  %v4771 = vld [vmem:[%s4765 + $0x14] sm:$0xf]
  %v4772 = vld [vmem:[%s4765 + $0x18] sm:$0xf]
  %v4773 = vld [vmem:[%s4765 + $0x1c] sm:$0xf]
  %v4774 = vunpack.c.l.b16 %v4742
  %v4775 = vunpack.c.l.b16 %v4750
  %v4776 = vunpack.c.l.b16 %v4756
  %v4777 = vunpack.c.l.b16 %v4764
  %v4778 = vpack.c.b16 %v4775, %v4774
  %v4779 = vpack.c.b16 %v4777, %v4776
  %v4788 = vunpack.c.l.b16 %v4766
  %v4789 = vunpack.c.l.b16 %v4767
  %v4790 = vunpack.c.l.b16 %v4768
  %v4791 = vunpack.c.l.b16 %v4769
  %v4792 = vunpack.c.l.b16 %v4770
  %v4793 = vunpack.c.l.b16 %v4771
  %v4794 = vunpack.c.l.b16 %v4772
  %v4795 = vunpack.c.l.b16 %v4773
  %v4796 = vpack.c.b16 %v4789, %v4788
  %v4797 = vpack.c.b16 %v4791, %v4790
  %v4798 = vpack.c.b16 %v4793, %v4792
  %v4799 = vpack.c.b16 %v4795, %v4794
  %v4805 = vsel %vm3780, %v4778, 0
  %v4808 = vsel %vm3780, %v4779, 0
  %4810 = vmatprep.subr.bf16.mxu0 0
  %4811 = vmatpush1.bf16.msra.mxu0 0
  %4812 = vmatprep.subr.bf16.mxu0 0
  %4813 = vmatpush1.bf16.msra.mxu0 0
  %4814 = vmatprep.subr.bf16.mxu0 0
  %4815 = vmatpush1.bf16.msra.mxu0 0
  %4816 = vmatprep.subr.bf16.mxu0 0
  %4817 = vmatpush1.bf16.msra.mxu0 0
  %4818 = vmatprep.subr.bf16.mxu0 0
  %4819 = vmatpush1.bf16.msra.mxu0 %v4799
  %4820 = vmatprep.subr.bf16.mxu0 0
  %4821 = vmatpush1.bf16.msra.mxu0 %v4798
  %4822 = vmatprep.subr.bf16.mxu0 0
  %4823 = vmatpush1.bf16.msra.mxu0 %v4797
  %4824 = vmatprep.subr.bf16.mxu0 0
  %4825 = vmatpush1.bf16.msra.mxu0 %v4796
  %4826 = vmatprep.subr.bf16.mxu0 0
  %4827 = vmatpush2.bf16.msra.mxu0 0
  %4828 = vmatprep.subr.bf16.mxu0 0
  %4829 = vmatpush2.bf16.msra.mxu0 0
  %4830 = vmatprep.subr.bf16.mxu0 0
  %4831 = vmatpush2.bf16.msra.mxu0 0
  %4832 = vmatprep.subr.bf16.mxu0 0
  %4833 = vmatpush2.bf16.msra.mxu0 0
  %4834 = vmatprep.subr.bf16.mxu0 0
  %4835 = vmatpush2.bf16.msra.mxu0 0
  %4836 = vmatprep.subr.bf16.mxu0 0
  %4837 = vmatpush2.bf16.msra.mxu0 0
  %4838 = vmatprep.subr.bf16.mxu0 0
  %4839 = vmatpush2.bf16.msra.mxu0 0
  %4840 = vmatprep.subr.bf16.mxu0 0
  %4841 = vmatpush2.bf16.msra.mxu0 0
  %4842 = vmatprep.mubr.bf16.mxu0 0
  %4843 = vmatmul.mubr.bf16.gmra.mxu0 %v4805
  %v4844 = vpop.f32.mrf.mxu0
  %v4845 = vadd.f32 0.0, %v4844
  %v4846 = vpop.f32.mrf.mxu0
  %v4847 = vpop.f32.mrf.mxu0
  %v4848 = vadd.f32 0.0, %v4847
  %v4849 = vpop.f32.mrf.mxu0
  %4850 = vmatprep.mubr.bf16.mxu0 0
  %4851 = vmatmul.mubr.bf16.gmra.mxu0 %v4808
  %v4852 = vpop.f32.mrf.mxu0
  %v4853 = vadd.f32 0.0, %v4852
  %v4854 = vpop.f32.mrf.mxu0
  %v4855 = vpop.f32.mrf.mxu0
  %v4856 = vadd.f32 0.0, %v4855
  %v4857 = vpop.f32.mrf.mxu0
  %4858 = vdwg.mxu0
  %v4859 = vadd.f32 %v4723, %v4845
  %v4860 = vadd.f32 %v4726, %v4848
  %v4861 = vadd.f32 %v4731, %v4853
  %v4862 = vadd.f32 %v4734, %v4856
  %v4863 = vld [vmem:[%s61] sm:$0x1]
  %v4865 = vlaneseq
  %v4866 = vshrl.u32 %v4865, 7
  %v4867 = vsub.s32 0, %v4866
  %v4868 = vrot.slane %v4863, %v4867
  %v4870 = vadd.f32 %v4859, %v4868
  %v4871 = vadd.f32 %v4860, %v4868
  %v4872 = vadd.f32 %v4861, %v4868
  %v4873 = vadd.f32 %v4862, %v4868
  %v4874 = vadd.f32 %v4870, %v4470
  %v4875 = vadd.f32 %v4871, %v4471
  %v4876 = vadd.f32 %v4872, %v4472
  %v4877 = vadd.f32 %v4873, %v4473
  %v4878 = vmax.f32 %v4874, 0.0
  %v4879 = vmax.f32 %v4875, 0.0
  %v4880 = vmax.f32 %v4876, 0.0
  %v4881 = vmax.f32 %v4877, 0.0
  %v4882 = vpack.c.bf16 %v4879, %v4878
  %v4883 = vpack.c.bf16 %v4881, %v4880
  %v4886 = vunpack.c.l.b16 %v4882
  %v4887 = vunpack.c.h.b16 %v4882
  %v4888 = vunpack.c.l.b16 %v4883
  %v4889 = vunpack.c.h.b16 %v4883
  %v4890 = vpack.c.b16 %v4886, %v4886
  %v4891 = vpack.c.b16 %v4887, %v4887
  %v4892 = vpack.c.b16 %v4888, %v4888
  %v4893 = vpack.c.b16 %v4889, %v4889
  %4898 = vst.msk [vmem:[#allocation2 + $0x4] sm:$0xf] %vm141, %v4890
  %4899 = vst.msk [vmem:[#allocation2 + $0x8] sm:$0xf] %vm141, %v4891
  %4900 = vst.msk [vmem:[#allocation2 + $0x14] sm:$0xf] %vm141, %v4892
  %4901 = vst.msk [vmem:[#allocation2 + $0x18] sm:$0xf] %vm141, %v4893
  %v4902 = vsel %vm3780, %v4878, 0.0
  %v4903 = vsel %vm3780, %v4879, 0.0
  %v4904 = vadd.f32 %v4902, %v4903
  %v4905 = vrot.slane %v4904, 4
  %v4906 = vadd.f32 %v4904, %v4905
  %v4907 = vrot.slane %v4906, 2
  %v4908 = vadd.f32 %v4906, %v4907
  %v4909 = vrot.slane %v4908, 1
  %v4910 = vadd.f32 %v4908, %v4909
  %v4911 = vsel %vm3780, %v4880, 0.0
  %v4912 = vsel %vm3780, %v4881, 0.0
  %v4913 = vadd.f32 %v4911, %v4912
  %v4914 = vrot.slane %v4913, 4
  %v4915 = vadd.f32 %v4913, %v4914
  %v4916 = vrot.slane %v4915, 2
  %v4917 = vadd.f32 %v4915, %v4916
  %v4918 = vrot.slane %v4917, 1
  %v4919 = vadd.f32 %v4917, %v4918
  %v4920 = vld [vmem:[%s63] sm:$0x1]
  %v4922 = vlaneseq
  %v4923 = vshrl.u32 %v4922, 7
  %v4924 = vsub.s32 0, %v4923
  %v4925 = vrot.slane %v4920, %v4924
  %v4927 = vmul.f32 %v4910, %v4925
  %v4928 = vmul.f32 %v4919, %v4925
  %v4931 = vrot.slane %v4928, 7
  %vm4932 = vcmask 1041409
  %v4933 = vsel %vm4932, %v4931, %v4927
  %vm4935 = vcmask 517120
  %v4936 = vsel %vm4935, %v4933, 0.0
  %4937 = vadd.xlane.f32.xlu0 %v4936
  %v4938 = vpop.xlane.xlu0 %4937
  %v4939 = vld [vmem:[#allocation3] sm:$0x1]
  %v4941 = vlaneseq
  %v4942 = vshrl.u32 %v4941, 7
  %v4943 = vsub.s32 0, %v4942
  %v4944 = vrot.slane %v4939, %v4943
  %v4946 = vadd.f32 %v4938, %v4944
  %vm4947 = vcmask 1024
  %4948 = vst.msk [vmem:[%s67] sm:$0x3] %vm4947, %v4946
  // Predicated region
  $region134: #{resnet_forward.1} parent=0 // pred_check
    _
  $region135: #{resnet_forward.1} parent=0 // pred_check_branch
    %4950 = sbr.rel (0) target = $region137
  $region136: #{resnet_forward.1} parent=0 // pred_region
    _
  $region137: #{resnet_forward.1} parent=0 // pred_fallthru
    _
  // Predicated region
  $region138: #{resnet_forward.1} parent=0 // pred_check
    _
  $region139: #{resnet_forward.1} parent=0 // pred_check_branch
    %4952 = sbr.rel (0) target = $region141
  $region140: #{resnet_forward.1} parent=0 // pred_region
    _
  $region141: #{resnet_forward.1} parent=0 // pred_fallthru
    _

</llo_original>
